<compile_context>
chip_gen: v7x
topology: tpu7x:2x2x1
jax: 0.10.0
libtpu: 0.0.40
codegen_flags: <defaults>
</compile_context>

<pallas_src>
import functools

import jax
import jax.numpy as jnp
from jax.experimental import pallas as pl
from jax.experimental.pallas import tpu as pltpu

_BN_EPS = 1e-5
_LANES = 128


# ---------------------------- fused Pallas kernel ----------------------------


def _basic_block_kernel(x_ref, w1_ref, s1_ref, b1_ref, w2_ref, s2_ref, b2_ref,
                        o_ref, xsh_ref, y1sh_ref, *, H, W, Cp):
    M = H * W
    bf16 = jnp.bfloat16

    def write_shifted(dst_ref, val):
        # val: (H, W, Cp) bf16. Store the three kw-shifted copies side-by-side in lanes:
        #   dst[r, c, kw*Cp + ci] = pad1(val)[r, c + kw, ci]   for r in [1, H+1)
        # Halo columns are produced by zero-concat on the value (aligned full-width stores);
        # halo rows 0 and H+1 are zeroed explicitly every image (cheap, megacore-safe).
        zcol = jnp.zeros((H, 1, Cp), bf16)
        left = jnp.concatenate([zcol, val[:, : W - 1, :]], axis=1)   # kw = 0
        right = jnp.concatenate([val[:, 1:, :], zcol], axis=1)       # kw = 2
        dst_ref[pl.ds(1, H), :, pl.ds(0 * Cp, Cp)] = left
        dst_ref[pl.ds(1, H), :, pl.ds(1 * Cp, Cp)] = val
        dst_ref[pl.ds(1, H), :, pl.ds(2 * Cp, Cp)] = right
        zrow = jnp.zeros((1, W, 3 * Cp), bf16)
        dst_ref[pl.ds(0, 1), :, :] = zrow
        dst_ref[pl.ds(H + 1, 1), :, :] = zrow

    def conv3x3(src_ref, w_ref):
        # 3 accumulated matmuls, K = 3*Cp; first tap written directly (no zero-init).
        acc = None
        for kh in range(3):
            op = src_ref[pl.ds(kh, H), :, :].reshape(M, 3 * Cp)      # free view (W % 8 == 0)
            part = jnp.dot(op, w_ref[kh], preferred_element_type=jnp.float32)
            acc = part if acc is None else acc + part
        return acc                                                    # (M, Cp) f32

    xv = x_ref[...]                                                   # (H, W, Cp) bf16

    # ---- conv1 + bn1 + relu ----
    write_shifted(xsh_ref, xv)
    acc1 = conv3x3(xsh_ref, w1_ref)
    y1 = jnp.maximum(acc1 * s1_ref[...] + b1_ref[...], 0.0)

    # ---- conv2 + bn2 + residual + relu (intermediate kept in VMEM, bf16) ----
    write_shifted(y1sh_ref, y1.astype(bf16).reshape(H, W, Cp))
    acc2 = conv3x3(y1sh_ref, w2_ref)

    # Residual is the bf16-rounded input block upcast to f32 (documented precision choice).
    identity = xv.reshape(M, Cp).astype(jnp.float32)
    out = jnp.maximum(acc2 * s2_ref[...] + b2_ref[...] + identity, 0.0)
    o_ref[...] = out.reshape(H, W, Cp).astype(o_ref.dtype)


# ---------------------------- JAX glue: folding & layout ----------------------------


def _fold_conv_weight(w_oihw, cp):
    """torch (Cout, Cin, 3, 3) -> (3, 3*cp, cp) bf16; index [kh, kw*cp + ci, co]."""
    cout, cin, _, _ = w_oihw.shape
    w = jnp.transpose(w_oihw, (2, 3, 1, 0))                       # (kh, kw, ci, co)
    w = jnp.pad(w, ((0, 0), (0, 0), (0, cp - cin), (0, cp - cout)))
    return w.reshape(3, 3 * cp, cp).astype(jnp.bfloat16)


def _fold_bn(gamma, beta, mean, var, cp):
    scale = gamma / jnp.sqrt(var + _BN_EPS)
    bias = beta - mean * scale
    c = gamma.shape[0]
    scale = jnp.pad(scale, (0, cp - c)).reshape(1, cp).astype(jnp.float32)
    bias = jnp.pad(bias, (0, cp - c)).reshape(1, cp).astype(jnp.float32)
    return scale, bias


def basic_block_forward(x_nchw, params):
    n, c, h, w = x_nchw.shape
    cp = ((c + _LANES - 1) // _LANES) * _LANES  # channels padded to lane width

    # NCHW -> NHWC, channel pad only (NO spatial pad: halo handled in-kernel), bf16.
    # TODO(synk): in a full model keep activations NHWC/cp-padded end-to-end.
    x_nhwc = jnp.transpose(x_nchw, (0, 2, 3, 1))
    xh = jnp.pad(x_nhwc, ((0, 0), (0, 0), (0, 0), (0, cp - c))).astype(jnp.bfloat16)

    w1 = _fold_conv_weight(params["w1"], cp)
    w2 = _fold_conv_weight(params["w2"], cp)
    s1, b1 = _fold_bn(*params["bn1"], cp)
    s2, b2 = _fold_bn(*params["bn2"], cp)

    kernel = functools.partial(_basic_block_kernel, H=h, W=w, Cp=cp)

    flops = 2 * 2 * 9 * n * h * w * cp * cp               # two 3x3 convs as matmuls
    bytes_accessed = (2 * n * h * w * cp * 2              # bf16 activations in + out
                      + 2 * 9 * cp * cp * 2               # folded conv weights (bf16)
                      + 4 * cp * 4)                       # bn scale/bias (f32)

    out = pl.pallas_call(
        kernel,
        out_shape=jax.ShapeDtypeStruct((n, h, w, cp), jnp.bfloat16),
        grid_spec=pltpu.PrefetchScalarGridSpec(
            num_scalar_prefetch=0,
            grid=(n,),
            in_specs=[
                pl.BlockSpec((None, h, w, cp), lambda i: (i, 0, 0, 0)),
                pl.BlockSpec((3, 3 * cp, cp), lambda i: (0, 0, 0)),   # resident weights
                pl.BlockSpec((1, cp), lambda i: (0, 0)),
                pl.BlockSpec((1, cp), lambda i: (0, 0)),
                pl.BlockSpec((3, 3 * cp, cp), lambda i: (0, 0, 0)),
                pl.BlockSpec((1, cp), lambda i: (0, 0)),
                pl.BlockSpec((1, cp), lambda i: (0, 0)),
            ],
            out_specs=pl.BlockSpec((None, h, w, cp), lambda i: (i, 0, 0, 0)),
            scratch_shapes=[
                pltpu.VMEM((h + 2, w, 3 * cp), jnp.bfloat16),   # pre-shifted x operand
                pltpu.VMEM((h + 2, w, 3 * cp), jnp.bfloat16),   # pre-shifted y1 operand
            ],
        ),
        compiler_params=pltpu.CompilerParams(
            dimension_semantics=("parallel",),
            vmem_limit_bytes=32 * 1024 * 1024,   # >= v5e's 16 MiB default; <= v7x's 64 MiB
        ),
        cost_estimate=pl.CostEstimate(
            flops=flops, transcendentals=0, bytes_accessed=bytes_accessed),
    )(xh, w1, s1, b1, w2, s2, b2)

    # Back to PyTorch-style NCHW f32 for the module interface.
    return jnp.transpose(out[..., :c].astype(jnp.float32), (0, 3, 1, 2))


# ---------------------------- pure-JAX reference (self-check) ----------------------------


def _reference_forward(x_nchw, params):
    def conv(x, w):
        return jax.lax.conv_general_dilated(
            x, w, window_strides=(1, 1), padding=((1, 1), (1, 1)),
            dimension_numbers=("NCHW", "OIHW", "NCHW"))

    def bn(x, g, b, m, v):
        s = (g / jnp.sqrt(v + _BN_EPS))[None, :, None, None]
        return (x - m[None, :, None, None]) * s + b[None, :, None, None]

    out = jax.nn.relu(bn(conv(x_nchw, params["w1"]), *params["bn1"]))
    out = bn(conv(out, params["w2"]), *params["bn2"]) + x_nchw
    return jax.nn.relu(out)


if __name__ == "__main__":
    N, C, H, W = 2, 4, 16, 16          # in_channel == out_channel, stride=1, no downsample
    key = jax.random.PRNGKey(0)
    ks = jax.random.split(key, 11)

    x = jax.random.normal(ks[0], (N, C, H, W), jnp.float32)

    params = {
        "w1": 0.1 * jax.random.normal(ks[1], (C, C, 3, 3), jnp.float32),
        "w2": 0.1 * jax.random.normal(ks[2], (C, C, 3, 3), jnp.float32),
        "bn1": (
            1.0 + 0.1 * jax.random.normal(ks[3], (C,), jnp.float32),     # gamma
            0.1 * jax.random.normal(ks[4], (C,), jnp.float32),           # beta
            0.1 * jax.random.normal(ks[5], (C,), jnp.float32),           # running_mean
            0.5 + jnp.abs(jax.random.normal(ks[6], (C,), jnp.float32)),  # running_var
        ),
        "bn2": (
            1.0 + 0.1 * jax.random.normal(ks[7], (C,), jnp.float32),
            0.1 * jax.random.normal(ks[8], (C,), jnp.float32),
            0.1 * jax.random.normal(ks[9], (C,), jnp.float32),
            0.5 + jnp.abs(jax.random.normal(ks[10], (C,), jnp.float32)),
        ),
    }

    fwd = jax.jit(basic_block_forward)
    out = jax.block_until_ready(fwd(x, params))

    ref = _reference_forward(x, params)
    assert out.shape == (N, C, H, W)
    max_err = jnp.max(jnp.abs(out - ref))
    # bf16 activations/weights/output -> bf16-level tolerance vs the f32 reference.
    assert jnp.allclose(out, ref, rtol=5e-2, atol=5e-2), (
        f"mismatch vs reference, max abs err {max_err}")

    print("KERNEL_OK")
</pallas_src>

<mosaic_0001>
module attributes {stable_mosaic.version = 11 : i64} {
  func.func @_basic_block_kernel(%arg0: i32, %arg1: memref<1x16x16x128xbf16, #tpu.memory_space<vmem>>, %arg2: memref<3x384x128xbf16, #tpu.memory_space<vmem>>, %arg3: memref<1x128xf32, #tpu.memory_space<vmem>>, %arg4: memref<1x128xf32, #tpu.memory_space<vmem>>, %arg5: memref<3x384x128xbf16, #tpu.memory_space<vmem>>, %arg6: memref<1x128xf32, #tpu.memory_space<vmem>>, %arg7: memref<1x128xf32, #tpu.memory_space<vmem>>, %arg8: memref<1x16x16x128xbf16, #tpu.memory_space<vmem>>, %arg9: memref<18x16x384xbf16, #tpu.memory_space<vmem>>, %arg10: memref<18x16x384xbf16, #tpu.memory_space<vmem>>) attributes {dimension_semantics = [#tpu.dimension_semantics<parallel>], iteration_bounds = array<i64: 2>, scalar_prefetch = 0 : i64, scratch_operands = 2 : i64, tpu.core_type = #tpu.core_type<tc>, window_params = [{transform_indices = @transform_0, window_bounds = array<i64: 1, 16, 16, 128>}, {pipeline_mode = #tpu.pipeline_mode<synchronous>, transform_indices = @transform_1, window_bounds = array<i64: 3, 384, 128>}, {pipeline_mode = #tpu.pipeline_mode<synchronous>, transform_indices = @transform_2, window_bounds = array<i64: 1, 128>}, {pipeline_mode = #tpu.pipeline_mode<synchronous>, transform_indices = @transform_3, window_bounds = array<i64: 1, 128>}, {pipeline_mode = #tpu.pipeline_mode<synchronous>, transform_indices = @transform_4, window_bounds = array<i64: 3, 384, 128>}, {pipeline_mode = #tpu.pipeline_mode<synchronous>, transform_indices = @transform_5, window_bounds = array<i64: 1, 128>}, {pipeline_mode = #tpu.pipeline_mode<synchronous>, transform_indices = @transform_6, window_bounds = array<i64: 1, 128>}, {transform_indices = @transform_7, window_bounds = array<i64: 1, 16, 16, 128>}]} {
    %c0 = arith.constant 0 : index
    %c0_0 = arith.constant 0 : index
    %c0_1 = arith.constant 0 : index
    %c0_2 = arith.constant 0 : index
    %0 = vector.load %arg1[%c0, %c0_0, %c0_1, %c0_2] : memref<1x16x16x128xbf16, #tpu.memory_space<vmem>>, vector<1x16x16x128xbf16>
    %1 = vector.shape_cast %0 : vector<1x16x16x128xbf16> to vector<16x16x128xbf16>
    %cst = arith.constant 0.000000e+00 : bf16
    %2 = vector.broadcast %cst : bf16 to vector<16x1x128xbf16>
    %3 = vector.extract_strided_slice %1 {offsets = [0, 0, 0], sizes = [16, 15, 128], strides = [1, 1, 1]} : vector<16x16x128xbf16> to vector<16x15x128xbf16>
    %4 = tpu.concatenate %2, %3 in 1 : vector<16x1x128xbf16>, vector<16x15x128xbf16> -> vector<16x16x128xbf16>
    %5 = vector.extract_strided_slice %1 {offsets = [0, 1, 0], sizes = [16, 15, 128], strides = [1, 1, 1]} : vector<16x16x128xbf16> to vector<16x15x128xbf16>
    %6 = tpu.concatenate %5, %2 in 1 : vector<16x15x128xbf16>, vector<16x1x128xbf16> -> vector<16x16x128xbf16>
    %c1 = arith.constant 1 : index
    %c0_3 = arith.constant 0 : index
    %c0_4 = arith.constant 0 : index
    %7 = vector.load %arg9[%c1, %c0_3, %c0_4] : memref<18x16x384xbf16, #tpu.memory_space<vmem>>, vector<16x16x128xbf16>
    tpu.vector_store %arg9[%c1, %c0_3, %c0_4], %4 {strides = array<i32>} : memref<18x16x384xbf16, #tpu.memory_space<vmem>>, vector<16x16x128xbf16>,
    %c1_5 = arith.constant 1 : index
    %c0_6 = arith.constant 0 : index
    %c128 = arith.constant 128 : index
    %8 = vector.load %arg9[%c1_5, %c0_6, %c128] : memref<18x16x384xbf16, #tpu.memory_space<vmem>>, vector<16x16x128xbf16>
    tpu.vector_store %arg9[%c1_5, %c0_6, %c128], %1 {strides = array<i32>} : memref<18x16x384xbf16, #tpu.memory_space<vmem>>, vector<16x16x128xbf16>,
    %c1_7 = arith.constant 1 : index
    %c0_8 = arith.constant 0 : index
    %c256 = arith.constant 256 : index
    %9 = vector.load %arg9[%c1_7, %c0_8, %c256] : memref<18x16x384xbf16, #tpu.memory_space<vmem>>, vector<16x16x128xbf16>
    tpu.vector_store %arg9[%c1_7, %c0_8, %c256], %6 {strides = array<i32>} : memref<18x16x384xbf16, #tpu.memory_space<vmem>>, vector<16x16x128xbf16>,
    %cst_9 = arith.constant 0.000000e+00 : bf16
    %10 = vector.broadcast %cst_9 : bf16 to vector<1x16x384xbf16>
    %c0_10 = arith.constant 0 : index
    %c0_11 = arith.constant 0 : index
    %c0_12 = arith.constant 0 : index
    %11 = vector.load %arg9[%c0_10, %c0_11, %c0_12] : memref<18x16x384xbf16, #tpu.memory_space<vmem>>, vector<1x16x384xbf16>
    tpu.vector_store %arg9[%c0_10, %c0_11, %c0_12], %10 {strides = array<i32>} : memref<18x16x384xbf16, #tpu.memory_space<vmem>>, vector<1x16x384xbf16>,
    %c17 = arith.constant 17 : index
    %c0_13 = arith.constant 0 : index
    %c0_14 = arith.constant 0 : index
    %12 = vector.load %arg9[%c17, %c0_13, %c0_14] : memref<18x16x384xbf16, #tpu.memory_space<vmem>>, vector<1x16x384xbf16>
    tpu.vector_store %arg9[%c17, %c0_13, %c0_14], %10 {strides = array<i32>} : memref<18x16x384xbf16, #tpu.memory_space<vmem>>, vector<1x16x384xbf16>,
    %c0_15 = arith.constant 0 : index
    %c0_16 = arith.constant 0 : index
    %c0_17 = arith.constant 0 : index
    %13 = vector.load %arg9[%c0_15, %c0_16, %c0_17] : memref<18x16x384xbf16, #tpu.memory_space<vmem>>, vector<16x16x384xbf16>
    %14 = vector.shape_cast %13 : vector<16x16x384xbf16> to vector<256x384xbf16>
    %c0_18 = arith.constant 0 : index
    %c0_19 = arith.constant 0 : index
    %c0_20 = arith.constant 0 : index
    %15 = vector.load %arg2[%c0_18, %c0_19, %c0_20] : memref<3x384x128xbf16, #tpu.memory_space<vmem>>, vector<1x384x128xbf16>
    %16 = vector.shape_cast %15 : vector<1x384x128xbf16> to vector<384x128xbf16>
    %cst_21 = arith.constant dense<0.000000e+00> : vector<256x128xf32>
    %17 = tpu.matmul %14, %16, %cst_21 {dimension_numbers = #tpu.dot_dimension_numbers<[1], [0], [0], [1], [0, 0, 1, 1], [], []>} : vector<256x384xbf16>, vector<384x128xbf16>, vector<256x128xf32> -> vector<256x128xf32>
    %c1_22 = arith.constant 1 : index
    %c0_23 = arith.constant 0 : index
    %c0_24 = arith.constant 0 : index
    %18 = vector.load %arg9[%c1_22, %c0_23, %c0_24] : memref<18x16x384xbf16, #tpu.memory_space<vmem>>, vector<16x16x384xbf16>
    %19 = vector.shape_cast %18 : vector<16x16x384xbf16> to vector<256x384xbf16>
    %c1_25 = arith.constant 1 : index
    %c0_26 = arith.constant 0 : index
    %c0_27 = arith.constant 0 : index
    %20 = vector.load %arg2[%c1_25, %c0_26, %c0_27] : memref<3x384x128xbf16, #tpu.memory_space<vmem>>, vector<1x384x128xbf16>
    %21 = vector.shape_cast %20 : vector<1x384x128xbf16> to vector<384x128xbf16>
    %cst_28 = arith.constant dense<0.000000e+00> : vector<256x128xf32>
    %22 = tpu.matmul %19, %21, %cst_28 {dimension_numbers = #tpu.dot_dimension_numbers<[1], [0], [0], [1], [0, 0, 1, 1], [], []>} : vector<256x384xbf16>, vector<384x128xbf16>, vector<256x128xf32> -> vector<256x128xf32>
    %23 = arith.addf %17, %22 : vector<256x128xf32>
    %c2 = arith.constant 2 : index
    %c0_29 = arith.constant 0 : index
    %c0_30 = arith.constant 0 : index
    %24 = vector.load %arg9[%c2, %c0_29, %c0_30] : memref<18x16x384xbf16, #tpu.memory_space<vmem>>, vector<16x16x384xbf16>
    %25 = vector.shape_cast %24 : vector<16x16x384xbf16> to vector<256x384xbf16>
    %c2_31 = arith.constant 2 : index
    %c0_32 = arith.constant 0 : index
    %c0_33 = arith.constant 0 : index
    %26 = vector.load %arg2[%c2_31, %c0_32, %c0_33] : memref<3x384x128xbf16, #tpu.memory_space<vmem>>, vector<1x384x128xbf16>
    %27 = vector.shape_cast %26 : vector<1x384x128xbf16> to vector<384x128xbf16>
    %cst_34 = arith.constant dense<0.000000e+00> : vector<256x128xf32>
    %28 = tpu.matmul %25, %27, %cst_34 {dimension_numbers = #tpu.dot_dimension_numbers<[1], [0], [0], [1], [0, 0, 1, 1], [], []>} : vector<256x384xbf16>, vector<384x128xbf16>, vector<256x128xf32> -> vector<256x128xf32>
    %29 = arith.addf %23, %28 : vector<256x128xf32>
    %c0_35 = arith.constant 0 : index
    %c0_36 = arith.constant 0 : index
    %30 = vector.load %arg3[%c0_35, %c0_36] : memref<1x128xf32, #tpu.memory_space<vmem>>, vector<1x128xf32>
    %31 = vector.broadcast %30 : vector<1x128xf32> to vector<256x128xf32>
    %32 = arith.mulf %29, %31 : vector<256x128xf32>
    %c0_37 = arith.constant 0 : index
    %c0_38 = arith.constant 0 : index
    %33 = vector.load %arg4[%c0_37, %c0_38] : memref<1x128xf32, #tpu.memory_space<vmem>>, vector<1x128xf32>
    %34 = vector.broadcast %33 : vector<1x128xf32> to vector<256x128xf32>
    %35 = arith.addf %32, %34 : vector<256x128xf32>
    %cst_39 = arith.constant 0.000000e+00 : f32
    %36 = vector.broadcast %cst_39 : f32 to vector<256x128xf32>
    %37 = arith.maximumf %35, %36 : vector<256x128xf32>
    %38 = arith.truncf %37 : vector<256x128xf32> to vector<256x128xbf16>
    %39 = vector.shape_cast %38 : vector<256x128xbf16> to vector<16x16x128xbf16>
    %cst_40 = arith.constant 0.000000e+00 : bf16
    %40 = vector.broadcast %cst_40 : bf16 to vector<16x1x128xbf16>
    %41 = vector.extract_strided_slice %39 {offsets = [0, 0, 0], sizes = [16, 15, 128], strides = [1, 1, 1]} : vector<16x16x128xbf16> to vector<16x15x128xbf16>
    %42 = tpu.concatenate %40, %41 in 1 : vector<16x1x128xbf16>, vector<16x15x128xbf16> -> vector<16x16x128xbf16>
    %43 = vector.extract_strided_slice %39 {offsets = [0, 1, 0], sizes = [16, 15, 128], strides = [1, 1, 1]} : vector<16x16x128xbf16> to vector<16x15x128xbf16>
    %44 = tpu.concatenate %43, %40 in 1 : vector<16x15x128xbf16>, vector<16x1x128xbf16> -> vector<16x16x128xbf16>
    %c1_41 = arith.constant 1 : index
    %c0_42 = arith.constant 0 : index
    %c0_43 = arith.constant 0 : index
    %45 = vector.load %arg10[%c1_41, %c0_42, %c0_43] : memref<18x16x384xbf16, #tpu.memory_space<vmem>>, vector<16x16x128xbf16>
    tpu.vector_store %arg10[%c1_41, %c0_42, %c0_43], %42 {strides = array<i32>} : memref<18x16x384xbf16, #tpu.memory_space<vmem>>, vector<16x16x128xbf16>,
    %c1_44 = arith.constant 1 : index
    %c0_45 = arith.constant 0 : index
    %c128_46 = arith.constant 128 : index
    %46 = vector.load %arg10[%c1_44, %c0_45, %c128_46] : memref<18x16x384xbf16, #tpu.memory_space<vmem>>, vector<16x16x128xbf16>
    tpu.vector_store %arg10[%c1_44, %c0_45, %c128_46], %39 {strides = array<i32>} : memref<18x16x384xbf16, #tpu.memory_space<vmem>>, vector<16x16x128xbf16>,
    %c1_47 = arith.constant 1 : index
    %c0_48 = arith.constant 0 : index
    %c256_49 = arith.constant 256 : index
    %47 = vector.load %arg10[%c1_47, %c0_48, %c256_49] : memref<18x16x384xbf16, #tpu.memory_space<vmem>>, vector<16x16x128xbf16>
    tpu.vector_store %arg10[%c1_47, %c0_48, %c256_49], %44 {strides = array<i32>} : memref<18x16x384xbf16, #tpu.memory_space<vmem>>, vector<16x16x128xbf16>,
    %cst_50 = arith.constant 0.000000e+00 : bf16
    %48 = vector.broadcast %cst_50 : bf16 to vector<1x16x384xbf16>
    %c0_51 = arith.constant 0 : index
    %c0_52 = arith.constant 0 : index
    %c0_53 = arith.constant 0 : index
    %49 = vector.load %arg10[%c0_51, %c0_52, %c0_53] : memref<18x16x384xbf16, #tpu.memory_space<vmem>>, vector<1x16x384xbf16>
    tpu.vector_store %arg10[%c0_51, %c0_52, %c0_53], %48 {strides = array<i32>} : memref<18x16x384xbf16, #tpu.memory_space<vmem>>, vector<1x16x384xbf16>,
    %c17_54 = arith.constant 17 : index
    %c0_55 = arith.constant 0 : index
    %c0_56 = arith.constant 0 : index
    %50 = vector.load %arg10[%c17_54, %c0_55, %c0_56] : memref<18x16x384xbf16, #tpu.memory_space<vmem>>, vector<1x16x384xbf16>
    tpu.vector_store %arg10[%c17_54, %c0_55, %c0_56], %48 {strides = array<i32>} : memref<18x16x384xbf16, #tpu.memory_space<vmem>>, vector<1x16x384xbf16>,
    %c0_57 = arith.constant 0 : index
    %c0_58 = arith.constant 0 : index
    %c0_59 = arith.constant 0 : index
    %51 = vector.load %arg10[%c0_57, %c0_58, %c0_59] : memref<18x16x384xbf16, #tpu.memory_space<vmem>>, vector<16x16x384xbf16>
    %52 = vector.shape_cast %51 : vector<16x16x384xbf16> to vector<256x384xbf16>
    %c0_60 = arith.constant 0 : index
    %c0_61 = arith.constant 0 : index
    %c0_62 = arith.constant 0 : index
    %53 = vector.load %arg5[%c0_60, %c0_61, %c0_62] : memref<3x384x128xbf16, #tpu.memory_space<vmem>>, vector<1x384x128xbf16>
    %54 = vector.shape_cast %53 : vector<1x384x128xbf16> to vector<384x128xbf16>
    %cst_63 = arith.constant dense<0.000000e+00> : vector<256x128xf32>
    %55 = tpu.matmul %52, %54, %cst_63 {dimension_numbers = #tpu.dot_dimension_numbers<[1], [0], [0], [1], [0, 0, 1, 1], [], []>} : vector<256x384xbf16>, vector<384x128xbf16>, vector<256x128xf32> -> vector<256x128xf32>
    %c1_64 = arith.constant 1 : index
    %c0_65 = arith.constant 0 : index
    %c0_66 = arith.constant 0 : index
    %56 = vector.load %arg10[%c1_64, %c0_65, %c0_66] : memref<18x16x384xbf16, #tpu.memory_space<vmem>>, vector<16x16x384xbf16>
    %57 = vector.shape_cast %56 : vector<16x16x384xbf16> to vector<256x384xbf16>
    %c1_67 = arith.constant 1 : index
    %c0_68 = arith.constant 0 : index
    %c0_69 = arith.constant 0 : index
    %58 = vector.load %arg5[%c1_67, %c0_68, %c0_69] : memref<3x384x128xbf16, #tpu.memory_space<vmem>>, vector<1x384x128xbf16>
    %59 = vector.shape_cast %58 : vector<1x384x128xbf16> to vector<384x128xbf16>
    %cst_70 = arith.constant dense<0.000000e+00> : vector<256x128xf32>
    %60 = tpu.matmul %57, %59, %cst_70 {dimension_numbers = #tpu.dot_dimension_numbers<[1], [0], [0], [1], [0, 0, 1, 1], [], []>} : vector<256x384xbf16>, vector<384x128xbf16>, vector<256x128xf32> -> vector<256x128xf32>
    %61 = arith.addf %55, %60 : vector<256x128xf32>
    %c2_71 = arith.constant 2 : index
    %c0_72 = arith.constant 0 : index
    %c0_73 = arith.constant 0 : index
    %62 = vector.load %arg10[%c2_71, %c0_72, %c0_73] : memref<18x16x384xbf16, #tpu.memory_space<vmem>>, vector<16x16x384xbf16>
    %63 = vector.shape_cast %62 : vector<16x16x384xbf16> to vector<256x384xbf16>
    %c2_74 = arith.constant 2 : index
    %c0_75 = arith.constant 0 : index
    %c0_76 = arith.constant 0 : index
    %64 = vector.load %arg5[%c2_74, %c0_75, %c0_76] : memref<3x384x128xbf16, #tpu.memory_space<vmem>>, vector<1x384x128xbf16>
    %65 = vector.shape_cast %64 : vector<1x384x128xbf16> to vector<384x128xbf16>
    %cst_77 = arith.constant dense<0.000000e+00> : vector<256x128xf32>
    %66 = tpu.matmul %63, %65, %cst_77 {dimension_numbers = #tpu.dot_dimension_numbers<[1], [0], [0], [1], [0, 0, 1, 1], [], []>} : vector<256x384xbf16>, vector<384x128xbf16>, vector<256x128xf32> -> vector<256x128xf32>
    %67 = arith.addf %61, %66 : vector<256x128xf32>
    %68 = vector.shape_cast %1 : vector<16x16x128xbf16> to vector<256x128xbf16>
    %69 = arith.extf %68 : vector<256x128xbf16> to vector<256x128xf32>
    %c0_78 = arith.constant 0 : index
    %c0_79 = arith.constant 0 : index
    %70 = vector.load %arg6[%c0_78, %c0_79] : memref<1x128xf32, #tpu.memory_space<vmem>>, vector<1x128xf32>
    %71 = vector.broadcast %70 : vector<1x128xf32> to vector<256x128xf32>
    %72 = arith.mulf %67, %71 : vector<256x128xf32>
    %c0_80 = arith.constant 0 : index
    %c0_81 = arith.constant 0 : index
    %73 = vector.load %arg7[%c0_80, %c0_81] : memref<1x128xf32, #tpu.memory_space<vmem>>, vector<1x128xf32>
    %74 = vector.broadcast %73 : vector<1x128xf32> to vector<256x128xf32>
    %75 = arith.addf %72, %74 : vector<256x128xf32>
    %76 = arith.addf %75, %69 : vector<256x128xf32>
    %cst_82 = arith.constant 0.000000e+00 : f32
    %77 = vector.broadcast %cst_82 : f32 to vector<256x128xf32>
    %78 = arith.maximumf %76, %77 : vector<256x128xf32>
    %79 = vector.shape_cast %78 : vector<256x128xf32> to vector<16x16x128xf32>
    %80 = arith.truncf %79 : vector<16x16x128xf32> to vector<16x16x128xbf16>
    %c0_83 = arith.constant 0 : index
    %c0_84 = arith.constant 0 : index
    %c0_85 = arith.constant 0 : index
    %c0_86 = arith.constant 0 : index
    %81 = vector.load %arg8[%c0_83, %c0_84, %c0_85, %c0_86] : memref<1x16x16x128xbf16, #tpu.memory_space<vmem>>, vector<1x16x16x128xbf16>
    %82 = vector.shape_cast %81 : vector<1x16x16x128xbf16> to vector<16x16x128xbf16>
    %83 = vector.shape_cast %80 : vector<16x16x128xbf16> to vector<1x16x16x128xbf16>
    tpu.vector_store %arg8[%c0_83, %c0_84, %c0_85, %c0_86], %83 {strides = array<i32>} : memref<1x16x16x128xbf16, #tpu.memory_space<vmem>>, vector<1x16x16x128xbf16>,
    return
  }
  func.func @transform_0(%arg0: i32) -> (i32, i32, i32, i32) {
    %c0_i32 = arith.constant 0 : i32
    %c0_i32_0 = arith.constant 0 : i32
    %c0_i32_1 = arith.constant 0 : i32
    %c0_i32_2 = arith.constant 0 : i32
    return %arg0, %c0_i32, %c0_i32_0, %c0_i32_1 : i32, i32, i32, i32
  }
  func.func @transform_1(%arg0: i32) -> (i32, i32, i32) {
    %c0_i32 = arith.constant 0 : i32
    %c0_i32_0 = arith.constant 0 : i32
    %c0_i32_1 = arith.constant 0 : i32
    %c0_i32_2 = arith.constant 0 : i32
    return %c0_i32, %c0_i32_0, %c0_i32_1 : i32, i32, i32
  }
  func.func @transform_2(%arg0: i32) -> (i32, i32) {
    %c0_i32 = arith.constant 0 : i32
    %c0_i32_0 = arith.constant 0 : i32
    %c0_i32_1 = arith.constant 0 : i32
    return %c0_i32, %c0_i32_0 : i32, i32
  }
  func.func @transform_3(%arg0: i32) -> (i32, i32) {
    %c0_i32 = arith.constant 0 : i32
    %c0_i32_0 = arith.constant 0 : i32
    %c0_i32_1 = arith.constant 0 : i32
    return %c0_i32, %c0_i32_0 : i32, i32
  }
  func.func @transform_4(%arg0: i32) -> (i32, i32, i32) {
    %c0_i32 = arith.constant 0 : i32
    %c0_i32_0 = arith.constant 0 : i32
    %c0_i32_1 = arith.constant 0 : i32
    %c0_i32_2 = arith.constant 0 : i32
    return %c0_i32, %c0_i32_0, %c0_i32_1 : i32, i32, i32
  }
  func.func @transform_5(%arg0: i32) -> (i32, i32) {
    %c0_i32 = arith.constant 0 : i32
    %c0_i32_0 = arith.constant 0 : i32
    %c0_i32_1 = arith.constant 0 : i32
    return %c0_i32, %c0_i32_0 : i32, i32
  }
  func.func @transform_6(%arg0: i32) -> (i32, i32) {
    %c0_i32 = arith.constant 0 : i32
    %c0_i32_0 = arith.constant 0 : i32
    %c0_i32_1 = arith.constant 0 : i32
    return %c0_i32, %c0_i32_0 : i32, i32
  }
  func.func @transform_7(%arg0: i32) -> (i32, i32, i32, i32) {
    %c0_i32 = arith.constant 0 : i32
    %c0_i32_0 = arith.constant 0 : i32
    %c0_i32_1 = arith.constant 0 : i32
    %c0_i32_2 = arith.constant 0 : i32
    return %arg0, %c0_i32, %c0_i32_0, %c0_i32_1 : i32, i32, i32, i32
  }
}

</mosaic_0001>

<llo_original>
// kernel: basic_block_forward.1
$region0: #{basic_block_forward.1}
  #allocation0 [shape = 'u32[]', space=smem, size = 0x4, offset = 0x4, fixed_abs, tag = 'smem constant byte address 0x4 - core index']
  #allocation1 [shape = 'u32[144,128]{1,0:T(1,128)}', space=vmem, size = 0x12000, scoped, tag = 'internal scratch']
  #allocation2 [shape = 'bf16[18,16,384]{2,1,0:T(16,128)(2,1)}', space=vmem, size = 0x36000, scoped, tag = 'scratch operand']
  #allocation3 [shape = 'bf16[18,16,384]{2,1,0:T(16,128)(2,1)}', space=vmem, size = 0x36000, scoped, tag = 'scratch operand']
  %s0 = inlined_call_operand.vmem [shape: bf16[2,16,16,128], index: 0, kind: input, shape index: {}]
  %s1 = inlined_call_operand.vmem [shape: bf16[3,384,128], index: 1, kind: input, shape index: {}]
  %s2 = inlined_call_operand.vmem [shape: f32[1,128], index: 2, kind: input, shape index: {}]
  %s3 = inlined_call_operand.vmem [shape: f32[1,128], index: 3, kind: input, shape index: {}]
  %s4 = inlined_call_operand.vmem [shape: bf16[3,384,128], index: 4, kind: input, shape index: {}]
  %s5 = inlined_call_operand.vmem [shape: f32[1,128], index: 5, kind: input, shape index: {}]
  %s6 = inlined_call_operand.vmem [shape: f32[1,128], index: 6, kind: input, shape index: {}]
  %s7 = inlined_call_operand.vmem [shape: bf16[2,16,16,128], index: 7, kind: output, shape index: {}]
  %s8 = sld [smem:[#allocation0]]
  $region61: #{basic_block_forward.1} parent=0
    _
  %s10 = ssub.s32 1, %s8
  %s11 = scalar_select 0, %s10, %s8
  loop: start=0, step=1, limit=4
  $region2: #{basic_block_forward.1} parent=0 // loop_pre_header
    _
  $region3: #{basic_block_forward.1} parent=0 // loop_header
    %s13 = sphi 0, %s17
    %p14 = scmp.ge.s32.totalorder %s13, 4
    %s23 = sphi 0, %s25
    %s26 = sphi 0, %s23
    %s27 = sphi 0, %s26
    %s43 = sphi 0, %s27
    %s47 = sphi 0, %s47
    %s49 = sphi 0, %s47
    %s50 = sphi 0, %s49
    %s64 = sphi 0, %s50
    %s68 = sphi 0, %s68
    %s70 = sphi 0, %s68
    %s71 = sphi 0, %s70
    %s85 = sphi 0, %s71
    %s89 = sphi 0, %s89
    %s91 = sphi 0, %s89
    %s92 = sphi 0, %s91
    %s106 = sphi 0, %s92
    %s110 = sphi 0, %s110
    %s112 = sphi 0, %s110
    %s113 = sphi 0, %s112
    %s127 = sphi 0, %s113
    %s131 = sphi 0, %s131
    %s133 = sphi 0, %s131
    %s134 = sphi 0, %s133
    %s148 = sphi 0, %s134
    %s152 = sphi 0, %s152
    %s154 = sphi 0, %s152
    %s155 = sphi 0, %s154
    %s169 = sphi 0, %s155
    %s175 = sphi 0, %s177
    %s178 = sphi 0, %s175
    %s179 = sphi 0, %s178
    %s195 = sphi 0, %s179
  $region4: #{basic_block_forward.1} parent=0 // loop_header_branch
    %16 = sbr.rel (%p14) target = $region8
  $region5: #{basic_block_forward.1} parent=0 // loop_body
    %s18 = ssub.s32 %s13, 1
    %s19 = ssub.s32 %s13, 2
    %s20 = sadd.s32 %s13, 1
    %s21 = ssub.s32 %s13, %s20
    %p22 = scmp.eq.s32.totalorder %s21, 0
    %s24 = sadd.s32 %s23, 1
    %s25 = scalar_select %p22, %s23, %s24
    %p28 = pneg %p22
    %p29 = scmp.eq.s32.totalorder %s13, 1
    %p30 = por %p28, %p29
    %p31 = scmp.ne.s32.totalorder %s23, %s26
    %p32 = scmp.eq.s32.totalorder %s13, 0
    %p33 = por %p31, %p32
    %p34 = scmp.ne.s32.totalorder %s23, %s26
    %p35 = scmp.eq.s32.totalorder %s18, 1
    %p36 = por %p34, %p35
    %p37 = scmp.ne.s32.totalorder %s26, %s27
    %p38 = scmp.eq.s32.totalorder %s18, 0
    %p39 = por %p37, %p38
    %p40 = scmp.ne.s32.totalorder %s26, %s27
    %p41 = scmp.eq.s32.totalorder %s19, 1
    %p42 = por %p40, %p41
    %p44 = scmp.ne.s32.totalorder %s27, %s43
    %p45 = scmp.eq.s32.totalorder %s19, 0
    %p46 = por %p44, %p45
    %s48 = sadd.s32 %s47, 1
    %p51 = scmp.eq.s32.totalorder %s13, 1
    %p52 = scmp.ne.s32.totalorder %s47, %s49
    %p53 = scmp.eq.s32.totalorder %s13, 0
    %p54 = por %p52, %p53
    %p55 = scmp.ne.s32.totalorder %s47, %s49
    %p56 = scmp.eq.s32.totalorder %s18, 1
    %p57 = por %p55, %p56
    %p58 = scmp.ne.s32.totalorder %s49, %s50
    %p59 = scmp.eq.s32.totalorder %s18, 0
    %p60 = por %p58, %p59
    %p61 = scmp.ne.s32.totalorder %s49, %s50
    %p62 = scmp.eq.s32.totalorder %s19, 1
    %p63 = por %p61, %p62
    %p65 = scmp.ne.s32.totalorder %s50, %s64
    %p66 = scmp.eq.s32.totalorder %s19, 0
    %p67 = por %p65, %p66
    %s69 = sadd.s32 %s68, 1
    %p72 = scmp.eq.s32.totalorder %s13, 1
    %p73 = scmp.ne.s32.totalorder %s68, %s70
    %p74 = scmp.eq.s32.totalorder %s13, 0
    %p75 = por %p73, %p74
    %p76 = scmp.ne.s32.totalorder %s68, %s70
    %p77 = scmp.eq.s32.totalorder %s18, 1
    %p78 = por %p76, %p77
    %p79 = scmp.ne.s32.totalorder %s70, %s71
    %p80 = scmp.eq.s32.totalorder %s18, 0
    %p81 = por %p79, %p80
    %p82 = scmp.ne.s32.totalorder %s70, %s71
    %p83 = scmp.eq.s32.totalorder %s19, 1
    %p84 = por %p82, %p83
    %p86 = scmp.ne.s32.totalorder %s71, %s85
    %p87 = scmp.eq.s32.totalorder %s19, 0
    %p88 = por %p86, %p87
    %s90 = sadd.s32 %s89, 1
    %p93 = scmp.eq.s32.totalorder %s13, 1
    %p94 = scmp.ne.s32.totalorder %s89, %s91
    %p95 = scmp.eq.s32.totalorder %s13, 0
    %p96 = por %p94, %p95
    %p97 = scmp.ne.s32.totalorder %s89, %s91
    %p98 = scmp.eq.s32.totalorder %s18, 1
    %p99 = por %p97, %p98
    %p100 = scmp.ne.s32.totalorder %s91, %s92
    %p101 = scmp.eq.s32.totalorder %s18, 0
    %p102 = por %p100, %p101
    %p103 = scmp.ne.s32.totalorder %s91, %s92
    %p104 = scmp.eq.s32.totalorder %s19, 1
    %p105 = por %p103, %p104
    %p107 = scmp.ne.s32.totalorder %s92, %s106
    %p108 = scmp.eq.s32.totalorder %s19, 0
    %p109 = por %p107, %p108
    %s111 = sadd.s32 %s110, 1
    %p114 = scmp.eq.s32.totalorder %s13, 1
    %p115 = scmp.ne.s32.totalorder %s110, %s112
    %p116 = scmp.eq.s32.totalorder %s13, 0
    %p117 = por %p115, %p116
    %p118 = scmp.ne.s32.totalorder %s110, %s112
    %p119 = scmp.eq.s32.totalorder %s18, 1
    %p120 = por %p118, %p119
    %p121 = scmp.ne.s32.totalorder %s112, %s113
    %p122 = scmp.eq.s32.totalorder %s18, 0
    %p123 = por %p121, %p122
    %p124 = scmp.ne.s32.totalorder %s112, %s113
    %p125 = scmp.eq.s32.totalorder %s19, 1
    %p126 = por %p124, %p125
    %p128 = scmp.ne.s32.totalorder %s113, %s127
    %p129 = scmp.eq.s32.totalorder %s19, 0
    %p130 = por %p128, %p129
    %s132 = sadd.s32 %s131, 1
    %p135 = scmp.eq.s32.totalorder %s13, 1
    %p136 = scmp.ne.s32.totalorder %s131, %s133
    %p137 = scmp.eq.s32.totalorder %s13, 0
    %p138 = por %p136, %p137
    %p139 = scmp.ne.s32.totalorder %s131, %s133
    %p140 = scmp.eq.s32.totalorder %s18, 1
    %p141 = por %p139, %p140
    %p142 = scmp.ne.s32.totalorder %s133, %s134
    %p143 = scmp.eq.s32.totalorder %s18, 0
    %p144 = por %p142, %p143
    %p145 = scmp.ne.s32.totalorder %s133, %s134
    %p146 = scmp.eq.s32.totalorder %s19, 1
    %p147 = por %p145, %p146
    %p149 = scmp.ne.s32.totalorder %s134, %s148
    %p150 = scmp.eq.s32.totalorder %s19, 0
    %p151 = por %p149, %p150
    %s153 = sadd.s32 %s152, 1
    %p156 = scmp.eq.s32.totalorder %s13, 1
    %p157 = scmp.ne.s32.totalorder %s152, %s154
    %p158 = scmp.eq.s32.totalorder %s13, 0
    %p159 = por %p157, %p158
    %p160 = scmp.ne.s32.totalorder %s152, %s154
    %p161 = scmp.eq.s32.totalorder %s18, 1
    %p162 = por %p160, %p161
    %p163 = scmp.ne.s32.totalorder %s154, %s155
    %p164 = scmp.eq.s32.totalorder %s18, 0
    %p165 = por %p163, %p164
    %p166 = scmp.ne.s32.totalorder %s154, %s155
    %p167 = scmp.eq.s32.totalorder %s19, 1
    %p168 = por %p166, %p167
    %p170 = scmp.ne.s32.totalorder %s155, %s169
    %p171 = scmp.eq.s32.totalorder %s19, 0
    %p172 = por %p170, %p171
    %s173 = ssub.s32 %s13, %s20
    %p174 = scmp.eq.s32.totalorder %s173, 0
    %s176 = sadd.s32 %s175, 1
    %s177 = scalar_select %p174, %s175, %s176
    %p180 = pneg %p174
    %p181 = scmp.eq.s32.totalorder %s13, 1
    %p182 = por %p180, %p181
    %p183 = scmp.ne.s32.totalorder %s175, %s178
    %p184 = scmp.eq.s32.totalorder %s13, 0
    %p185 = por %p183, %p184
    %p186 = scmp.ne.s32.totalorder %s175, %s178
    %p187 = scmp.eq.s32.totalorder %s18, 1
    %p188 = por %p186, %p187
    %p189 = scmp.ne.s32.totalorder %s178, %s179
    %p190 = scmp.eq.s32.totalorder %s18, 0
    %p191 = por %p189, %p190
    %p192 = scmp.ne.s32.totalorder %s178, %s179
    %p193 = scmp.eq.s32.totalorder %s19, 1
    %p194 = por %p192, %p193
    %p196 = scmp.ne.s32.totalorder %s179, %s195
    %p197 = scmp.eq.s32.totalorder %s19, 0
    %p198 = por %p196, %p197
    %p199 = scmp.le.s32.totalorder 1, %s13
    %p200 = scmp.lt.s32.totalorder %s13, 3
    %p201 = pnand %p199, %p200
    %p202 = pneg %p201
    // Predicated region
    $region9: #{basic_block_forward.1} parent=5 // pred_check
      _
    $region10: #{basic_block_forward.1} parent=5 // pred_check_branch
      %204 = sbr.rel (%p201) target = $region12
    $region11: #{basic_block_forward.1} parent=5 // pred_region
      %s205 = ssub.s32 %s13, 1
      // Predicated region
      $region13: #{basic_block_forward.1} parent=11 // pred_check
        %p206 = pneg %p60
      $region14: #{basic_block_forward.1} parent=11 // pred_check_branch
        %208 = sbr.rel (%p206) target = $region16
      $region15: #{basic_block_forward.1} parent=11 // pred_region
        _
      $region16: #{basic_block_forward.1} parent=11 // pred_fallthru
        _
      // Predicated region
      $region17: #{basic_block_forward.1} parent=11 // pred_check
        %p209 = pneg %p81
      $region18: #{basic_block_forward.1} parent=11 // pred_check_branch
        %211 = sbr.rel (%p209) target = $region20
      $region19: #{basic_block_forward.1} parent=11 // pred_region
        _
      $region20: #{basic_block_forward.1} parent=11 // pred_fallthru
        _
      // Predicated region
      $region21: #{basic_block_forward.1} parent=11 // pred_check
        %p212 = pneg %p102
      $region22: #{basic_block_forward.1} parent=11 // pred_check_branch
        %214 = sbr.rel (%p212) target = $region24
      $region23: #{basic_block_forward.1} parent=11 // pred_region
        _
      $region24: #{basic_block_forward.1} parent=11 // pred_fallthru
        _
      // Predicated region
      $region25: #{basic_block_forward.1} parent=11 // pred_check
        %p215 = pneg %p123
      $region26: #{basic_block_forward.1} parent=11 // pred_check_branch
        %217 = sbr.rel (%p215) target = $region28
      $region27: #{basic_block_forward.1} parent=11 // pred_region
        _
      $region28: #{basic_block_forward.1} parent=11 // pred_fallthru
        _
      // Predicated region
      $region29: #{basic_block_forward.1} parent=11 // pred_check
        %p218 = pneg %p144
      $region30: #{basic_block_forward.1} parent=11 // pred_check_branch
        %220 = sbr.rel (%p218) target = $region32
      $region31: #{basic_block_forward.1} parent=11 // pred_region
        _
      $region32: #{basic_block_forward.1} parent=11 // pred_fallthru
        _
      // Predicated region
      $region33: #{basic_block_forward.1} parent=11 // pred_check
        %p221 = pneg %p165
      $region34: #{basic_block_forward.1} parent=11 // pred_check_branch
        %223 = sbr.rel (%p221) target = $region36
      $region35: #{basic_block_forward.1} parent=11 // pred_region
        _
      $region36: #{basic_block_forward.1} parent=11 // pred_fallthru
        _
    $region12: #{basic_block_forward.1} parent=5 // pred_fallthru
      _
    %p224 = scmp.lt.s32.totalorder %s13, 2
    // Predicated region
    $region37: #{basic_block_forward.1} parent=5 // pred_check
      %p225 = pneg %p224
    $region38: #{basic_block_forward.1} parent=5 // pred_check_branch
      %227 = sbr.rel (%p225) target = $region40
    $region39: #{basic_block_forward.1} parent=5 // pred_region
      // Predicated region
      $region41: #{basic_block_forward.1} parent=39 // pred_check
        %p228 = pneg %p33
      $region42: #{basic_block_forward.1} parent=39 // pred_check_branch
        %230 = sbr.rel (%p228) target = $region44
      $region43: #{basic_block_forward.1} parent=39 // pred_region
        %p231 = scmp.lt.s32.totalorder %s13, 1
        %s232 = scalar_select %p231, %s13, 1
        %s233 = smul.addr %s232, 32
        %s234 = smul.addr %s233, 4
        %s235 = scalar_lea.vmem %s0, %s234
      $region44: #{basic_block_forward.1} parent=39 // pred_fallthru
        _
    $region40: #{basic_block_forward.1} parent=5 // pred_fallthru
      _
    %p236 = scmp.le.s32.totalorder 1, %s13
    %p237 = scmp.lt.s32.totalorder %s13, 3
    %p238 = pnand %p236, %p237
    %p239 = pneg %p238
    // Predicated region
    $region45: #{basic_block_forward.1} parent=5 // pred_check
      _
    $region46: #{basic_block_forward.1} parent=5 // pred_check_branch
      %241 = sbr.rel (%p238) target = $region48
    $region47: #{basic_block_forward.1} parent=5 // pred_region
      %s242 = ssub.s32 %s13, 1
      %p243 = scmp.lt.s32.totalorder %s18, 1
      %s244 = scalar_select %p243, %s18, 1
      %s245 = smul.addr %s244, 32
      %s246 = smul.addr %s245, 4
      %s247 = scalar_lea.vmem %s0, %s246
      %p248 = pneg %p39
      %p249 = pneg %p36
      %p250 = pneg %p60
      %p251 = pneg %p57
      %p252 = pneg %p81
      %p253 = pneg %p78
      %p254 = pneg %p102
      %p255 = pneg %p99
      %p256 = pneg %p123
      %p257 = pneg %p120
      %p258 = pneg %p144
      %p259 = pneg %p141
      %p260 = pneg %p165
      %p261 = pneg %p162
      %p262 = pneg %p191
      %p263 = pneg %p188
      %p264 = scmp.lt.s32.totalorder %s18, 1
      %s265 = scalar_select %p264, %s18, 1
      %s266 = smul.addr %s265, 32
      %s267 = smul.addr %s266, 4
      %s268 = scalar_lea.vmem %s7, %s267
      %p269 = scmp.lt.s32.totalorder %s18, 1
      %s270 = scalar_select %p269, %s18, 1
      %s271 = smul.addr %s270, 32
      %s272 = smul.addr %s271, 4
      %s273 = scalar_lea.vmem %s0, %s272
      %p274 = scmp.lt.s32.totalorder %s18, 1
      %s275 = scalar_select %p274, %s18, 1
      %s276 = smul.addr %s275, 32
      %s277 = smul.addr %s276, 4
      %s278 = scalar_lea.vmem %s7, %s277
      %v280 = vld [vmem:[%s273] sm:$0xf]
      %v281 = vld [vmem:[%s273 + $0x4] sm:$0xf]
      %v282 = vld [vmem:[%s273 + $0x8] sm:$0xf]
      %v283 = vld [vmem:[%s273 + $0xc] sm:$0xf]
      %v284 = vld [vmem:[%s273 + $0x10] sm:$0xf]
      %v285 = vld [vmem:[%s273 + $0x14] sm:$0xf]
      %v286 = vld [vmem:[%s273 + $0x18] sm:$0xf]
      %v287 = vld [vmem:[%s273 + $0x1c] sm:$0xf]
      %v288 = vld [vmem:[%s273 + $0x20] sm:$0xf]
      %v289 = vld [vmem:[%s273 + $0x24] sm:$0xf]
      %v290 = vld [vmem:[%s273 + $0x28] sm:$0xf]
      %v291 = vld [vmem:[%s273 + $0x2c] sm:$0xf]
      %v292 = vld [vmem:[%s273 + $0x30] sm:$0xf]
      %v293 = vld [vmem:[%s273 + $0x34] sm:$0xf]
      %v294 = vld [vmem:[%s273 + $0x38] sm:$0xf]
      %v295 = vld [vmem:[%s273 + $0x3c] sm:$0xf]
      %v296 = vld [vmem:[%s273 + $0x40] sm:$0xf]
      %v297 = vld [vmem:[%s273 + $0x44] sm:$0xf]
      %v298 = vld [vmem:[%s273 + $0x48] sm:$0xf]
      %v299 = vld [vmem:[%s273 + $0x4c] sm:$0xf]
      %v300 = vld [vmem:[%s273 + $0x50] sm:$0xf]
      %v301 = vld [vmem:[%s273 + $0x54] sm:$0xf]
      %v302 = vld [vmem:[%s273 + $0x58] sm:$0xf]
      %v303 = vld [vmem:[%s273 + $0x5c] sm:$0xf]
      %v304 = vld [vmem:[%s273 + $0x60] sm:$0xf]
      %v305 = vld [vmem:[%s273 + $0x64] sm:$0xf]
      %v306 = vld [vmem:[%s273 + $0x68] sm:$0xf]
      %v307 = vld [vmem:[%s273 + $0x6c] sm:$0xf]
      %v308 = vld [vmem:[%s273 + $0x70] sm:$0xf]
      %v309 = vld [vmem:[%s273 + $0x74] sm:$0xf]
      %v310 = vld [vmem:[%s273 + $0x78] sm:$0xf]
      %v311 = vld [vmem:[%s273 + $0x7c] sm:$0xf]
      %v344 = vunpack.c.l.b16 %v280
      %v345 = vunpack.c.l.b16 %v281
      %v346 = vunpack.c.l.b16 %v282
      %v347 = vunpack.c.l.b16 %v283
      %v348 = vunpack.c.l.b16 %v284
      %v349 = vunpack.c.l.b16 %v285
      %v350 = vunpack.c.l.b16 %v286
      %v351 = vunpack.c.l.b16 %v287
      %v352 = vunpack.c.l.b16 %v288
      %v353 = vunpack.c.l.b16 %v289
      %v354 = vunpack.c.l.b16 %v290
      %v355 = vunpack.c.l.b16 %v291
      %v356 = vunpack.c.l.b16 %v292
      %v357 = vunpack.c.l.b16 %v293
      %v358 = vunpack.c.l.b16 %v294
      %v359 = vunpack.c.l.b16 %v295
      %v360 = vunpack.c.l.b16 %v296
      %v361 = vunpack.c.l.b16 %v297
      %v362 = vunpack.c.l.b16 %v298
      %v363 = vunpack.c.l.b16 %v299
      %v364 = vunpack.c.l.b16 %v300
      %v365 = vunpack.c.l.b16 %v301
      %v366 = vunpack.c.l.b16 %v302
      %v367 = vunpack.c.l.b16 %v303
      %v368 = vunpack.c.l.b16 %v304
      %v369 = vunpack.c.l.b16 %v305
      %v370 = vunpack.c.l.b16 %v306
      %v371 = vunpack.c.l.b16 %v307
      %v372 = vunpack.c.l.b16 %v308
      %v373 = vunpack.c.l.b16 %v309
      %v374 = vunpack.c.l.b16 %v310
      %v375 = vunpack.c.l.b16 %v311
      %v376 = vpack.c.b16 %v345, %v344
      %v377 = vpack.c.b16 %v347, %v346
      %v378 = vpack.c.b16 %v349, %v348
      %v379 = vpack.c.b16 %v351, %v350
      %v380 = vpack.c.b16 %v353, %v352
      %v381 = vpack.c.b16 %v355, %v354
      %v382 = vpack.c.b16 %v357, %v356
      %v383 = vpack.c.b16 %v359, %v358
      %v384 = vpack.c.b16 %v361, %v360
      %v385 = vpack.c.b16 %v363, %v362
      %v386 = vpack.c.b16 %v365, %v364
      %v387 = vpack.c.b16 %v367, %v366
      %v388 = vpack.c.b16 %v369, %v368
      %v389 = vpack.c.b16 %v371, %v370
      %v390 = vpack.c.b16 %v373, %v372
      %v391 = vpack.c.b16 %v375, %v374
      %v393 = vshrl.u32 %v376, 16
      %v395 = vrot.slane %v393, 7
      %v396 = vshll.u32 %v376, 16
      %v398 = vor.u32 %v395, %v396
      %v400 = vshrl.u32 %v377, 16
      %v402 = vrot.slane %v400, 7
      %v403 = vshll.u32 %v377, 16
      %v405 = vor.u32 %v402, %v403
      %v407 = vshrl.u32 %v378, 16
      %v409 = vrot.slane %v407, 7
      %v410 = vshll.u32 %v378, 16
      %v412 = vor.u32 %v409, %v410
      %v414 = vshrl.u32 %v379, 16
      %v416 = vrot.slane %v414, 7
      %v417 = vshll.u32 %v379, 16
      %v419 = vor.u32 %v416, %v417
      %v421 = vshrl.u32 %v380, 16
      %v423 = vrot.slane %v421, 7
      %v424 = vshll.u32 %v380, 16
      %v426 = vor.u32 %v423, %v424
      %v428 = vshrl.u32 %v381, 16
      %v430 = vrot.slane %v428, 7
      %v431 = vshll.u32 %v381, 16
      %v433 = vor.u32 %v430, %v431
      %v435 = vshrl.u32 %v382, 16
      %v437 = vrot.slane %v435, 7
      %v438 = vshll.u32 %v382, 16
      %v440 = vor.u32 %v437, %v438
      %v442 = vshrl.u32 %v383, 16
      %v444 = vrot.slane %v442, 7
      %v445 = vshll.u32 %v383, 16
      %v447 = vor.u32 %v444, %v445
      %v449 = vshrl.u32 %v384, 16
      %v451 = vrot.slane %v449, 7
      %v452 = vshll.u32 %v384, 16
      %v454 = vor.u32 %v451, %v452
      %v456 = vshrl.u32 %v385, 16
      %v458 = vrot.slane %v456, 7
      %v459 = vshll.u32 %v385, 16
      %v461 = vor.u32 %v458, %v459
      %v463 = vshrl.u32 %v386, 16
      %v465 = vrot.slane %v463, 7
      %v466 = vshll.u32 %v386, 16
      %v468 = vor.u32 %v465, %v466
      %v470 = vshrl.u32 %v387, 16
      %v472 = vrot.slane %v470, 7
      %v473 = vshll.u32 %v387, 16
      %v475 = vor.u32 %v472, %v473
      %v477 = vshrl.u32 %v388, 16
      %v479 = vrot.slane %v477, 7
      %v480 = vshll.u32 %v388, 16
      %v482 = vor.u32 %v479, %v480
      %v484 = vshrl.u32 %v389, 16
      %v486 = vrot.slane %v484, 7
      %v487 = vshll.u32 %v389, 16
      %v489 = vor.u32 %v486, %v487
      %v491 = vshrl.u32 %v390, 16
      %v493 = vrot.slane %v491, 7
      %v494 = vshll.u32 %v390, 16
      %v496 = vor.u32 %v493, %v494
      %v498 = vshrl.u32 %v391, 16
      %v500 = vrot.slane %v498, 7
      %v501 = vshll.u32 %v391, 16
      %v503 = vor.u32 %v500, %v501
      %vm520 = vcmask 1040384
      %vm521 = vsmask.f32 256
      %vm522 = vmand %vm520, %vm521
      %v523 = vsel %vm522, 0, %v398
      %v524 = vsel %vm522, 0, %v405
      %v525 = vsel %vm522, 0, %v412
      %v526 = vsel %vm522, 0, %v419
      %v527 = vsel %vm522, 0, %v426
      %v528 = vsel %vm522, 0, %v433
      %v529 = vsel %vm522, 0, %v440
      %v530 = vsel %vm522, 0, %v447
      %v531 = vsel %vm522, 0, %v454
      %v532 = vsel %vm522, 0, %v461
      %v533 = vsel %vm522, 0, %v468
      %v534 = vsel %vm522, 0, %v475
      %v535 = vsel %vm522, 0, %v482
      %v536 = vsel %vm522, 0, %v489
      %v537 = vsel %vm522, 0, %v496
      %v538 = vsel %vm522, 0, %v503
      %v539 = vrot.slane %v396, 1
      %v540 = vor.u32 %v393, %v539
      %v541 = vrot.slane %v403, 1
      %v542 = vor.u32 %v400, %v541
      %v543 = vrot.slane %v410, 1
      %v544 = vor.u32 %v407, %v543
      %v545 = vrot.slane %v417, 1
      %v546 = vor.u32 %v414, %v545
      %v547 = vrot.slane %v424, 1
      %v548 = vor.u32 %v421, %v547
      %v549 = vrot.slane %v431, 1
      %v550 = vor.u32 %v428, %v549
      %v551 = vrot.slane %v438, 1
      %v552 = vor.u32 %v435, %v551
      %v553 = vrot.slane %v445, 1
      %v554 = vor.u32 %v442, %v553
      %v555 = vrot.slane %v452, 1
      %v556 = vor.u32 %v449, %v555
      %v557 = vrot.slane %v459, 1
      %v558 = vor.u32 %v456, %v557
      %v559 = vrot.slane %v466, 1
      %v560 = vor.u32 %v463, %v559
      %v561 = vrot.slane %v473, 1
      %v562 = vor.u32 %v470, %v561
      %v563 = vrot.slane %v480, 1
      %v564 = vor.u32 %v477, %v563
      %v565 = vrot.slane %v487, 1
      %v566 = vor.u32 %v484, %v565
      %v567 = vrot.slane %v494, 1
      %v568 = vor.u32 %v491, %v567
      %v569 = vrot.slane %v501, 1
      %v570 = vor.u32 %v498, %v569
      %vm587 = vcmask 1047552
      %vm588 = vsmask.f32 7424
      %vm589 = vmand %vm587, %vm588
      %v590 = vsel %vm589, %v540, 0
      %v591 = vsel %vm589, %v542, 0
      %v592 = vsel %vm589, %v544, 0
      %v593 = vsel %vm589, %v546, 0
      %v594 = vsel %vm589, %v548, 0
      %v595 = vsel %vm589, %v550, 0
      %v596 = vsel %vm589, %v552, 0
      %v597 = vsel %vm589, %v554, 0
      %v598 = vsel %vm589, %v556, 0
      %v599 = vsel %vm589, %v558, 0
      %v600 = vsel %vm589, %v560, 0
      %v601 = vsel %vm589, %v562, 0
      %v602 = vsel %vm589, %v564, 0
      %v603 = vsel %vm589, %v566, 0
      %v604 = vsel %vm589, %v568, 0
      %v605 = vsel %vm589, %v570, 0
      %s606 = scalar_lea.vmem [#allocation2], 24
      %607 = vst [vmem:[%s606] sm:$0xff] %v523
      %608 = vst [vmem:[%s606 + $0x18] sm:$0xff] %v524
      %609 = vst [vmem:[%s606 + $0x30] sm:$0xff] %v525
      %610 = vst [vmem:[%s606 + $0x48] sm:$0xff] %v526
      %611 = vst [vmem:[%s606 + $0x60] sm:$0xff] %v527
      %612 = vst [vmem:[%s606 + $0x78] sm:$0xff] %v528
      %613 = vst [vmem:[%s606 + $0x90] sm:$0xff] %v529
      %614 = vst [vmem:[%s606 + $0xa8] sm:$0xff] %v530
      %615 = vst [vmem:[%s606 + $0xc0] sm:$0xff] %v531
      %616 = vst [vmem:[%s606 + $0xd8] sm:$0xff] %v532
      %617 = vst [vmem:[%s606 + $0xf0] sm:$0xff] %v533
      %618 = vst [vmem:[%s606 + $0x108] sm:$0xff] %v534
      %619 = vst [vmem:[%s606 + $0x120] sm:$0xff] %v535
      %620 = vst [vmem:[%s606 + $0x138] sm:$0xff] %v536
      %621 = vst [vmem:[%s606 + $0x150] sm:$0xff] %v537
      %622 = vst [vmem:[%s606 + $0x168] sm:$0xff] %v538
      %639 = vst [vmem:[%s606 + $0x8] sm:$0xff] %v376
      %640 = vst [vmem:[%s606 + $0x20] sm:$0xff] %v377
      %641 = vst [vmem:[%s606 + $0x38] sm:$0xff] %v378
      %642 = vst [vmem:[%s606 + $0x50] sm:$0xff] %v379
      %643 = vst [vmem:[%s606 + $0x68] sm:$0xff] %v380
      %644 = vst [vmem:[%s606 + $0x80] sm:$0xff] %v381
      %645 = vst [vmem:[%s606 + $0x98] sm:$0xff] %v382
      %646 = vst [vmem:[%s606 + $0xb0] sm:$0xff] %v383
      %647 = vst [vmem:[%s606 + $0xc8] sm:$0xff] %v384
      %648 = vst [vmem:[%s606 + $0xe0] sm:$0xff] %v385
      %649 = vst [vmem:[%s606 + $0xf8] sm:$0xff] %v386
      %650 = vst [vmem:[%s606 + $0x110] sm:$0xff] %v387
      %651 = vst [vmem:[%s606 + $0x128] sm:$0xff] %v388
      %652 = vst [vmem:[%s606 + $0x140] sm:$0xff] %v389
      %653 = vst [vmem:[%s606 + $0x158] sm:$0xff] %v390
      %654 = vst [vmem:[%s606 + $0x170] sm:$0xff] %v391
      %655 = vst [vmem:[%s606 + $0x10] sm:$0xff] %v590
      %656 = vst [vmem:[%s606 + $0x28] sm:$0xff] %v591
      %657 = vst [vmem:[%s606 + $0x40] sm:$0xff] %v592
      %658 = vst [vmem:[%s606 + $0x58] sm:$0xff] %v593
      %659 = vst [vmem:[%s606 + $0x70] sm:$0xff] %v594
      %660 = vst [vmem:[%s606 + $0x88] sm:$0xff] %v595
      %661 = vst [vmem:[%s606 + $0xa0] sm:$0xff] %v596
      %662 = vst [vmem:[%s606 + $0xb8] sm:$0xff] %v597
      %663 = vst [vmem:[%s606 + $0xd0] sm:$0xff] %v598
      %664 = vst [vmem:[%s606 + $0xe8] sm:$0xff] %v599
      %665 = vst [vmem:[%s606 + $0x100] sm:$0xff] %v600
      %666 = vst [vmem:[%s606 + $0x118] sm:$0xff] %v601
      %667 = vst [vmem:[%s606 + $0x130] sm:$0xff] %v602
      %668 = vst [vmem:[%s606 + $0x148] sm:$0xff] %v603
      %669 = vst [vmem:[%s606 + $0x160] sm:$0xff] %v604
      %670 = vst [vmem:[%s606 + $0x178] sm:$0xff] %v605
      %671 = vst [vmem:[#allocation2] sm:$0xff] 0
      %672 = vst [vmem:[#allocation2 + $0x8] sm:$0xff] 0
      %673 = vst [vmem:[#allocation2 + $0x10] sm:$0xff] 0
      %s674 = scalar_lea.vmem [#allocation2], 408
      %675 = vst [vmem:[%s674] sm:$0xff] 0
      %676 = vst [vmem:[%s674 + $0x8] sm:$0xff] 0
      %677 = vst [vmem:[%s674 + $0x10] sm:$0xff] 0
      %v678 = vld [vmem:[#allocation2] sm:$0xff]
      %v679 = vld [vmem:[#allocation2 + $0x8] sm:$0xff]
      %v680 = vld [vmem:[#allocation2 + $0x10] sm:$0xff]
      %v681 = vld [vmem:[#allocation2 + $0x18] sm:$0xff]
      %v682 = vld [vmem:[#allocation2 + $0x20] sm:$0xff]
      %v683 = vld [vmem:[#allocation2 + $0x28] sm:$0xff]
      %v684 = vld [vmem:[#allocation2 + $0x30] sm:$0xff]
      %v685 = vld [vmem:[#allocation2 + $0x38] sm:$0xff]
      %v686 = vld [vmem:[#allocation2 + $0x40] sm:$0xff]
      %v687 = vld [vmem:[#allocation2 + $0x48] sm:$0xff]
      %v688 = vld [vmem:[#allocation2 + $0x50] sm:$0xff]
      %v689 = vld [vmem:[#allocation2 + $0x58] sm:$0xff]
      %v690 = vld [vmem:[#allocation2 + $0x60] sm:$0xff]
      %v691 = vld [vmem:[#allocation2 + $0x68] sm:$0xff]
      %v692 = vld [vmem:[#allocation2 + $0x70] sm:$0xff]
      %v693 = vld [vmem:[#allocation2 + $0x78] sm:$0xff]
      %v694 = vld [vmem:[#allocation2 + $0x80] sm:$0xff]
      %v695 = vld [vmem:[#allocation2 + $0x88] sm:$0xff]
      %v696 = vld [vmem:[#allocation2 + $0x90] sm:$0xff]
      %v697 = vld [vmem:[#allocation2 + $0x98] sm:$0xff]
      %v698 = vld [vmem:[#allocation2 + $0xa0] sm:$0xff]
      %v699 = vld [vmem:[#allocation2 + $0xa8] sm:$0xff]
      %v700 = vld [vmem:[#allocation2 + $0xb0] sm:$0xff]
      %v701 = vld [vmem:[#allocation2 + $0xb8] sm:$0xff]
      %v702 = vld [vmem:[#allocation2 + $0xc0] sm:$0xff]
      %v703 = vld [vmem:[#allocation2 + $0xc8] sm:$0xff]
      %v704 = vld [vmem:[#allocation2 + $0xd0] sm:$0xff]
      %v705 = vld [vmem:[#allocation2 + $0xd8] sm:$0xff]
      %v706 = vld [vmem:[#allocation2 + $0xe0] sm:$0xff]
      %v707 = vld [vmem:[#allocation2 + $0xe8] sm:$0xff]
      %v708 = vld [vmem:[#allocation2 + $0xf0] sm:$0xff]
      %v709 = vld [vmem:[#allocation2 + $0xf8] sm:$0xff]
      %v710 = vld [vmem:[#allocation2 + $0x100] sm:$0xff]
      %v711 = vld [vmem:[#allocation2 + $0x108] sm:$0xff]
      %v712 = vld [vmem:[#allocation2 + $0x110] sm:$0xff]
      %v713 = vld [vmem:[#allocation2 + $0x118] sm:$0xff]
      %v714 = vld [vmem:[#allocation2 + $0x120] sm:$0xff]
      %v715 = vld [vmem:[#allocation2 + $0x128] sm:$0xff]
      %v716 = vld [vmem:[#allocation2 + $0x130] sm:$0xff]
      %v717 = vld [vmem:[#allocation2 + $0x138] sm:$0xff]
      %v718 = vld [vmem:[#allocation2 + $0x140] sm:$0xff]
      %v719 = vld [vmem:[#allocation2 + $0x148] sm:$0xff]
      %v720 = vld [vmem:[#allocation2 + $0x150] sm:$0xff]
      %v721 = vld [vmem:[#allocation2 + $0x158] sm:$0xff]
      %v722 = vld [vmem:[#allocation2 + $0x160] sm:$0xff]
      %v723 = vld [vmem:[#allocation2 + $0x168] sm:$0xff]
      %v724 = vld [vmem:[#allocation2 + $0x170] sm:$0xff]
      %v725 = vld [vmem:[#allocation2 + $0x178] sm:$0xff]
      %v726 = vld [vmem:[%s1] sm:$0xf]
      %v727 = vld [vmem:[%s1 + $0x4] sm:$0xf]
      %v728 = vld [vmem:[%s1 + $0x8] sm:$0xf]
      %v729 = vld [vmem:[%s1 + $0xc] sm:$0xf]
      %v730 = vld [vmem:[%s1 + $0x10] sm:$0xf]
      %v731 = vld [vmem:[%s1 + $0x14] sm:$0xf]
      %v732 = vld [vmem:[%s1 + $0x18] sm:$0xf]
      %v733 = vld [vmem:[%s1 + $0x1c] sm:$0xf]
      %v734 = vld [vmem:[%s1 + $0x20] sm:$0xf]
      %v735 = vld [vmem:[%s1 + $0x24] sm:$0xf]
      %v736 = vld [vmem:[%s1 + $0x28] sm:$0xf]
      %v737 = vld [vmem:[%s1 + $0x2c] sm:$0xf]
      %v738 = vld [vmem:[%s1 + $0x30] sm:$0xf]
      %v739 = vld [vmem:[%s1 + $0x34] sm:$0xf]
      %v740 = vld [vmem:[%s1 + $0x38] sm:$0xf]
      %v741 = vld [vmem:[%s1 + $0x3c] sm:$0xf]
      %v742 = vld [vmem:[%s1 + $0x40] sm:$0xf]
      %v743 = vld [vmem:[%s1 + $0x44] sm:$0xf]
      %v744 = vld [vmem:[%s1 + $0x48] sm:$0xf]
      %v745 = vld [vmem:[%s1 + $0x4c] sm:$0xf]
      %v746 = vld [vmem:[%s1 + $0x50] sm:$0xf]
      %v747 = vld [vmem:[%s1 + $0x54] sm:$0xf]
      %v748 = vld [vmem:[%s1 + $0x58] sm:$0xf]
      %v749 = vld [vmem:[%s1 + $0x5c] sm:$0xf]
      %v750 = vld [vmem:[%s1 + $0x60] sm:$0xf]
      %v751 = vld [vmem:[%s1 + $0x64] sm:$0xf]
      %v752 = vld [vmem:[%s1 + $0x68] sm:$0xf]
      %v753 = vld [vmem:[%s1 + $0x6c] sm:$0xf]
      %v754 = vld [vmem:[%s1 + $0x70] sm:$0xf]
      %v755 = vld [vmem:[%s1 + $0x74] sm:$0xf]
      %v756 = vld [vmem:[%s1 + $0x78] sm:$0xf]
      %v757 = vld [vmem:[%s1 + $0x7c] sm:$0xf]
      %v758 = vld [vmem:[%s1 + $0x80] sm:$0xf]
      %v759 = vld [vmem:[%s1 + $0x84] sm:$0xf]
      %v760 = vld [vmem:[%s1 + $0x88] sm:$0xf]
      %v761 = vld [vmem:[%s1 + $0x8c] sm:$0xf]
      %v762 = vld [vmem:[%s1 + $0x90] sm:$0xf]
      %v763 = vld [vmem:[%s1 + $0x94] sm:$0xf]
      %v764 = vld [vmem:[%s1 + $0x98] sm:$0xf]
      %v765 = vld [vmem:[%s1 + $0x9c] sm:$0xf]
      %v766 = vld [vmem:[%s1 + $0xa0] sm:$0xf]
      %v767 = vld [vmem:[%s1 + $0xa4] sm:$0xf]
      %v768 = vld [vmem:[%s1 + $0xa8] sm:$0xf]
      %v769 = vld [vmem:[%s1 + $0xac] sm:$0xf]
      %v770 = vld [vmem:[%s1 + $0xb0] sm:$0xf]
      %v771 = vld [vmem:[%s1 + $0xb4] sm:$0xf]
      %v772 = vld [vmem:[%s1 + $0xb8] sm:$0xf]
      %v773 = vld [vmem:[%s1 + $0xbc] sm:$0xf]
      %v774 = vld [vmem:[%s606] sm:$0xff]
      %v775 = vld [vmem:[%s606 + $0x8] sm:$0xff]
      %v776 = vld [vmem:[%s606 + $0x10] sm:$0xff]
      %v777 = vld [vmem:[%s606 + $0x18] sm:$0xff]
      %v778 = vld [vmem:[%s606 + $0x20] sm:$0xff]
      %v779 = vld [vmem:[%s606 + $0x28] sm:$0xff]
      %v780 = vld [vmem:[%s606 + $0x30] sm:$0xff]
      %v781 = vld [vmem:[%s606 + $0x38] sm:$0xff]
      %v782 = vld [vmem:[%s606 + $0x40] sm:$0xff]
      %v783 = vld [vmem:[%s606 + $0x48] sm:$0xff]
      %v784 = vld [vmem:[%s606 + $0x50] sm:$0xff]
      %v785 = vld [vmem:[%s606 + $0x58] sm:$0xff]
      %v786 = vld [vmem:[%s606 + $0x60] sm:$0xff]
      %v787 = vld [vmem:[%s606 + $0x68] sm:$0xff]
      %v788 = vld [vmem:[%s606 + $0x70] sm:$0xff]
      %v789 = vld [vmem:[%s606 + $0x78] sm:$0xff]
      %v790 = vld [vmem:[%s606 + $0x80] sm:$0xff]
      %v791 = vld [vmem:[%s606 + $0x88] sm:$0xff]
      %v792 = vld [vmem:[%s606 + $0x90] sm:$0xff]
      %v793 = vld [vmem:[%s606 + $0x98] sm:$0xff]
      %v794 = vld [vmem:[%s606 + $0xa0] sm:$0xff]
      %v795 = vld [vmem:[%s606 + $0xa8] sm:$0xff]
      %v796 = vld [vmem:[%s606 + $0xb0] sm:$0xff]
      %v797 = vld [vmem:[%s606 + $0xb8] sm:$0xff]
      %v798 = vld [vmem:[%s606 + $0xc0] sm:$0xff]
      %v799 = vld [vmem:[%s606 + $0xc8] sm:$0xff]
      %v800 = vld [vmem:[%s606 + $0xd0] sm:$0xff]
      %v801 = vld [vmem:[%s606 + $0xd8] sm:$0xff]
      %v802 = vld [vmem:[%s606 + $0xe0] sm:$0xff]
      %v803 = vld [vmem:[%s606 + $0xe8] sm:$0xff]
      %v804 = vld [vmem:[%s606 + $0xf0] sm:$0xff]
      %v805 = vld [vmem:[%s606 + $0xf8] sm:$0xff]
      %v806 = vld [vmem:[%s606 + $0x100] sm:$0xff]
      %v807 = vld [vmem:[%s606 + $0x108] sm:$0xff]
      %v808 = vld [vmem:[%s606 + $0x110] sm:$0xff]
      %v809 = vld [vmem:[%s606 + $0x118] sm:$0xff]
      %v810 = vld [vmem:[%s606 + $0x120] sm:$0xff]
      %v811 = vld [vmem:[%s606 + $0x128] sm:$0xff]
      %v812 = vld [vmem:[%s606 + $0x130] sm:$0xff]
      %v813 = vld [vmem:[%s606 + $0x138] sm:$0xff]
      %v814 = vld [vmem:[%s606 + $0x140] sm:$0xff]
      %v815 = vld [vmem:[%s606 + $0x148] sm:$0xff]
      %v816 = vld [vmem:[%s606 + $0x150] sm:$0xff]
      %v817 = vld [vmem:[%s606 + $0x158] sm:$0xff]
      %v818 = vld [vmem:[%s606 + $0x160] sm:$0xff]
      %v819 = vld [vmem:[%s606 + $0x168] sm:$0xff]
      %v820 = vld [vmem:[%s606 + $0x170] sm:$0xff]
      %v821 = vld [vmem:[%s606 + $0x178] sm:$0xff]
      %s822 = scalar_lea.vmem %s1, 192
      %v823 = vld [vmem:[%s822] sm:$0xf]
      %v824 = vld [vmem:[%s822 + $0x4] sm:$0xf]
      %v825 = vld [vmem:[%s822 + $0x8] sm:$0xf]
      %v826 = vld [vmem:[%s822 + $0xc] sm:$0xf]
      %v827 = vld [vmem:[%s822 + $0x10] sm:$0xf]
      %v828 = vld [vmem:[%s822 + $0x14] sm:$0xf]
      %v829 = vld [vmem:[%s822 + $0x18] sm:$0xf]
      %v830 = vld [vmem:[%s822 + $0x1c] sm:$0xf]
      %v831 = vld [vmem:[%s822 + $0x20] sm:$0xf]
      %v832 = vld [vmem:[%s822 + $0x24] sm:$0xf]
      %v833 = vld [vmem:[%s822 + $0x28] sm:$0xf]
      %v834 = vld [vmem:[%s822 + $0x2c] sm:$0xf]
      %v835 = vld [vmem:[%s822 + $0x30] sm:$0xf]
      %v836 = vld [vmem:[%s822 + $0x34] sm:$0xf]
      %v837 = vld [vmem:[%s822 + $0x38] sm:$0xf]
      %v838 = vld [vmem:[%s822 + $0x3c] sm:$0xf]
      %v839 = vld [vmem:[%s822 + $0x40] sm:$0xf]
      %v840 = vld [vmem:[%s822 + $0x44] sm:$0xf]
      %v841 = vld [vmem:[%s822 + $0x48] sm:$0xf]
      %v842 = vld [vmem:[%s822 + $0x4c] sm:$0xf]
      %v843 = vld [vmem:[%s822 + $0x50] sm:$0xf]
      %v844 = vld [vmem:[%s822 + $0x54] sm:$0xf]
      %v845 = vld [vmem:[%s822 + $0x58] sm:$0xf]
      %v846 = vld [vmem:[%s822 + $0x5c] sm:$0xf]
      %v847 = vld [vmem:[%s822 + $0x60] sm:$0xf]
      %v848 = vld [vmem:[%s822 + $0x64] sm:$0xf]
      %v849 = vld [vmem:[%s822 + $0x68] sm:$0xf]
      %v850 = vld [vmem:[%s822 + $0x6c] sm:$0xf]
      %v851 = vld [vmem:[%s822 + $0x70] sm:$0xf]
      %v852 = vld [vmem:[%s822 + $0x74] sm:$0xf]
      %v853 = vld [vmem:[%s822 + $0x78] sm:$0xf]
      %v854 = vld [vmem:[%s822 + $0x7c] sm:$0xf]
      %v855 = vld [vmem:[%s822 + $0x80] sm:$0xf]
      %v856 = vld [vmem:[%s822 + $0x84] sm:$0xf]
      %v857 = vld [vmem:[%s822 + $0x88] sm:$0xf]
      %v858 = vld [vmem:[%s822 + $0x8c] sm:$0xf]
      %v859 = vld [vmem:[%s822 + $0x90] sm:$0xf]
      %v860 = vld [vmem:[%s822 + $0x94] sm:$0xf]
      %v861 = vld [vmem:[%s822 + $0x98] sm:$0xf]
      %v862 = vld [vmem:[%s822 + $0x9c] sm:$0xf]
      %v863 = vld [vmem:[%s822 + $0xa0] sm:$0xf]
      %v864 = vld [vmem:[%s822 + $0xa4] sm:$0xf]
      %v865 = vld [vmem:[%s822 + $0xa8] sm:$0xf]
      %v866 = vld [vmem:[%s822 + $0xac] sm:$0xf]
      %v867 = vld [vmem:[%s822 + $0xb0] sm:$0xf]
      %v868 = vld [vmem:[%s822 + $0xb4] sm:$0xf]
      %v869 = vld [vmem:[%s822 + $0xb8] sm:$0xf]
      %v870 = vld [vmem:[%s822 + $0xbc] sm:$0xf]
      %v919 = vunpack.c.l.b16 %v823
      %v920 = vunpack.c.l.b16 %v824
      %v921 = vunpack.c.l.b16 %v825
      %v922 = vunpack.c.l.b16 %v826
      %v923 = vunpack.c.l.b16 %v827
      %v924 = vunpack.c.l.b16 %v828
      %v925 = vunpack.c.l.b16 %v829
      %v926 = vunpack.c.l.b16 %v830
      %v927 = vunpack.c.l.b16 %v831
      %v928 = vunpack.c.l.b16 %v832
      %v929 = vunpack.c.l.b16 %v833
      %v930 = vunpack.c.l.b16 %v834
      %v931 = vunpack.c.l.b16 %v835
      %v932 = vunpack.c.l.b16 %v836
      %v933 = vunpack.c.l.b16 %v837
      %v934 = vunpack.c.l.b16 %v838
      %v935 = vunpack.c.l.b16 %v839
      %v936 = vunpack.c.l.b16 %v840
      %v937 = vunpack.c.l.b16 %v841
      %v938 = vunpack.c.l.b16 %v842
      %v939 = vunpack.c.l.b16 %v843
      %v940 = vunpack.c.l.b16 %v844
      %v941 = vunpack.c.l.b16 %v845
      %v942 = vunpack.c.l.b16 %v846
      %v943 = vunpack.c.l.b16 %v847
      %v944 = vunpack.c.l.b16 %v848
      %v945 = vunpack.c.l.b16 %v849
      %v946 = vunpack.c.l.b16 %v850
      %v947 = vunpack.c.l.b16 %v851
      %v948 = vunpack.c.l.b16 %v852
      %v949 = vunpack.c.l.b16 %v853
      %v950 = vunpack.c.l.b16 %v854
      %v951 = vunpack.c.l.b16 %v855
      %v952 = vunpack.c.l.b16 %v856
      %v953 = vunpack.c.l.b16 %v857
      %v954 = vunpack.c.l.b16 %v858
      %v955 = vunpack.c.l.b16 %v859
      %v956 = vunpack.c.l.b16 %v860
      %v957 = vunpack.c.l.b16 %v861
      %v958 = vunpack.c.l.b16 %v862
      %v959 = vunpack.c.l.b16 %v863
      %v960 = vunpack.c.l.b16 %v864
      %v961 = vunpack.c.l.b16 %v865
      %v962 = vunpack.c.l.b16 %v866
      %v963 = vunpack.c.l.b16 %v867
      %v964 = vunpack.c.l.b16 %v868
      %v965 = vunpack.c.l.b16 %v869
      %v966 = vunpack.c.l.b16 %v870
      %v967 = vpack.c.b16 %v920, %v919
      %v968 = vpack.c.b16 %v922, %v921
      %v969 = vpack.c.b16 %v924, %v923
      %v970 = vpack.c.b16 %v926, %v925
      %v971 = vpack.c.b16 %v928, %v927
      %v972 = vpack.c.b16 %v930, %v929
      %v973 = vpack.c.b16 %v932, %v931
      %v974 = vpack.c.b16 %v934, %v933
      %v975 = vpack.c.b16 %v936, %v935
      %v976 = vpack.c.b16 %v938, %v937
      %v977 = vpack.c.b16 %v940, %v939
      %v978 = vpack.c.b16 %v942, %v941
      %v979 = vpack.c.b16 %v944, %v943
      %v980 = vpack.c.b16 %v946, %v945
      %v981 = vpack.c.b16 %v948, %v947
      %v982 = vpack.c.b16 %v950, %v949
      %v983 = vpack.c.b16 %v952, %v951
      %v984 = vpack.c.b16 %v954, %v953
      %v985 = vpack.c.b16 %v956, %v955
      %v986 = vpack.c.b16 %v958, %v957
      %v987 = vpack.c.b16 %v960, %v959
      %v988 = vpack.c.b16 %v962, %v961
      %v989 = vpack.c.b16 %v964, %v963
      %v990 = vpack.c.b16 %v966, %v965
      %1015 = vmatprep.subr.bf16.mxu0 0
      %1016 = vmatpush1.bf16.msra.mxu0 %v967
      %1017 = vmatprep.subr.bf16.mxu0 0
      %1018 = vmatpush1.bf16.msra.mxu0 %v968
      %1019 = vmatprep.subr.bf16.mxu0 0
      %1020 = vmatpush1.bf16.msra.mxu0 %v969
      %1021 = vmatprep.subr.bf16.mxu0 0
      %1022 = vmatpush1.bf16.msra.mxu0 %v970
      %1023 = vmatprep.subr.bf16.mxu0 0
      %1024 = vmatpush1.bf16.msra.mxu0 %v971
      %1025 = vmatprep.subr.bf16.mxu0 0
      %1026 = vmatpush1.bf16.msra.mxu0 %v972
      %1027 = vmatprep.subr.bf16.mxu0 0
      %1028 = vmatpush1.bf16.msra.mxu0 %v973
      %1029 = vmatprep.subr.bf16.mxu0 0
      %1030 = vmatpush1.bf16.msra.mxu0 %v974
      %1031 = vmatprep.subr.bf16.mxu0 0
      %1032 = vmatpush1.bf16.msra.mxu0 %v975
      %1033 = vmatprep.subr.bf16.mxu0 0
      %1034 = vmatpush1.bf16.msra.mxu0 %v976
      %1035 = vmatprep.subr.bf16.mxu0 0
      %1036 = vmatpush1.bf16.msra.mxu0 %v977
      %1037 = vmatprep.subr.bf16.mxu0 0
      %1038 = vmatpush1.bf16.msra.mxu0 %v978
      %1039 = vmatprep.subr.bf16.mxu0 0
      %1040 = vmatpush1.bf16.msra.mxu0 %v979
      %1041 = vmatprep.subr.bf16.mxu0 0
      %1042 = vmatpush1.bf16.msra.mxu0 %v980
      %1043 = vmatprep.subr.bf16.mxu0 0
      %1044 = vmatpush1.bf16.msra.mxu0 %v981
      %1045 = vmatprep.subr.bf16.mxu0 0
      %1046 = vmatpush1.bf16.msra.mxu0 %v982
      %1047 = vmatprep.mubr.bf16.mxu0 %v775
      %1048 = vmatmul.mubr.bf16.gmra.mrb[0].mxu0 %v774
      %v1049 = vpop.f32.mrb[0].mxu0
      %v1050 = vadd.f32 0.0, %v1049
      %v1051 = vpop.f32.mrb[0].mxu0
      %v1052 = vpop.f32.mrb[0].mxu0
      %v1053 = vadd.f32 0.0, %v1052
      %v1054 = vpop.f32.mrb[0].mxu0
      %1055 = vmatprep.mubr.bf16.mxu0 %v778
      %1056 = vmatmul.mubr.bf16.gmra.mrb[0].mxu0 %v777
      %v1057 = vpop.f32.mrb[0].mxu0
      %v1058 = vadd.f32 0.0, %v1057
      %v1059 = vpop.f32.mrb[0].mxu0
      %v1060 = vpop.f32.mrb[0].mxu0
      %v1061 = vadd.f32 0.0, %v1060
      %v1062 = vpop.f32.mrb[0].mxu0
      %1063 = vmatprep.mubr.bf16.mxu0 %v781
      %1064 = vmatmul.mubr.bf16.gmra.mrb[0].mxu0 %v780
      %v1065 = vpop.f32.mrb[0].mxu0
      %v1066 = vadd.f32 0.0, %v1065
      %v1067 = vpop.f32.mrb[0].mxu0
      %v1068 = vpop.f32.mrb[0].mxu0
      %v1069 = vadd.f32 0.0, %v1068
      %v1070 = vpop.f32.mrb[0].mxu0
      %1071 = vmatprep.mubr.bf16.mxu0 %v784
      %1072 = vmatmul.mubr.bf16.gmra.mrb[0].mxu0 %v783
      %v1073 = vpop.f32.mrb[0].mxu0
      %v1074 = vadd.f32 0.0, %v1073
      %v1075 = vpop.f32.mrb[0].mxu0
      %v1076 = vpop.f32.mrb[0].mxu0
      %v1077 = vadd.f32 0.0, %v1076
      %v1078 = vpop.f32.mrb[0].mxu0
      %1079 = vmatprep.mubr.bf16.mxu0 %v787
      %1080 = vmatmul.mubr.bf16.gmra.mrb[0].mxu0 %v786
      %v1081 = vpop.f32.mrb[0].mxu0
      %v1082 = vadd.f32 0.0, %v1081
      %v1083 = vpop.f32.mrb[0].mxu0
      %v1084 = vpop.f32.mrb[0].mxu0
      %v1085 = vadd.f32 0.0, %v1084
      %v1086 = vpop.f32.mrb[0].mxu0
      %1087 = vmatprep.mubr.bf16.mxu0 %v790
      %1088 = vmatmul.mubr.bf16.gmra.mrb[0].mxu0 %v789
      %v1089 = vpop.f32.mrb[0].mxu0
      %v1090 = vadd.f32 0.0, %v1089
      %v1091 = vpop.f32.mrb[0].mxu0
      %v1092 = vpop.f32.mrb[0].mxu0
      %v1093 = vadd.f32 0.0, %v1092
      %v1094 = vpop.f32.mrb[0].mxu0
      %1095 = vmatprep.mubr.bf16.mxu0 %v793
      %1096 = vmatmul.mubr.bf16.gmra.mrb[0].mxu0 %v792
      %v1097 = vpop.f32.mrb[0].mxu0
      %v1098 = vadd.f32 0.0, %v1097
      %v1099 = vpop.f32.mrb[0].mxu0
      %v1100 = vpop.f32.mrb[0].mxu0
      %v1101 = vadd.f32 0.0, %v1100
      %v1102 = vpop.f32.mrb[0].mxu0
      %1103 = vmatprep.mubr.bf16.mxu0 %v796
      %1104 = vmatmul.mubr.bf16.gmra.mrb[0].mxu0 %v795
      %v1105 = vpop.f32.mrb[0].mxu0
      %v1106 = vadd.f32 0.0, %v1105
      %v1107 = vpop.f32.mrb[0].mxu0
      %v1108 = vpop.f32.mrb[0].mxu0
      %v1109 = vadd.f32 0.0, %v1108
      %v1110 = vpop.f32.mrb[0].mxu0
      %1111 = vmatprep.mubr.bf16.mxu0 %v799
      %1112 = vmatmul.mubr.bf16.gmra.mrb[0].mxu0 %v798
      %v1113 = vpop.f32.mrb[0].mxu0
      %v1114 = vadd.f32 0.0, %v1113
      %v1115 = vpop.f32.mrb[0].mxu0
      %v1116 = vpop.f32.mrb[0].mxu0
      %v1117 = vadd.f32 0.0, %v1116
      %v1118 = vpop.f32.mrb[0].mxu0
      %1119 = vmatprep.mubr.bf16.mxu0 %v802
      %1120 = vmatmul.mubr.bf16.gmra.mrb[0].mxu0 %v801
      %v1121 = vpop.f32.mrb[0].mxu0
      %v1122 = vadd.f32 0.0, %v1121
      %v1123 = vpop.f32.mrb[0].mxu0
      %v1124 = vpop.f32.mrb[0].mxu0
      %v1125 = vadd.f32 0.0, %v1124
      %v1126 = vpop.f32.mrb[0].mxu0
      %1127 = vmatprep.mubr.bf16.mxu0 %v805
      %1128 = vmatmul.mubr.bf16.gmra.mrb[0].mxu0 %v804
      %v1129 = vpop.f32.mrb[0].mxu0
      %v1130 = vadd.f32 0.0, %v1129
      %v1131 = vpop.f32.mrb[0].mxu0
      %v1132 = vpop.f32.mrb[0].mxu0
      %v1133 = vadd.f32 0.0, %v1132
      %v1134 = vpop.f32.mrb[0].mxu0
      %1135 = vmatprep.mubr.bf16.mxu0 %v808
      %1136 = vmatmul.mubr.bf16.gmra.mrb[0].mxu0 %v807
      %v1137 = vpop.f32.mrb[0].mxu0
      %v1138 = vadd.f32 0.0, %v1137
      %v1139 = vpop.f32.mrb[0].mxu0
      %v1140 = vpop.f32.mrb[0].mxu0
      %v1141 = vadd.f32 0.0, %v1140
      %v1142 = vpop.f32.mrb[0].mxu0
      %1143 = vmatprep.mubr.bf16.mxu0 %v811
      %1144 = vmatmul.mubr.bf16.gmra.mrb[0].mxu0 %v810
      %v1145 = vpop.f32.mrb[0].mxu0
      %v1146 = vadd.f32 0.0, %v1145
      %v1147 = vpop.f32.mrb[0].mxu0
      %v1148 = vpop.f32.mrb[0].mxu0
      %v1149 = vadd.f32 0.0, %v1148
      %v1150 = vpop.f32.mrb[0].mxu0
      %1151 = vmatprep.mubr.bf16.mxu0 %v814
      %1152 = vmatmul.mubr.bf16.gmra.mrb[0].mxu0 %v813
      %v1153 = vpop.f32.mrb[0].mxu0
      %v1154 = vadd.f32 0.0, %v1153
      %v1155 = vpop.f32.mrb[0].mxu0
      %v1156 = vpop.f32.mrb[0].mxu0
      %v1157 = vadd.f32 0.0, %v1156
      %v1158 = vpop.f32.mrb[0].mxu0
      %1159 = vmatprep.mubr.bf16.mxu0 %v817
      %1160 = vmatmul.mubr.bf16.gmra.mrb[0].mxu0 %v816
      %v1161 = vpop.f32.mrb[0].mxu0
      %v1162 = vadd.f32 0.0, %v1161
      %v1163 = vpop.f32.mrb[0].mxu0
      %v1164 = vpop.f32.mrb[0].mxu0
      %v1165 = vadd.f32 0.0, %v1164
      %v1166 = vpop.f32.mrb[0].mxu0
      %1167 = vmatprep.mubr.bf16.mxu0 %v820
      %1168 = vmatmul.mubr.bf16.gmra.mrb[0].mxu0 %v819
      %v1169 = vpop.f32.mrb[0].mxu0
      %v1170 = vadd.f32 0.0, %v1169
      %v1171 = vpop.f32.mrb[0].mxu0
      %v1172 = vpop.f32.mrb[0].mxu0
      %v1173 = vadd.f32 0.0, %v1172
      %v1174 = vpop.f32.mrb[0].mxu0
      %1175 = vdwg.mxu0
      %1176 = vmatprep.subr.bf16.mxu0 0
      %1177 = vmatpush1.bf16.msra.mxu0 %v983
      %1178 = vmatprep.subr.bf16.mxu0 0
      %1179 = vmatpush1.bf16.msra.mxu0 %v984
      %1180 = vmatprep.subr.bf16.mxu0 0
      %1181 = vmatpush1.bf16.msra.mxu0 %v985
      %1182 = vmatprep.subr.bf16.mxu0 0
      %1183 = vmatpush1.bf16.msra.mxu0 %v986
      %1184 = vmatprep.subr.bf16.mxu0 0
      %1185 = vmatpush1.bf16.msra.mxu0 %v987
      %1186 = vmatprep.subr.bf16.mxu0 0
      %1187 = vmatpush1.bf16.msra.mxu0 %v988
      %1188 = vmatprep.subr.bf16.mxu0 0
      %1189 = vmatpush1.bf16.msra.mxu0 %v989
      %1190 = vmatprep.subr.bf16.mxu0 0
      %1191 = vmatpush1.bf16.msra.mxu0 %v990
      %1192 = vmatprep.subr.bf16.mxu0 0
      %1193 = vmatpush1.bf16.msra.mxu0 0
      %1194 = vmatprep.subr.bf16.mxu0 0
      %1195 = vmatpush1.bf16.msra.mxu0 0
      %1196 = vmatprep.subr.bf16.mxu0 0
      %1197 = vmatpush1.bf16.msra.mxu0 0
      %1198 = vmatprep.subr.bf16.mxu0 0
      %1199 = vmatpush1.bf16.msra.mxu0 0
      %1200 = vmatprep.subr.bf16.mxu0 0
      %1201 = vmatpush1.bf16.msra.mxu0 0
      %1202 = vmatprep.subr.bf16.mxu0 0
      %1203 = vmatpush1.bf16.msra.mxu0 0
      %1204 = vmatprep.subr.bf16.mxu0 0
      %1205 = vmatpush1.bf16.msra.mxu0 0
      %1206 = vmatprep.subr.bf16.mxu0 0
      %1207 = vmatpush1.bf16.msra.mxu0 0
      %1208 = vmatprep.mubr.bf16.mxu0 0
      %1209 = vmatmul.mubr.bf16.gmra.mrb[0].mxu0 %v776
      %v1210 = vpop.f32.mrb[0].mxu0
      %v1211 = vadd.f32 %v1050, %v1210
      %v1212 = vpop.f32.mrb[0].mxu0
      %v1213 = vpop.f32.mrb[0].mxu0
      %v1214 = vadd.f32 %v1053, %v1213
      %v1215 = vpop.f32.mrb[0].mxu0
      %1216 = vmatprep.mubr.bf16.mxu0 0
      %1217 = vmatmul.mubr.bf16.gmra.mrb[0].mxu0 %v779
      %v1218 = vpop.f32.mrb[0].mxu0
      %v1219 = vadd.f32 %v1058, %v1218
      %v1220 = vpop.f32.mrb[0].mxu0
      %v1221 = vpop.f32.mrb[0].mxu0
      %v1222 = vadd.f32 %v1061, %v1221
      %v1223 = vpop.f32.mrb[0].mxu0
      %1224 = vmatprep.mubr.bf16.mxu0 0
      %1225 = vmatmul.mubr.bf16.gmra.mrb[0].mxu0 %v782
      %v1226 = vpop.f32.mrb[0].mxu0
      %v1227 = vadd.f32 %v1066, %v1226
      %v1228 = vpop.f32.mrb[0].mxu0
      %v1229 = vpop.f32.mrb[0].mxu0
      %v1230 = vadd.f32 %v1069, %v1229
      %v1231 = vpop.f32.mrb[0].mxu0
      %1232 = vmatprep.mubr.bf16.mxu0 0
      %1233 = vmatmul.mubr.bf16.gmra.mrb[0].mxu0 %v785
      %v1234 = vpop.f32.mrb[0].mxu0
      %v1235 = vadd.f32 %v1074, %v1234
      %v1236 = vpop.f32.mrb[0].mxu0
      %v1237 = vpop.f32.mrb[0].mxu0
      %v1238 = vadd.f32 %v1077, %v1237
      %v1239 = vpop.f32.mrb[0].mxu0
      %1240 = vmatprep.mubr.bf16.mxu0 0
      %1241 = vmatmul.mubr.bf16.gmra.mrb[0].mxu0 %v788
      %v1242 = vpop.f32.mrb[0].mxu0
      %v1243 = vadd.f32 %v1082, %v1242
      %v1244 = vpop.f32.mrb[0].mxu0
      %v1245 = vpop.f32.mrb[0].mxu0
      %v1246 = vadd.f32 %v1085, %v1245
      %v1247 = vpop.f32.mrb[0].mxu0
      %1248 = vmatprep.mubr.bf16.mxu0 0
      %1249 = vmatmul.mubr.bf16.gmra.mrb[0].mxu0 %v791
      %v1250 = vpop.f32.mrb[0].mxu0
      %v1251 = vadd.f32 %v1090, %v1250
      %v1252 = vpop.f32.mrb[0].mxu0
      %v1253 = vpop.f32.mrb[0].mxu0
      %v1254 = vadd.f32 %v1093, %v1253
      %v1255 = vpop.f32.mrb[0].mxu0
      %1256 = vmatprep.mubr.bf16.mxu0 0
      %1257 = vmatmul.mubr.bf16.gmra.mrb[0].mxu0 %v794
      %v1258 = vpop.f32.mrb[0].mxu0
      %v1259 = vadd.f32 %v1098, %v1258
      %v1260 = vpop.f32.mrb[0].mxu0
      %v1261 = vpop.f32.mrb[0].mxu0
      %v1262 = vadd.f32 %v1101, %v1261
      %v1263 = vpop.f32.mrb[0].mxu0
      %1264 = vmatprep.mubr.bf16.mxu0 0
      %1265 = vmatmul.mubr.bf16.gmra.mrb[0].mxu0 %v797
      %v1266 = vpop.f32.mrb[0].mxu0
      %v1267 = vadd.f32 %v1106, %v1266
      %v1268 = vpop.f32.mrb[0].mxu0
      %v1269 = vpop.f32.mrb[0].mxu0
      %v1270 = vadd.f32 %v1109, %v1269
      %v1271 = vpop.f32.mrb[0].mxu0
      %1272 = vmatprep.mubr.bf16.mxu0 0
      %1273 = vmatmul.mubr.bf16.gmra.mrb[0].mxu0 %v800
      %v1274 = vpop.f32.mrb[0].mxu0
      %v1275 = vadd.f32 %v1114, %v1274
      %v1276 = vpop.f32.mrb[0].mxu0
      %v1277 = vpop.f32.mrb[0].mxu0
      %v1278 = vadd.f32 %v1117, %v1277
      %v1279 = vpop.f32.mrb[0].mxu0
      %1280 = vmatprep.mubr.bf16.mxu0 0
      %1281 = vmatmul.mubr.bf16.gmra.mrb[0].mxu0 %v803
      %v1282 = vpop.f32.mrb[0].mxu0
      %v1283 = vadd.f32 %v1122, %v1282
      %v1284 = vpop.f32.mrb[0].mxu0
      %v1285 = vpop.f32.mrb[0].mxu0
      %v1286 = vadd.f32 %v1125, %v1285
      %v1287 = vpop.f32.mrb[0].mxu0
      %1288 = vmatprep.mubr.bf16.mxu0 0
      %1289 = vmatmul.mubr.bf16.gmra.mrb[0].mxu0 %v806
      %v1290 = vpop.f32.mrb[0].mxu0
      %v1291 = vadd.f32 %v1130, %v1290
      %v1292 = vpop.f32.mrb[0].mxu0
      %v1293 = vpop.f32.mrb[0].mxu0
      %v1294 = vadd.f32 %v1133, %v1293
      %v1295 = vpop.f32.mrb[0].mxu0
      %1296 = vmatprep.mubr.bf16.mxu0 0
      %1297 = vmatmul.mubr.bf16.gmra.mrb[0].mxu0 %v809
      %v1298 = vpop.f32.mrb[0].mxu0
      %v1299 = vadd.f32 %v1138, %v1298
      %v1300 = vpop.f32.mrb[0].mxu0
      %v1301 = vpop.f32.mrb[0].mxu0
      %v1302 = vadd.f32 %v1141, %v1301
      %v1303 = vpop.f32.mrb[0].mxu0
      %1304 = vmatprep.mubr.bf16.mxu0 0
      %1305 = vmatmul.mubr.bf16.gmra.mrb[0].mxu0 %v812
      %v1306 = vpop.f32.mrb[0].mxu0
      %v1307 = vadd.f32 %v1146, %v1306
      %v1308 = vpop.f32.mrb[0].mxu0
      %v1309 = vpop.f32.mrb[0].mxu0
      %v1310 = vadd.f32 %v1149, %v1309
      %v1311 = vpop.f32.mrb[0].mxu0
      %1312 = vmatprep.mubr.bf16.mxu0 0
      %1313 = vmatmul.mubr.bf16.gmra.mrb[0].mxu0 %v815
      %v1314 = vpop.f32.mrb[0].mxu0
      %v1315 = vadd.f32 %v1154, %v1314
      %v1316 = vpop.f32.mrb[0].mxu0
      %v1317 = vpop.f32.mrb[0].mxu0
      %v1318 = vadd.f32 %v1157, %v1317
      %v1319 = vpop.f32.mrb[0].mxu0
      %1320 = vmatprep.mubr.bf16.mxu0 0
      %1321 = vmatmul.mubr.bf16.gmra.mrb[0].mxu0 %v818
      %v1322 = vpop.f32.mrb[0].mxu0
      %v1323 = vadd.f32 %v1162, %v1322
      %v1324 = vpop.f32.mrb[0].mxu0
      %v1325 = vpop.f32.mrb[0].mxu0
      %v1326 = vadd.f32 %v1165, %v1325
      %v1327 = vpop.f32.mrb[0].mxu0
      %1328 = vmatprep.mubr.bf16.mxu0 0
      %1329 = vmatmul.mubr.bf16.gmra.mrb[0].mxu0 %v821
      %v1330 = vpop.f32.mrb[0].mxu0
      %v1331 = vadd.f32 %v1170, %v1330
      %v1332 = vpop.f32.mrb[0].mxu0
      %v1333 = vpop.f32.mrb[0].mxu0
      %v1334 = vadd.f32 %v1173, %v1333
      %v1335 = vpop.f32.mrb[0].mxu0
      %1336 = vdwg.mxu0
      %v1385 = vunpack.c.l.b16 %v726
      %v1386 = vunpack.c.l.b16 %v727
      %v1387 = vunpack.c.l.b16 %v728
      %v1388 = vunpack.c.l.b16 %v729
      %v1389 = vunpack.c.l.b16 %v730
      %v1390 = vunpack.c.l.b16 %v731
      %v1391 = vunpack.c.l.b16 %v732
      %v1392 = vunpack.c.l.b16 %v733
      %v1393 = vunpack.c.l.b16 %v734
      %v1394 = vunpack.c.l.b16 %v735
      %v1395 = vunpack.c.l.b16 %v736
      %v1396 = vunpack.c.l.b16 %v737
      %v1397 = vunpack.c.l.b16 %v738
      %v1398 = vunpack.c.l.b16 %v739
      %v1399 = vunpack.c.l.b16 %v740
      %v1400 = vunpack.c.l.b16 %v741
      %v1401 = vunpack.c.l.b16 %v742
      %v1402 = vunpack.c.l.b16 %v743
      %v1403 = vunpack.c.l.b16 %v744
      %v1404 = vunpack.c.l.b16 %v745
      %v1405 = vunpack.c.l.b16 %v746
      %v1406 = vunpack.c.l.b16 %v747
      %v1407 = vunpack.c.l.b16 %v748
      %v1408 = vunpack.c.l.b16 %v749
      %v1409 = vunpack.c.l.b16 %v750
      %v1410 = vunpack.c.l.b16 %v751
      %v1411 = vunpack.c.l.b16 %v752
      %v1412 = vunpack.c.l.b16 %v753
      %v1413 = vunpack.c.l.b16 %v754
      %v1414 = vunpack.c.l.b16 %v755
      %v1415 = vunpack.c.l.b16 %v756
      %v1416 = vunpack.c.l.b16 %v757
      %v1417 = vunpack.c.l.b16 %v758
      %v1418 = vunpack.c.l.b16 %v759
      %v1419 = vunpack.c.l.b16 %v760
      %v1420 = vunpack.c.l.b16 %v761
      %v1421 = vunpack.c.l.b16 %v762
      %v1422 = vunpack.c.l.b16 %v763
      %v1423 = vunpack.c.l.b16 %v764
      %v1424 = vunpack.c.l.b16 %v765
      %v1425 = vunpack.c.l.b16 %v766
      %v1426 = vunpack.c.l.b16 %v767
      %v1427 = vunpack.c.l.b16 %v768
      %v1428 = vunpack.c.l.b16 %v769
      %v1429 = vunpack.c.l.b16 %v770
      %v1430 = vunpack.c.l.b16 %v771
      %v1431 = vunpack.c.l.b16 %v772
      %v1432 = vunpack.c.l.b16 %v773
      %v1433 = vpack.c.b16 %v1386, %v1385
      %v1434 = vpack.c.b16 %v1388, %v1387
      %v1435 = vpack.c.b16 %v1390, %v1389
      %v1436 = vpack.c.b16 %v1392, %v1391
      %v1437 = vpack.c.b16 %v1394, %v1393
      %v1438 = vpack.c.b16 %v1396, %v1395
      %v1439 = vpack.c.b16 %v1398, %v1397
      %v1440 = vpack.c.b16 %v1400, %v1399
      %v1441 = vpack.c.b16 %v1402, %v1401
      %v1442 = vpack.c.b16 %v1404, %v1403
      %v1443 = vpack.c.b16 %v1406, %v1405
      %v1444 = vpack.c.b16 %v1408, %v1407
      %v1445 = vpack.c.b16 %v1410, %v1409
      %v1446 = vpack.c.b16 %v1412, %v1411
      %v1447 = vpack.c.b16 %v1414, %v1413
      %v1448 = vpack.c.b16 %v1416, %v1415
      %v1449 = vpack.c.b16 %v1418, %v1417
      %v1450 = vpack.c.b16 %v1420, %v1419
      %v1451 = vpack.c.b16 %v1422, %v1421
      %v1452 = vpack.c.b16 %v1424, %v1423
      %v1453 = vpack.c.b16 %v1426, %v1425
      %v1454 = vpack.c.b16 %v1428, %v1427
      %v1455 = vpack.c.b16 %v1430, %v1429
      %v1456 = vpack.c.b16 %v1432, %v1431
      %1481 = vmatprep.subr.bf16.mxu0 0
      %1482 = vmatpush1.bf16.msra.mxu0 %v1433
      %1483 = vmatprep.subr.bf16.mxu0 0
      %1484 = vmatpush1.bf16.msra.mxu0 %v1434
      %1485 = vmatprep.subr.bf16.mxu0 0
      %1486 = vmatpush1.bf16.msra.mxu0 %v1435
      %1487 = vmatprep.subr.bf16.mxu0 0
      %1488 = vmatpush1.bf16.msra.mxu0 %v1436
      %1489 = vmatprep.subr.bf16.mxu0 0
      %1490 = vmatpush1.bf16.msra.mxu0 %v1437
      %1491 = vmatprep.subr.bf16.mxu0 0
      %1492 = vmatpush1.bf16.msra.mxu0 %v1438
      %1493 = vmatprep.subr.bf16.mxu0 0
      %1494 = vmatpush1.bf16.msra.mxu0 %v1439
      %1495 = vmatprep.subr.bf16.mxu0 0
      %1496 = vmatpush1.bf16.msra.mxu0 %v1440
      %1497 = vmatprep.subr.bf16.mxu0 0
      %1498 = vmatpush1.bf16.msra.mxu0 %v1441
      %1499 = vmatprep.subr.bf16.mxu0 0
      %1500 = vmatpush1.bf16.msra.mxu0 %v1442
      %1501 = vmatprep.subr.bf16.mxu0 0
      %1502 = vmatpush1.bf16.msra.mxu0 %v1443
      %1503 = vmatprep.subr.bf16.mxu0 0
      %1504 = vmatpush1.bf16.msra.mxu0 %v1444
      %1505 = vmatprep.subr.bf16.mxu0 0
      %1506 = vmatpush1.bf16.msra.mxu0 %v1445
      %1507 = vmatprep.subr.bf16.mxu0 0
      %1508 = vmatpush1.bf16.msra.mxu0 %v1446
      %1509 = vmatprep.subr.bf16.mxu0 0
      %1510 = vmatpush1.bf16.msra.mxu0 %v1447
      %1511 = vmatprep.subr.bf16.mxu0 0
      %1512 = vmatpush1.bf16.msra.mxu0 %v1448
      %1513 = vmatprep.mubr.bf16.mxu0 %v679
      %1514 = vmatmul.mubr.bf16.gmra.mrb[0].mxu0 %v678
      %v1515 = vpop.f32.mrb[0].mxu0
      %v1516 = vadd.f32 %v1211, %v1515
      %v1517 = vpop.f32.mrb[0].mxu0
      %v1518 = vpop.f32.mrb[0].mxu0
      %v1519 = vadd.f32 %v1214, %v1518
      %v1520 = vpop.f32.mrb[0].mxu0
      %1521 = vmatprep.mubr.bf16.mxu0 %v682
      %1522 = vmatmul.mubr.bf16.gmra.mrb[0].mxu0 %v681
      %v1523 = vpop.f32.mrb[0].mxu0
      %v1524 = vadd.f32 %v1219, %v1523
      %v1525 = vpop.f32.mrb[0].mxu0
      %v1526 = vpop.f32.mrb[0].mxu0
      %v1527 = vadd.f32 %v1222, %v1526
      %v1528 = vpop.f32.mrb[0].mxu0
      %1529 = vmatprep.mubr.bf16.mxu0 %v685
      %1530 = vmatmul.mubr.bf16.gmra.mrb[0].mxu0 %v684
      %v1531 = vpop.f32.mrb[0].mxu0
      %v1532 = vadd.f32 %v1227, %v1531
      %v1533 = vpop.f32.mrb[0].mxu0
      %v1534 = vpop.f32.mrb[0].mxu0
      %v1535 = vadd.f32 %v1230, %v1534
      %v1536 = vpop.f32.mrb[0].mxu0
      %1537 = vmatprep.mubr.bf16.mxu0 %v688
      %1538 = vmatmul.mubr.bf16.gmra.mrb[0].mxu0 %v687
      %v1539 = vpop.f32.mrb[0].mxu0
      %v1540 = vadd.f32 %v1235, %v1539
      %v1541 = vpop.f32.mrb[0].mxu0
      %v1542 = vpop.f32.mrb[0].mxu0
      %v1543 = vadd.f32 %v1238, %v1542
      %v1544 = vpop.f32.mrb[0].mxu0
      %1545 = vmatprep.mubr.bf16.mxu0 %v691
      %1546 = vmatmul.mubr.bf16.gmra.mrb[0].mxu0 %v690
      %v1547 = vpop.f32.mrb[0].mxu0
      %v1548 = vadd.f32 %v1243, %v1547
      %v1549 = vpop.f32.mrb[0].mxu0
      %v1550 = vpop.f32.mrb[0].mxu0
      %v1551 = vadd.f32 %v1246, %v1550
      %v1552 = vpop.f32.mrb[0].mxu0
      %1553 = vmatprep.mubr.bf16.mxu0 %v694
      %1554 = vmatmul.mubr.bf16.gmra.mrb[0].mxu0 %v693
      %v1555 = vpop.f32.mrb[0].mxu0
      %v1556 = vadd.f32 %v1251, %v1555
      %v1557 = vpop.f32.mrb[0].mxu0
      %v1558 = vpop.f32.mrb[0].mxu0
      %v1559 = vadd.f32 %v1254, %v1558
      %v1560 = vpop.f32.mrb[0].mxu0
      %1561 = vmatprep.mubr.bf16.mxu0 %v697
      %1562 = vmatmul.mubr.bf16.gmra.mrb[0].mxu0 %v696
      %v1563 = vpop.f32.mrb[0].mxu0
      %v1564 = vadd.f32 %v1259, %v1563
      %v1565 = vpop.f32.mrb[0].mxu0
      %v1566 = vpop.f32.mrb[0].mxu0
      %v1567 = vadd.f32 %v1262, %v1566
      %v1568 = vpop.f32.mrb[0].mxu0
      %1569 = vmatprep.mubr.bf16.mxu0 %v700
      %1570 = vmatmul.mubr.bf16.gmra.mrb[0].mxu0 %v699
      %v1571 = vpop.f32.mrb[0].mxu0
      %v1572 = vadd.f32 %v1267, %v1571
      %v1573 = vpop.f32.mrb[0].mxu0
      %v1574 = vpop.f32.mrb[0].mxu0
      %v1575 = vadd.f32 %v1270, %v1574
      %v1576 = vpop.f32.mrb[0].mxu0
      %1577 = vmatprep.mubr.bf16.mxu0 %v703
      %1578 = vmatmul.mubr.bf16.gmra.mrb[0].mxu0 %v702
      %v1579 = vpop.f32.mrb[0].mxu0
      %v1580 = vadd.f32 %v1275, %v1579
      %v1581 = vpop.f32.mrb[0].mxu0
      %v1582 = vpop.f32.mrb[0].mxu0
      %v1583 = vadd.f32 %v1278, %v1582
      %v1584 = vpop.f32.mrb[0].mxu0
      %1585 = vmatprep.mubr.bf16.mxu0 %v706
      %1586 = vmatmul.mubr.bf16.gmra.mrb[0].mxu0 %v705
      %v1587 = vpop.f32.mrb[0].mxu0
      %v1588 = vadd.f32 %v1283, %v1587
      %v1589 = vpop.f32.mrb[0].mxu0
      %v1590 = vpop.f32.mrb[0].mxu0
      %v1591 = vadd.f32 %v1286, %v1590
      %v1592 = vpop.f32.mrb[0].mxu0
      %1593 = vmatprep.mubr.bf16.mxu0 %v709
      %1594 = vmatmul.mubr.bf16.gmra.mrb[0].mxu0 %v708
      %v1595 = vpop.f32.mrb[0].mxu0
      %v1596 = vadd.f32 %v1291, %v1595
      %v1597 = vpop.f32.mrb[0].mxu0
      %v1598 = vpop.f32.mrb[0].mxu0
      %v1599 = vadd.f32 %v1294, %v1598
      %v1600 = vpop.f32.mrb[0].mxu0
      %1601 = vmatprep.mubr.bf16.mxu0 %v712
      %1602 = vmatmul.mubr.bf16.gmra.mrb[0].mxu0 %v711
      %v1603 = vpop.f32.mrb[0].mxu0
      %v1604 = vadd.f32 %v1299, %v1603
      %v1605 = vpop.f32.mrb[0].mxu0
      %v1606 = vpop.f32.mrb[0].mxu0
      %v1607 = vadd.f32 %v1302, %v1606
      %v1608 = vpop.f32.mrb[0].mxu0
      %1609 = vmatprep.mubr.bf16.mxu0 %v715
      %1610 = vmatmul.mubr.bf16.gmra.mrb[0].mxu0 %v714
      %v1611 = vpop.f32.mrb[0].mxu0
      %v1612 = vadd.f32 %v1307, %v1611
      %v1613 = vpop.f32.mrb[0].mxu0
      %v1614 = vpop.f32.mrb[0].mxu0
      %v1615 = vadd.f32 %v1310, %v1614
      %v1616 = vpop.f32.mrb[0].mxu0
      %1617 = vmatprep.mubr.bf16.mxu0 %v718
      %1618 = vmatmul.mubr.bf16.gmra.mrb[0].mxu0 %v717
      %v1619 = vpop.f32.mrb[0].mxu0
      %v1620 = vadd.f32 %v1315, %v1619
      %v1621 = vpop.f32.mrb[0].mxu0
      %v1622 = vpop.f32.mrb[0].mxu0
      %v1623 = vadd.f32 %v1318, %v1622
      %v1624 = vpop.f32.mrb[0].mxu0
      %1625 = vmatprep.mubr.bf16.mxu0 %v721
      %1626 = vmatmul.mubr.bf16.gmra.mrb[0].mxu0 %v720
      %v1627 = vpop.f32.mrb[0].mxu0
      %v1628 = vadd.f32 %v1323, %v1627
      %v1629 = vpop.f32.mrb[0].mxu0
      %v1630 = vpop.f32.mrb[0].mxu0
      %v1631 = vadd.f32 %v1326, %v1630
      %v1632 = vpop.f32.mrb[0].mxu0
      %1633 = vmatprep.mubr.bf16.mxu0 %v724
      %1634 = vmatmul.mubr.bf16.gmra.mrb[0].mxu0 %v723
      %v1635 = vpop.f32.mrb[0].mxu0
      %v1636 = vadd.f32 %v1331, %v1635
      %v1637 = vpop.f32.mrb[0].mxu0
      %v1638 = vpop.f32.mrb[0].mxu0
      %v1639 = vadd.f32 %v1334, %v1638
      %v1640 = vpop.f32.mrb[0].mxu0
      %1641 = vdwg.mxu0
      %1642 = vmatprep.subr.bf16.mxu0 0
      %1643 = vmatpush1.bf16.msra.mxu0 %v1449
      %1644 = vmatprep.subr.bf16.mxu0 0
      %1645 = vmatpush1.bf16.msra.mxu0 %v1450
      %1646 = vmatprep.subr.bf16.mxu0 0
      %1647 = vmatpush1.bf16.msra.mxu0 %v1451
      %1648 = vmatprep.subr.bf16.mxu0 0
      %1649 = vmatpush1.bf16.msra.mxu0 %v1452
      %1650 = vmatprep.subr.bf16.mxu0 0
      %1651 = vmatpush1.bf16.msra.mxu0 %v1453
      %1652 = vmatprep.subr.bf16.mxu0 0
      %1653 = vmatpush1.bf16.msra.mxu0 %v1454
      %1654 = vmatprep.subr.bf16.mxu0 0
      %1655 = vmatpush1.bf16.msra.mxu0 %v1455
      %1656 = vmatprep.subr.bf16.mxu0 0
      %1657 = vmatpush1.bf16.msra.mxu0 %v1456
      %1658 = vmatprep.subr.bf16.mxu0 0
      %1659 = vmatpush1.bf16.msra.mxu0 0
      %1660 = vmatprep.subr.bf16.mxu0 0
      %1661 = vmatpush1.bf16.msra.mxu0 0
      %1662 = vmatprep.subr.bf16.mxu0 0
      %1663 = vmatpush1.bf16.msra.mxu0 0
      %1664 = vmatprep.subr.bf16.mxu0 0
      %1665 = vmatpush1.bf16.msra.mxu0 0
      %1666 = vmatprep.subr.bf16.mxu0 0
      %1667 = vmatpush1.bf16.msra.mxu0 0
      %1668 = vmatprep.subr.bf16.mxu0 0
      %1669 = vmatpush1.bf16.msra.mxu0 0
      %1670 = vmatprep.subr.bf16.mxu0 0
      %1671 = vmatpush1.bf16.msra.mxu0 0
      %1672 = vmatprep.subr.bf16.mxu0 0
      %1673 = vmatpush1.bf16.msra.mxu0 0
      %1674 = vmatprep.mubr.bf16.mxu0 0
      %1675 = vmatmul.mubr.bf16.gmra.mrb[0].mxu0 %v680
      %v1676 = vpop.f32.mrb[0].mxu0
      %v1677 = vadd.f32 %v1516, %v1676
      %v1678 = vpop.f32.mrb[0].mxu0
      %v1679 = vpop.f32.mrb[0].mxu0
      %v1680 = vadd.f32 %v1519, %v1679
      %v1681 = vpop.f32.mrb[0].mxu0
      %1682 = vmatprep.mubr.bf16.mxu0 0
      %1683 = vmatmul.mubr.bf16.gmra.mrb[0].mxu0 %v683
      %v1684 = vpop.f32.mrb[0].mxu0
      %v1685 = vadd.f32 %v1524, %v1684
      %v1686 = vpop.f32.mrb[0].mxu0
      %v1687 = vpop.f32.mrb[0].mxu0
      %v1688 = vadd.f32 %v1527, %v1687
      %v1689 = vpop.f32.mrb[0].mxu0
      %1690 = vmatprep.mubr.bf16.mxu0 0
      %1691 = vmatmul.mubr.bf16.gmra.mrb[0].mxu0 %v686
      %v1692 = vpop.f32.mrb[0].mxu0
      %v1693 = vadd.f32 %v1532, %v1692
      %v1694 = vpop.f32.mrb[0].mxu0
      %v1695 = vpop.f32.mrb[0].mxu0
      %v1696 = vadd.f32 %v1535, %v1695
      %v1697 = vpop.f32.mrb[0].mxu0
      %1698 = vmatprep.mubr.bf16.mxu0 0
      %1699 = vmatmul.mubr.bf16.gmra.mrb[0].mxu0 %v689
      %v1700 = vpop.f32.mrb[0].mxu0
      %v1701 = vadd.f32 %v1540, %v1700
      %v1702 = vpop.f32.mrb[0].mxu0
      %v1703 = vpop.f32.mrb[0].mxu0
      %v1704 = vadd.f32 %v1543, %v1703
      %v1705 = vpop.f32.mrb[0].mxu0
      %1706 = vmatprep.mubr.bf16.mxu0 0
      %1707 = vmatmul.mubr.bf16.gmra.mrb[0].mxu0 %v692
      %v1708 = vpop.f32.mrb[0].mxu0
      %v1709 = vadd.f32 %v1548, %v1708
      %v1710 = vpop.f32.mrb[0].mxu0
      %v1711 = vpop.f32.mrb[0].mxu0
      %v1712 = vadd.f32 %v1551, %v1711
      %v1713 = vpop.f32.mrb[0].mxu0
      %1714 = vmatprep.mubr.bf16.mxu0 0
      %1715 = vmatmul.mubr.bf16.gmra.mrb[0].mxu0 %v695
      %v1716 = vpop.f32.mrb[0].mxu0
      %v1717 = vadd.f32 %v1556, %v1716
      %v1718 = vpop.f32.mrb[0].mxu0
      %v1719 = vpop.f32.mrb[0].mxu0
      %v1720 = vadd.f32 %v1559, %v1719
      %v1721 = vpop.f32.mrb[0].mxu0
      %1722 = vmatprep.mubr.bf16.mxu0 0
      %1723 = vmatmul.mubr.bf16.gmra.mrb[0].mxu0 %v698
      %v1724 = vpop.f32.mrb[0].mxu0
      %v1725 = vadd.f32 %v1564, %v1724
      %v1726 = vpop.f32.mrb[0].mxu0
      %v1727 = vpop.f32.mrb[0].mxu0
      %v1728 = vadd.f32 %v1567, %v1727
      %v1729 = vpop.f32.mrb[0].mxu0
      %1730 = vmatprep.mubr.bf16.mxu0 0
      %1731 = vmatmul.mubr.bf16.gmra.mrb[0].mxu0 %v701
      %v1732 = vpop.f32.mrb[0].mxu0
      %v1733 = vadd.f32 %v1572, %v1732
      %v1734 = vpop.f32.mrb[0].mxu0
      %v1735 = vpop.f32.mrb[0].mxu0
      %v1736 = vadd.f32 %v1575, %v1735
      %v1737 = vpop.f32.mrb[0].mxu0
      %1738 = vmatprep.mubr.bf16.mxu0 0
      %1739 = vmatmul.mubr.bf16.gmra.mrb[0].mxu0 %v704
      %v1740 = vpop.f32.mrb[0].mxu0
      %v1741 = vadd.f32 %v1580, %v1740
      %v1742 = vpop.f32.mrb[0].mxu0
      %v1743 = vpop.f32.mrb[0].mxu0
      %v1744 = vadd.f32 %v1583, %v1743
      %v1745 = vpop.f32.mrb[0].mxu0
      %1746 = vmatprep.mubr.bf16.mxu0 0
      %1747 = vmatmul.mubr.bf16.gmra.mrb[0].mxu0 %v707
      %v1748 = vpop.f32.mrb[0].mxu0
      %v1749 = vadd.f32 %v1588, %v1748
      %v1750 = vpop.f32.mrb[0].mxu0
      %v1751 = vpop.f32.mrb[0].mxu0
      %v1752 = vadd.f32 %v1591, %v1751
      %v1753 = vpop.f32.mrb[0].mxu0
      %1754 = vmatprep.mubr.bf16.mxu0 0
      %1755 = vmatmul.mubr.bf16.gmra.mrb[0].mxu0 %v710
      %v1756 = vpop.f32.mrb[0].mxu0
      %v1757 = vadd.f32 %v1596, %v1756
      %v1758 = vpop.f32.mrb[0].mxu0
      %v1759 = vpop.f32.mrb[0].mxu0
      %v1760 = vadd.f32 %v1599, %v1759
      %v1761 = vpop.f32.mrb[0].mxu0
      %1762 = vmatprep.mubr.bf16.mxu0 0
      %1763 = vmatmul.mubr.bf16.gmra.mrb[0].mxu0 %v713
      %v1764 = vpop.f32.mrb[0].mxu0
      %v1765 = vadd.f32 %v1604, %v1764
      %v1766 = vpop.f32.mrb[0].mxu0
      %v1767 = vpop.f32.mrb[0].mxu0
      %v1768 = vadd.f32 %v1607, %v1767
      %v1769 = vpop.f32.mrb[0].mxu0
      %1770 = vmatprep.mubr.bf16.mxu0 0
      %1771 = vmatmul.mubr.bf16.gmra.mrb[0].mxu0 %v716
      %v1772 = vpop.f32.mrb[0].mxu0
      %v1773 = vadd.f32 %v1612, %v1772
      %v1774 = vpop.f32.mrb[0].mxu0
      %v1775 = vpop.f32.mrb[0].mxu0
      %v1776 = vadd.f32 %v1615, %v1775
      %v1777 = vpop.f32.mrb[0].mxu0
      %1778 = vmatprep.mubr.bf16.mxu0 0
      %1779 = vmatmul.mubr.bf16.gmra.mrb[0].mxu0 %v719
      %v1780 = vpop.f32.mrb[0].mxu0
      %v1781 = vadd.f32 %v1620, %v1780
      %v1782 = vpop.f32.mrb[0].mxu0
      %v1783 = vpop.f32.mrb[0].mxu0
      %v1784 = vadd.f32 %v1623, %v1783
      %v1785 = vpop.f32.mrb[0].mxu0
      %1786 = vmatprep.mubr.bf16.mxu0 0
      %1787 = vmatmul.mubr.bf16.gmra.mrb[0].mxu0 %v722
      %v1788 = vpop.f32.mrb[0].mxu0
      %v1789 = vadd.f32 %v1628, %v1788
      %v1790 = vpop.f32.mrb[0].mxu0
      %v1791 = vpop.f32.mrb[0].mxu0
      %v1792 = vadd.f32 %v1631, %v1791
      %v1793 = vpop.f32.mrb[0].mxu0
      %1794 = vmatprep.mubr.bf16.mxu0 0
      %1795 = vmatmul.mubr.bf16.gmra.mrb[0].mxu0 %v725
      %v1796 = vpop.f32.mrb[0].mxu0
      %v1797 = vadd.f32 %v1636, %v1796
      %v1798 = vpop.f32.mrb[0].mxu0
      %v1799 = vpop.f32.mrb[0].mxu0
      %v1800 = vadd.f32 %v1639, %v1799
      %v1801 = vpop.f32.mrb[0].mxu0
      %1802 = vdwg.mxu0
      %s1803 = scalar_lea.vmem [#allocation2], 48
      %v1804 = vld [vmem:[%s1803] sm:$0xff]
      %v1805 = vld [vmem:[%s1803 + $0x8] sm:$0xff]
      %v1806 = vld [vmem:[%s1803 + $0x10] sm:$0xff]
      %v1807 = vld [vmem:[%s1803 + $0x18] sm:$0xff]
      %v1808 = vld [vmem:[%s1803 + $0x20] sm:$0xff]
      %v1809 = vld [vmem:[%s1803 + $0x28] sm:$0xff]
      %v1810 = vld [vmem:[%s1803 + $0x30] sm:$0xff]
      %v1811 = vld [vmem:[%s1803 + $0x38] sm:$0xff]
      %v1812 = vld [vmem:[%s1803 + $0x40] sm:$0xff]
      %v1813 = vld [vmem:[%s1803 + $0x48] sm:$0xff]
      %v1814 = vld [vmem:[%s1803 + $0x50] sm:$0xff]
      %v1815 = vld [vmem:[%s1803 + $0x58] sm:$0xff]
      %v1816 = vld [vmem:[%s1803 + $0x60] sm:$0xff]
      %v1817 = vld [vmem:[%s1803 + $0x68] sm:$0xff]
      %v1818 = vld [vmem:[%s1803 + $0x70] sm:$0xff]
      %v1819 = vld [vmem:[%s1803 + $0x78] sm:$0xff]
      %v1820 = vld [vmem:[%s1803 + $0x80] sm:$0xff]
      %v1821 = vld [vmem:[%s1803 + $0x88] sm:$0xff]
      %v1822 = vld [vmem:[%s1803 + $0x90] sm:$0xff]
      %v1823 = vld [vmem:[%s1803 + $0x98] sm:$0xff]
      %v1824 = vld [vmem:[%s1803 + $0xa0] sm:$0xff]
      %v1825 = vld [vmem:[%s1803 + $0xa8] sm:$0xff]
      %v1826 = vld [vmem:[%s1803 + $0xb0] sm:$0xff]
      %v1827 = vld [vmem:[%s1803 + $0xb8] sm:$0xff]
      %v1828 = vld [vmem:[%s1803 + $0xc0] sm:$0xff]
      %v1829 = vld [vmem:[%s1803 + $0xc8] sm:$0xff]
      %v1830 = vld [vmem:[%s1803 + $0xd0] sm:$0xff]
      %v1831 = vld [vmem:[%s1803 + $0xd8] sm:$0xff]
      %v1832 = vld [vmem:[%s1803 + $0xe0] sm:$0xff]
      %v1833 = vld [vmem:[%s1803 + $0xe8] sm:$0xff]
      %v1834 = vld [vmem:[%s1803 + $0xf0] sm:$0xff]
      %v1835 = vld [vmem:[%s1803 + $0xf8] sm:$0xff]
      %v1836 = vld [vmem:[%s1803 + $0x100] sm:$0xff]
      %v1837 = vld [vmem:[%s1803 + $0x108] sm:$0xff]
      %v1838 = vld [vmem:[%s1803 + $0x110] sm:$0xff]
      %v1839 = vld [vmem:[%s1803 + $0x118] sm:$0xff]
      %v1840 = vld [vmem:[%s1803 + $0x120] sm:$0xff]
      %v1841 = vld [vmem:[%s1803 + $0x128] sm:$0xff]
      %v1842 = vld [vmem:[%s1803 + $0x130] sm:$0xff]
      %v1843 = vld [vmem:[%s1803 + $0x138] sm:$0xff]
      %v1844 = vld [vmem:[%s1803 + $0x140] sm:$0xff]
      %v1845 = vld [vmem:[%s1803 + $0x148] sm:$0xff]
      %v1846 = vld [vmem:[%s1803 + $0x150] sm:$0xff]
      %v1847 = vld [vmem:[%s1803 + $0x158] sm:$0xff]
      %v1848 = vld [vmem:[%s1803 + $0x160] sm:$0xff]
      %v1849 = vld [vmem:[%s1803 + $0x168] sm:$0xff]
      %v1850 = vld [vmem:[%s1803 + $0x170] sm:$0xff]
      %v1851 = vld [vmem:[%s1803 + $0x178] sm:$0xff]
      %s1852 = scalar_lea.vmem %s1, 384
      %v1853 = vld [vmem:[%s1852] sm:$0xf]
      %v1854 = vld [vmem:[%s1852 + $0x4] sm:$0xf]
      %v1855 = vld [vmem:[%s1852 + $0x8] sm:$0xf]
      %v1856 = vld [vmem:[%s1852 + $0xc] sm:$0xf]
      %v1857 = vld [vmem:[%s1852 + $0x10] sm:$0xf]
      %v1858 = vld [vmem:[%s1852 + $0x14] sm:$0xf]
      %v1859 = vld [vmem:[%s1852 + $0x18] sm:$0xf]
      %v1860 = vld [vmem:[%s1852 + $0x1c] sm:$0xf]
      %v1861 = vld [vmem:[%s1852 + $0x20] sm:$0xf]
      %v1862 = vld [vmem:[%s1852 + $0x24] sm:$0xf]
      %v1863 = vld [vmem:[%s1852 + $0x28] sm:$0xf]
      %v1864 = vld [vmem:[%s1852 + $0x2c] sm:$0xf]
      %v1865 = vld [vmem:[%s1852 + $0x30] sm:$0xf]
      %v1866 = vld [vmem:[%s1852 + $0x34] sm:$0xf]
      %v1867 = vld [vmem:[%s1852 + $0x38] sm:$0xf]
      %v1868 = vld [vmem:[%s1852 + $0x3c] sm:$0xf]
      %v1869 = vld [vmem:[%s1852 + $0x40] sm:$0xf]
      %v1870 = vld [vmem:[%s1852 + $0x44] sm:$0xf]
      %v1871 = vld [vmem:[%s1852 + $0x48] sm:$0xf]
      %v1872 = vld [vmem:[%s1852 + $0x4c] sm:$0xf]
      %v1873 = vld [vmem:[%s1852 + $0x50] sm:$0xf]
      %v1874 = vld [vmem:[%s1852 + $0x54] sm:$0xf]
      %v1875 = vld [vmem:[%s1852 + $0x58] sm:$0xf]
      %v1876 = vld [vmem:[%s1852 + $0x5c] sm:$0xf]
      %v1877 = vld [vmem:[%s1852 + $0x60] sm:$0xf]
      %v1878 = vld [vmem:[%s1852 + $0x64] sm:$0xf]
      %v1879 = vld [vmem:[%s1852 + $0x68] sm:$0xf]
      %v1880 = vld [vmem:[%s1852 + $0x6c] sm:$0xf]
      %v1881 = vld [vmem:[%s1852 + $0x70] sm:$0xf]
      %v1882 = vld [vmem:[%s1852 + $0x74] sm:$0xf]
      %v1883 = vld [vmem:[%s1852 + $0x78] sm:$0xf]
      %v1884 = vld [vmem:[%s1852 + $0x7c] sm:$0xf]
      %v1885 = vld [vmem:[%s1852 + $0x80] sm:$0xf]
      %v1886 = vld [vmem:[%s1852 + $0x84] sm:$0xf]
      %v1887 = vld [vmem:[%s1852 + $0x88] sm:$0xf]
      %v1888 = vld [vmem:[%s1852 + $0x8c] sm:$0xf]
      %v1889 = vld [vmem:[%s1852 + $0x90] sm:$0xf]
      %v1890 = vld [vmem:[%s1852 + $0x94] sm:$0xf]
      %v1891 = vld [vmem:[%s1852 + $0x98] sm:$0xf]
      %v1892 = vld [vmem:[%s1852 + $0x9c] sm:$0xf]
      %v1893 = vld [vmem:[%s1852 + $0xa0] sm:$0xf]
      %v1894 = vld [vmem:[%s1852 + $0xa4] sm:$0xf]
      %v1895 = vld [vmem:[%s1852 + $0xa8] sm:$0xf]
      %v1896 = vld [vmem:[%s1852 + $0xac] sm:$0xf]
      %v1897 = vld [vmem:[%s1852 + $0xb0] sm:$0xf]
      %v1898 = vld [vmem:[%s1852 + $0xb4] sm:$0xf]
      %v1899 = vld [vmem:[%s1852 + $0xb8] sm:$0xf]
      %v1900 = vld [vmem:[%s1852 + $0xbc] sm:$0xf]
      %v1949 = vunpack.c.l.b16 %v1853
      %v1950 = vunpack.c.l.b16 %v1854
      %v1951 = vunpack.c.l.b16 %v1855
      %v1952 = vunpack.c.l.b16 %v1856
      %v1953 = vunpack.c.l.b16 %v1857
      %v1954 = vunpack.c.l.b16 %v1858
      %v1955 = vunpack.c.l.b16 %v1859
      %v1956 = vunpack.c.l.b16 %v1860
      %v1957 = vunpack.c.l.b16 %v1861
      %v1958 = vunpack.c.l.b16 %v1862
      %v1959 = vunpack.c.l.b16 %v1863
      %v1960 = vunpack.c.l.b16 %v1864
      %v1961 = vunpack.c.l.b16 %v1865
      %v1962 = vunpack.c.l.b16 %v1866
      %v1963 = vunpack.c.l.b16 %v1867
      %v1964 = vunpack.c.l.b16 %v1868
      %v1965 = vunpack.c.l.b16 %v1869
      %v1966 = vunpack.c.l.b16 %v1870
      %v1967 = vunpack.c.l.b16 %v1871
      %v1968 = vunpack.c.l.b16 %v1872
      %v1969 = vunpack.c.l.b16 %v1873
      %v1970 = vunpack.c.l.b16 %v1874
      %v1971 = vunpack.c.l.b16 %v1875
      %v1972 = vunpack.c.l.b16 %v1876
      %v1973 = vunpack.c.l.b16 %v1877
      %v1974 = vunpack.c.l.b16 %v1878
      %v1975 = vunpack.c.l.b16 %v1879
      %v1976 = vunpack.c.l.b16 %v1880
      %v1977 = vunpack.c.l.b16 %v1881
      %v1978 = vunpack.c.l.b16 %v1882
      %v1979 = vunpack.c.l.b16 %v1883
      %v1980 = vunpack.c.l.b16 %v1884
      %v1981 = vunpack.c.l.b16 %v1885
      %v1982 = vunpack.c.l.b16 %v1886
      %v1983 = vunpack.c.l.b16 %v1887
      %v1984 = vunpack.c.l.b16 %v1888
      %v1985 = vunpack.c.l.b16 %v1889
      %v1986 = vunpack.c.l.b16 %v1890
      %v1987 = vunpack.c.l.b16 %v1891
      %v1988 = vunpack.c.l.b16 %v1892
      %v1989 = vunpack.c.l.b16 %v1893
      %v1990 = vunpack.c.l.b16 %v1894
      %v1991 = vunpack.c.l.b16 %v1895
      %v1992 = vunpack.c.l.b16 %v1896
      %v1993 = vunpack.c.l.b16 %v1897
      %v1994 = vunpack.c.l.b16 %v1898
      %v1995 = vunpack.c.l.b16 %v1899
      %v1996 = vunpack.c.l.b16 %v1900
      %v1997 = vpack.c.b16 %v1950, %v1949
      %v1998 = vpack.c.b16 %v1952, %v1951
      %v1999 = vpack.c.b16 %v1954, %v1953
      %v2000 = vpack.c.b16 %v1956, %v1955
      %v2001 = vpack.c.b16 %v1958, %v1957
      %v2002 = vpack.c.b16 %v1960, %v1959
      %v2003 = vpack.c.b16 %v1962, %v1961
      %v2004 = vpack.c.b16 %v1964, %v1963
      %v2005 = vpack.c.b16 %v1966, %v1965
      %v2006 = vpack.c.b16 %v1968, %v1967
      %v2007 = vpack.c.b16 %v1970, %v1969
      %v2008 = vpack.c.b16 %v1972, %v1971
      %v2009 = vpack.c.b16 %v1974, %v1973
      %v2010 = vpack.c.b16 %v1976, %v1975
      %v2011 = vpack.c.b16 %v1978, %v1977
      %v2012 = vpack.c.b16 %v1980, %v1979
      %v2013 = vpack.c.b16 %v1982, %v1981
      %v2014 = vpack.c.b16 %v1984, %v1983
      %v2015 = vpack.c.b16 %v1986, %v1985
      %v2016 = vpack.c.b16 %v1988, %v1987
      %v2017 = vpack.c.b16 %v1990, %v1989
      %v2018 = vpack.c.b16 %v1992, %v1991
      %v2019 = vpack.c.b16 %v1994, %v1993
      %v2020 = vpack.c.b16 %v1996, %v1995
      %2045 = vmatprep.subr.bf16.mxu0 0
      %2046 = vmatpush1.bf16.msra.mxu0 %v1997
      %2047 = vmatprep.subr.bf16.mxu0 0
      %2048 = vmatpush1.bf16.msra.mxu0 %v1998
      %2049 = vmatprep.subr.bf16.mxu0 0
      %2050 = vmatpush1.bf16.msra.mxu0 %v1999
      %2051 = vmatprep.subr.bf16.mxu0 0
      %2052 = vmatpush1.bf16.msra.mxu0 %v2000
      %2053 = vmatprep.subr.bf16.mxu0 0
      %2054 = vmatpush1.bf16.msra.mxu0 %v2001
      %2055 = vmatprep.subr.bf16.mxu0 0
      %2056 = vmatpush1.bf16.msra.mxu0 %v2002
      %2057 = vmatprep.subr.bf16.mxu0 0
      %2058 = vmatpush1.bf16.msra.mxu0 %v2003
      %2059 = vmatprep.subr.bf16.mxu0 0
      %2060 = vmatpush1.bf16.msra.mxu0 %v2004
      %2061 = vmatprep.subr.bf16.mxu0 0
      %2062 = vmatpush1.bf16.msra.mxu0 %v2005
      %2063 = vmatprep.subr.bf16.mxu0 0
      %2064 = vmatpush1.bf16.msra.mxu0 %v2006
      %2065 = vmatprep.subr.bf16.mxu0 0
      %2066 = vmatpush1.bf16.msra.mxu0 %v2007
      %2067 = vmatprep.subr.bf16.mxu0 0
      %2068 = vmatpush1.bf16.msra.mxu0 %v2008
      %2069 = vmatprep.subr.bf16.mxu0 0
      %2070 = vmatpush1.bf16.msra.mxu0 %v2009
      %2071 = vmatprep.subr.bf16.mxu0 0
      %2072 = vmatpush1.bf16.msra.mxu0 %v2010
      %2073 = vmatprep.subr.bf16.mxu0 0
      %2074 = vmatpush1.bf16.msra.mxu0 %v2011
      %2075 = vmatprep.subr.bf16.mxu0 0
      %2076 = vmatpush1.bf16.msra.mxu0 %v2012
      %2077 = vmatprep.mubr.bf16.mxu0 %v1805
      %2078 = vmatmul.mubr.bf16.gmra.mrb[0].mxu0 %v1804
      %v2079 = vpop.f32.mrb[0].mxu0
      %v2080 = vadd.f32 0.0, %v2079
      %v2081 = vpop.f32.mrb[0].mxu0
      %v2082 = vpop.f32.mrb[0].mxu0
      %v2083 = vadd.f32 0.0, %v2082
      %v2084 = vpop.f32.mrb[0].mxu0
      %2085 = vmatprep.mubr.bf16.mxu0 %v1808
      %2086 = vmatmul.mubr.bf16.gmra.mrb[0].mxu0 %v1807
      %v2087 = vpop.f32.mrb[0].mxu0
      %v2088 = vadd.f32 0.0, %v2087
      %v2089 = vpop.f32.mrb[0].mxu0
      %v2090 = vpop.f32.mrb[0].mxu0
      %v2091 = vadd.f32 0.0, %v2090
      %v2092 = vpop.f32.mrb[0].mxu0
      %2093 = vmatprep.mubr.bf16.mxu0 %v1811
      %2094 = vmatmul.mubr.bf16.gmra.mrb[0].mxu0 %v1810
      %v2095 = vpop.f32.mrb[0].mxu0
      %v2096 = vadd.f32 0.0, %v2095
      %v2097 = vpop.f32.mrb[0].mxu0
      %v2098 = vpop.f32.mrb[0].mxu0
      %v2099 = vadd.f32 0.0, %v2098
      %v2100 = vpop.f32.mrb[0].mxu0
      %2101 = vmatprep.mubr.bf16.mxu0 %v1814
      %2102 = vmatmul.mubr.bf16.gmra.mrb[0].mxu0 %v1813
      %v2103 = vpop.f32.mrb[0].mxu0
      %v2104 = vadd.f32 0.0, %v2103
      %v2105 = vpop.f32.mrb[0].mxu0
      %v2106 = vpop.f32.mrb[0].mxu0
      %v2107 = vadd.f32 0.0, %v2106
      %v2108 = vpop.f32.mrb[0].mxu0
      %2109 = vmatprep.mubr.bf16.mxu0 %v1817
      %2110 = vmatmul.mubr.bf16.gmra.mrb[0].mxu0 %v1816
      %v2111 = vpop.f32.mrb[0].mxu0
      %v2112 = vadd.f32 0.0, %v2111
      %v2113 = vpop.f32.mrb[0].mxu0
      %v2114 = vpop.f32.mrb[0].mxu0
      %v2115 = vadd.f32 0.0, %v2114
      %v2116 = vpop.f32.mrb[0].mxu0
      %2117 = vmatprep.mubr.bf16.mxu0 %v1820
      %2118 = vmatmul.mubr.bf16.gmra.mrb[0].mxu0 %v1819
      %v2119 = vpop.f32.mrb[0].mxu0
      %v2120 = vadd.f32 0.0, %v2119
      %v2121 = vpop.f32.mrb[0].mxu0
      %v2122 = vpop.f32.mrb[0].mxu0
      %v2123 = vadd.f32 0.0, %v2122
      %v2124 = vpop.f32.mrb[0].mxu0
      %2125 = vmatprep.mubr.bf16.mxu0 %v1823
      %2126 = vmatmul.mubr.bf16.gmra.mrb[0].mxu0 %v1822
      %v2127 = vpop.f32.mrb[0].mxu0
      %v2128 = vadd.f32 0.0, %v2127
      %v2129 = vpop.f32.mrb[0].mxu0
      %v2130 = vpop.f32.mrb[0].mxu0
      %v2131 = vadd.f32 0.0, %v2130
      %v2132 = vpop.f32.mrb[0].mxu0
      %2133 = vmatprep.mubr.bf16.mxu0 %v1826
      %2134 = vmatmul.mubr.bf16.gmra.mrb[0].mxu0 %v1825
      %v2135 = vpop.f32.mrb[0].mxu0
      %v2136 = vadd.f32 0.0, %v2135
      %v2137 = vpop.f32.mrb[0].mxu0
      %v2138 = vpop.f32.mrb[0].mxu0
      %v2139 = vadd.f32 0.0, %v2138
      %v2140 = vpop.f32.mrb[0].mxu0
      %2141 = vmatprep.mubr.bf16.mxu0 %v1829
      %2142 = vmatmul.mubr.bf16.gmra.mrb[0].mxu0 %v1828
      %v2143 = vpop.f32.mrb[0].mxu0
      %v2144 = vadd.f32 0.0, %v2143
      %v2145 = vpop.f32.mrb[0].mxu0
      %v2146 = vpop.f32.mrb[0].mxu0
      %v2147 = vadd.f32 0.0, %v2146
      %v2148 = vpop.f32.mrb[0].mxu0
      %2149 = vmatprep.mubr.bf16.mxu0 %v1832
      %2150 = vmatmul.mubr.bf16.gmra.mrb[0].mxu0 %v1831
      %v2151 = vpop.f32.mrb[0].mxu0
      %v2152 = vadd.f32 0.0, %v2151
      %v2153 = vpop.f32.mrb[0].mxu0
      %v2154 = vpop.f32.mrb[0].mxu0
      %v2155 = vadd.f32 0.0, %v2154
      %v2156 = vpop.f32.mrb[0].mxu0
      %2157 = vmatprep.mubr.bf16.mxu0 %v1835
      %2158 = vmatmul.mubr.bf16.gmra.mrb[0].mxu0 %v1834
      %v2159 = vpop.f32.mrb[0].mxu0
      %v2160 = vadd.f32 0.0, %v2159
      %v2161 = vpop.f32.mrb[0].mxu0
      %v2162 = vpop.f32.mrb[0].mxu0
      %v2163 = vadd.f32 0.0, %v2162
      %v2164 = vpop.f32.mrb[0].mxu0
      %2165 = vmatprep.mubr.bf16.mxu0 %v1838
      %2166 = vmatmul.mubr.bf16.gmra.mrb[0].mxu0 %v1837
      %v2167 = vpop.f32.mrb[0].mxu0
      %v2168 = vadd.f32 0.0, %v2167
      %v2169 = vpop.f32.mrb[0].mxu0
      %v2170 = vpop.f32.mrb[0].mxu0
      %v2171 = vadd.f32 0.0, %v2170
      %v2172 = vpop.f32.mrb[0].mxu0
      %2173 = vmatprep.mubr.bf16.mxu0 %v1841
      %2174 = vmatmul.mubr.bf16.gmra.mrb[0].mxu0 %v1840
      %v2175 = vpop.f32.mrb[0].mxu0
      %v2176 = vadd.f32 0.0, %v2175
      %v2177 = vpop.f32.mrb[0].mxu0
      %v2178 = vpop.f32.mrb[0].mxu0
      %v2179 = vadd.f32 0.0, %v2178
      %v2180 = vpop.f32.mrb[0].mxu0
      %2181 = vmatprep.mubr.bf16.mxu0 %v1844
      %2182 = vmatmul.mubr.bf16.gmra.mrb[0].mxu0 %v1843
      %v2183 = vpop.f32.mrb[0].mxu0
      %v2184 = vadd.f32 0.0, %v2183
      %v2185 = vpop.f32.mrb[0].mxu0
      %v2186 = vpop.f32.mrb[0].mxu0
      %v2187 = vadd.f32 0.0, %v2186
      %v2188 = vpop.f32.mrb[0].mxu0
      %2189 = vmatprep.mubr.bf16.mxu0 %v1847
      %2190 = vmatmul.mubr.bf16.gmra.mrb[0].mxu0 %v1846
      %v2191 = vpop.f32.mrb[0].mxu0
      %v2192 = vadd.f32 0.0, %v2191
      %v2193 = vpop.f32.mrb[0].mxu0
      %v2194 = vpop.f32.mrb[0].mxu0
      %v2195 = vadd.f32 0.0, %v2194
      %v2196 = vpop.f32.mrb[0].mxu0
      %2197 = vmatprep.mubr.bf16.mxu0 %v1850
      %2198 = vmatmul.mubr.bf16.gmra.mrb[0].mxu0 %v1849
      %v2199 = vpop.f32.mrb[0].mxu0
      %v2200 = vadd.f32 0.0, %v2199
      %v2201 = vpop.f32.mrb[0].mxu0
      %v2202 = vpop.f32.mrb[0].mxu0
      %v2203 = vadd.f32 0.0, %v2202
      %v2204 = vpop.f32.mrb[0].mxu0
      %2205 = vdwg.mxu0
      %2206 = vmatprep.subr.bf16.mxu0 0
      %2207 = vmatpush1.bf16.msra.mxu0 %v2013
      %2208 = vmatprep.subr.bf16.mxu0 0
      %2209 = vmatpush1.bf16.msra.mxu0 %v2014
      %2210 = vmatprep.subr.bf16.mxu0 0
      %2211 = vmatpush1.bf16.msra.mxu0 %v2015
      %2212 = vmatprep.subr.bf16.mxu0 0
      %2213 = vmatpush1.bf16.msra.mxu0 %v2016
      %2214 = vmatprep.subr.bf16.mxu0 0
      %2215 = vmatpush1.bf16.msra.mxu0 %v2017
      %2216 = vmatprep.subr.bf16.mxu0 0
      %2217 = vmatpush1.bf16.msra.mxu0 %v2018
      %2218 = vmatprep.subr.bf16.mxu0 0
      %2219 = vmatpush1.bf16.msra.mxu0 %v2019
      %2220 = vmatprep.subr.bf16.mxu0 0
      %2221 = vmatpush1.bf16.msra.mxu0 %v2020
      %2222 = vmatprep.subr.bf16.mxu0 0
      %2223 = vmatpush1.bf16.msra.mxu0 0
      %2224 = vmatprep.subr.bf16.mxu0 0
      %2225 = vmatpush1.bf16.msra.mxu0 0
      %2226 = vmatprep.subr.bf16.mxu0 0
      %2227 = vmatpush1.bf16.msra.mxu0 0
      %2228 = vmatprep.subr.bf16.mxu0 0
      %2229 = vmatpush1.bf16.msra.mxu0 0
      %2230 = vmatprep.subr.bf16.mxu0 0
      %2231 = vmatpush1.bf16.msra.mxu0 0
      %2232 = vmatprep.subr.bf16.mxu0 0
      %2233 = vmatpush1.bf16.msra.mxu0 0
      %2234 = vmatprep.subr.bf16.mxu0 0
      %2235 = vmatpush1.bf16.msra.mxu0 0
      %2236 = vmatprep.subr.bf16.mxu0 0
      %2237 = vmatpush1.bf16.msra.mxu0 0
      %2238 = vmatprep.mubr.bf16.mxu0 0
      %2239 = vmatmul.mubr.bf16.gmra.mrb[0].mxu0 %v1806
      %v2240 = vpop.f32.mrb[0].mxu0
      %v2241 = vadd.f32 %v2080, %v2240
      %v2242 = vpop.f32.mrb[0].mxu0
      %v2243 = vpop.f32.mrb[0].mxu0
      %v2244 = vadd.f32 %v2083, %v2243
      %v2245 = vpop.f32.mrb[0].mxu0
      %2246 = vmatprep.mubr.bf16.mxu0 0
      %2247 = vmatmul.mubr.bf16.gmra.mrb[0].mxu0 %v1809
      %v2248 = vpop.f32.mrb[0].mxu0
      %v2249 = vadd.f32 %v2088, %v2248
      %v2250 = vpop.f32.mrb[0].mxu0
      %v2251 = vpop.f32.mrb[0].mxu0
      %v2252 = vadd.f32 %v2091, %v2251
      %v2253 = vpop.f32.mrb[0].mxu0
      %2254 = vmatprep.mubr.bf16.mxu0 0
      %2255 = vmatmul.mubr.bf16.gmra.mrb[0].mxu0 %v1812
      %v2256 = vpop.f32.mrb[0].mxu0
      %v2257 = vadd.f32 %v2096, %v2256
      %v2258 = vpop.f32.mrb[0].mxu0
      %v2259 = vpop.f32.mrb[0].mxu0
      %v2260 = vadd.f32 %v2099, %v2259
      %v2261 = vpop.f32.mrb[0].mxu0
      %2262 = vmatprep.mubr.bf16.mxu0 0
      %2263 = vmatmul.mubr.bf16.gmra.mrb[0].mxu0 %v1815
      %v2264 = vpop.f32.mrb[0].mxu0
      %v2265 = vadd.f32 %v2104, %v2264
      %v2266 = vpop.f32.mrb[0].mxu0
      %v2267 = vpop.f32.mrb[0].mxu0
      %v2268 = vadd.f32 %v2107, %v2267
      %v2269 = vpop.f32.mrb[0].mxu0
      %2270 = vmatprep.mubr.bf16.mxu0 0
      %2271 = vmatmul.mubr.bf16.gmra.mrb[0].mxu0 %v1818
      %v2272 = vpop.f32.mrb[0].mxu0
      %v2273 = vadd.f32 %v2112, %v2272
      %v2274 = vpop.f32.mrb[0].mxu0
      %v2275 = vpop.f32.mrb[0].mxu0
      %v2276 = vadd.f32 %v2115, %v2275
      %v2277 = vpop.f32.mrb[0].mxu0
      %2278 = vmatprep.mubr.bf16.mxu0 0
      %2279 = vmatmul.mubr.bf16.gmra.mrb[0].mxu0 %v1821
      %v2280 = vpop.f32.mrb[0].mxu0
      %v2281 = vadd.f32 %v2120, %v2280
      %v2282 = vpop.f32.mrb[0].mxu0
      %v2283 = vpop.f32.mrb[0].mxu0
      %v2284 = vadd.f32 %v2123, %v2283
      %v2285 = vpop.f32.mrb[0].mxu0
      %2286 = vmatprep.mubr.bf16.mxu0 0
      %2287 = vmatmul.mubr.bf16.gmra.mrb[0].mxu0 %v1824
      %v2288 = vpop.f32.mrb[0].mxu0
      %v2289 = vadd.f32 %v2128, %v2288
      %v2290 = vpop.f32.mrb[0].mxu0
      %v2291 = vpop.f32.mrb[0].mxu0
      %v2292 = vadd.f32 %v2131, %v2291
      %v2293 = vpop.f32.mrb[0].mxu0
      %2294 = vmatprep.mubr.bf16.mxu0 0
      %2295 = vmatmul.mubr.bf16.gmra.mrb[0].mxu0 %v1827
      %v2296 = vpop.f32.mrb[0].mxu0
      %v2297 = vadd.f32 %v2136, %v2296
      %v2298 = vpop.f32.mrb[0].mxu0
      %v2299 = vpop.f32.mrb[0].mxu0
      %v2300 = vadd.f32 %v2139, %v2299
      %v2301 = vpop.f32.mrb[0].mxu0
      %2302 = vmatprep.mubr.bf16.mxu0 0
      %2303 = vmatmul.mubr.bf16.gmra.mrb[0].mxu0 %v1830
      %v2304 = vpop.f32.mrb[0].mxu0
      %v2305 = vadd.f32 %v2144, %v2304
      %v2306 = vpop.f32.mrb[0].mxu0
      %v2307 = vpop.f32.mrb[0].mxu0
      %v2308 = vadd.f32 %v2147, %v2307
      %v2309 = vpop.f32.mrb[0].mxu0
      %2310 = vmatprep.mubr.bf16.mxu0 0
      %2311 = vmatmul.mubr.bf16.gmra.mrb[0].mxu0 %v1833
      %v2312 = vpop.f32.mrb[0].mxu0
      %v2313 = vadd.f32 %v2152, %v2312
      %v2314 = vpop.f32.mrb[0].mxu0
      %v2315 = vpop.f32.mrb[0].mxu0
      %v2316 = vadd.f32 %v2155, %v2315
      %v2317 = vpop.f32.mrb[0].mxu0
      %2318 = vmatprep.mubr.bf16.mxu0 0
      %2319 = vmatmul.mubr.bf16.gmra.mrb[0].mxu0 %v1836
      %v2320 = vpop.f32.mrb[0].mxu0
      %v2321 = vadd.f32 %v2160, %v2320
      %v2322 = vpop.f32.mrb[0].mxu0
      %v2323 = vpop.f32.mrb[0].mxu0
      %v2324 = vadd.f32 %v2163, %v2323
      %v2325 = vpop.f32.mrb[0].mxu0
      %2326 = vmatprep.mubr.bf16.mxu0 0
      %2327 = vmatmul.mubr.bf16.gmra.mrb[0].mxu0 %v1839
      %v2328 = vpop.f32.mrb[0].mxu0
      %v2329 = vadd.f32 %v2168, %v2328
      %v2330 = vpop.f32.mrb[0].mxu0
      %v2331 = vpop.f32.mrb[0].mxu0
      %v2332 = vadd.f32 %v2171, %v2331
      %v2333 = vpop.f32.mrb[0].mxu0
      %2334 = vmatprep.mubr.bf16.mxu0 0
      %2335 = vmatmul.mubr.bf16.gmra.mrb[0].mxu0 %v1842
      %v2336 = vpop.f32.mrb[0].mxu0
      %v2337 = vadd.f32 %v2176, %v2336
      %v2338 = vpop.f32.mrb[0].mxu0
      %v2339 = vpop.f32.mrb[0].mxu0
      %v2340 = vadd.f32 %v2179, %v2339
      %v2341 = vpop.f32.mrb[0].mxu0
      %2342 = vmatprep.mubr.bf16.mxu0 0
      %2343 = vmatmul.mubr.bf16.gmra.mrb[0].mxu0 %v1845
      %v2344 = vpop.f32.mrb[0].mxu0
      %v2345 = vadd.f32 %v2184, %v2344
      %v2346 = vpop.f32.mrb[0].mxu0
      %v2347 = vpop.f32.mrb[0].mxu0
      %v2348 = vadd.f32 %v2187, %v2347
      %v2349 = vpop.f32.mrb[0].mxu0
      %2350 = vmatprep.mubr.bf16.mxu0 0
      %2351 = vmatmul.mubr.bf16.gmra.mrb[0].mxu0 %v1848
      %v2352 = vpop.f32.mrb[0].mxu0
      %v2353 = vadd.f32 %v2192, %v2352
      %v2354 = vpop.f32.mrb[0].mxu0
      %v2355 = vpop.f32.mrb[0].mxu0
      %v2356 = vadd.f32 %v2195, %v2355
      %v2357 = vpop.f32.mrb[0].mxu0
      %2358 = vmatprep.mubr.bf16.mxu0 0
      %2359 = vmatmul.mubr.bf16.gmra.mrb[0].mxu0 %v1851
      %v2360 = vpop.f32.mrb[0].mxu0
      %v2361 = vadd.f32 %v2200, %v2360
      %v2362 = vpop.f32.mrb[0].mxu0
      %v2363 = vpop.f32.mrb[0].mxu0
      %v2364 = vadd.f32 %v2203, %v2363
      %v2365 = vpop.f32.mrb[0].mxu0
      %2366 = vdwg.mxu0
      %v2367 = vadd.f32 %v1677, %v2241
      %v2368 = vadd.f32 %v1680, %v2244
      %v2369 = vadd.f32 %v1685, %v2249
      %v2370 = vadd.f32 %v1688, %v2252
      %v2371 = vadd.f32 %v1693, %v2257
      %v2372 = vadd.f32 %v1696, %v2260
      %v2373 = vadd.f32 %v1701, %v2265
      %v2374 = vadd.f32 %v1704, %v2268
      %v2375 = vadd.f32 %v1709, %v2273
      %v2376 = vadd.f32 %v1712, %v2276
      %v2377 = vadd.f32 %v1717, %v2281
      %v2378 = vadd.f32 %v1720, %v2284
      %v2379 = vadd.f32 %v1725, %v2289
      %v2380 = vadd.f32 %v1728, %v2292
      %v2381 = vadd.f32 %v1733, %v2297
      %v2382 = vadd.f32 %v1736, %v2300
      %v2383 = vadd.f32 %v1741, %v2305
      %v2384 = vadd.f32 %v1744, %v2308
      %v2385 = vadd.f32 %v1749, %v2313
      %v2386 = vadd.f32 %v1752, %v2316
      %v2387 = vadd.f32 %v1757, %v2321
      %v2388 = vadd.f32 %v1760, %v2324
      %v2389 = vadd.f32 %v1765, %v2329
      %v2390 = vadd.f32 %v1768, %v2332
      %v2391 = vadd.f32 %v1773, %v2337
      %v2392 = vadd.f32 %v1776, %v2340
      %v2393 = vadd.f32 %v1781, %v2345
      %v2394 = vadd.f32 %v1784, %v2348
      %v2395 = vadd.f32 %v1789, %v2353
      %v2396 = vadd.f32 %v1792, %v2356
      %v2397 = vadd.f32 %v1797, %v2361
      %v2398 = vadd.f32 %v1800, %v2364
      %v2399 = vld [vmem:[%s2] sm:$0x1]
      %v2401 = vlaneseq
      %v2402 = vshrl.u32 %v2401, 7
      %v2403 = vsub.s32 0, %v2402
      %v2404 = vrot.slane %v2399, %v2403
      %v2406 = vmul.f32 %v2367, %v2404
      %v2407 = vmul.f32 %v2368, %v2404
      %v2408 = vmul.f32 %v2369, %v2404
      %v2409 = vmul.f32 %v2370, %v2404
      %v2410 = vmul.f32 %v2371, %v2404
      %v2411 = vmul.f32 %v2372, %v2404
      %v2412 = vmul.f32 %v2373, %v2404
      %v2413 = vmul.f32 %v2374, %v2404
      %v2414 = vmul.f32 %v2375, %v2404
      %v2415 = vmul.f32 %v2376, %v2404
      %v2416 = vmul.f32 %v2377, %v2404
      %v2417 = vmul.f32 %v2378, %v2404
      %v2418 = vmul.f32 %v2379, %v2404
      %v2419 = vmul.f32 %v2380, %v2404
      %v2420 = vmul.f32 %v2381, %v2404
      %v2421 = vmul.f32 %v2382, %v2404
      %v2422 = vmul.f32 %v2383, %v2404
      %v2423 = vmul.f32 %v2384, %v2404
      %v2424 = vmul.f32 %v2385, %v2404
      %v2425 = vmul.f32 %v2386, %v2404
      %v2426 = vmul.f32 %v2387, %v2404
      %v2427 = vmul.f32 %v2388, %v2404
      %v2428 = vmul.f32 %v2389, %v2404
      %v2429 = vmul.f32 %v2390, %v2404
      %v2430 = vmul.f32 %v2391, %v2404
      %v2431 = vmul.f32 %v2392, %v2404
      %v2432 = vmul.f32 %v2393, %v2404
      %v2433 = vmul.f32 %v2394, %v2404
      %v2434 = vmul.f32 %v2395, %v2404
      %v2435 = vmul.f32 %v2396, %v2404
      %v2436 = vmul.f32 %v2397, %v2404
      %v2437 = vmul.f32 %v2398, %v2404
      %v2438 = vld [vmem:[%s3] sm:$0x1]
      %v2440 = vlaneseq
      %v2441 = vshrl.u32 %v2440, 7
      %v2442 = vsub.s32 0, %v2441
      %v2443 = vrot.slane %v2438, %v2442
      %v2445 = vadd.f32 %v2406, %v2443
      %v2446 = vadd.f32 %v2407, %v2443
      %v2447 = vadd.f32 %v2408, %v2443
      %v2448 = vadd.f32 %v2409, %v2443
      %v2449 = vadd.f32 %v2410, %v2443
      %v2450 = vadd.f32 %v2411, %v2443
      %v2451 = vadd.f32 %v2412, %v2443
      %v2452 = vadd.f32 %v2413, %v2443
      %v2453 = vadd.f32 %v2414, %v2443
      %v2454 = vadd.f32 %v2415, %v2443
      %v2455 = vadd.f32 %v2416, %v2443
      %v2456 = vadd.f32 %v2417, %v2443
      %v2457 = vadd.f32 %v2418, %v2443
      %v2458 = vadd.f32 %v2419, %v2443
      %v2459 = vadd.f32 %v2420, %v2443
      %v2460 = vadd.f32 %v2421, %v2443
      %v2461 = vadd.f32 %v2422, %v2443
      %v2462 = vadd.f32 %v2423, %v2443
      %v2463 = vadd.f32 %v2424, %v2443
      %v2464 = vadd.f32 %v2425, %v2443
      %v2465 = vadd.f32 %v2426, %v2443
      %v2466 = vadd.f32 %v2427, %v2443
      %v2467 = vadd.f32 %v2428, %v2443
      %v2468 = vadd.f32 %v2429, %v2443
      %v2469 = vadd.f32 %v2430, %v2443
      %v2470 = vadd.f32 %v2431, %v2443
      %v2471 = vadd.f32 %v2432, %v2443
      %v2472 = vadd.f32 %v2433, %v2443
      %v2473 = vadd.f32 %v2434, %v2443
      %v2474 = vadd.f32 %v2435, %v2443
      %v2475 = vadd.f32 %v2436, %v2443
      %v2476 = vadd.f32 %v2437, %v2443
      %v2477 = vmax.f32 %v2445, 0.0
      %v2478 = vmax.f32 %v2446, 0.0
      %v2479 = vmax.f32 %v2447, 0.0
      %v2480 = vmax.f32 %v2448, 0.0
      %v2481 = vmax.f32 %v2449, 0.0
      %v2482 = vmax.f32 %v2450, 0.0
      %v2483 = vmax.f32 %v2451, 0.0
      %v2484 = vmax.f32 %v2452, 0.0
      %v2485 = vmax.f32 %v2453, 0.0
      %v2486 = vmax.f32 %v2454, 0.0
      %v2487 = vmax.f32 %v2455, 0.0
      %v2488 = vmax.f32 %v2456, 0.0
      %v2489 = vmax.f32 %v2457, 0.0
      %v2490 = vmax.f32 %v2458, 0.0
      %v2491 = vmax.f32 %v2459, 0.0
      %v2492 = vmax.f32 %v2460, 0.0
      %v2493 = vmax.f32 %v2461, 0.0
      %v2494 = vmax.f32 %v2462, 0.0
      %v2495 = vmax.f32 %v2463, 0.0
      %v2496 = vmax.f32 %v2464, 0.0
      %v2497 = vmax.f32 %v2465, 0.0
      %v2498 = vmax.f32 %v2466, 0.0
      %v2499 = vmax.f32 %v2467, 0.0
      %v2500 = vmax.f32 %v2468, 0.0
      %v2501 = vmax.f32 %v2469, 0.0
      %v2502 = vmax.f32 %v2470, 0.0
      %v2503 = vmax.f32 %v2471, 0.0
      %v2504 = vmax.f32 %v2472, 0.0
      %v2505 = vmax.f32 %v2473, 0.0
      %v2506 = vmax.f32 %v2474, 0.0
      %v2507 = vmax.f32 %v2475, 0.0
      %v2508 = vmax.f32 %v2476, 0.0
      %v2509 = vpack.c.bf16 %v2478, %v2477
      %v2510 = vpack.c.bf16 %v2480, %v2479
      %v2511 = vpack.c.bf16 %v2482, %v2481
      %v2512 = vpack.c.bf16 %v2484, %v2483
      %v2513 = vpack.c.bf16 %v2486, %v2485
      %v2514 = vpack.c.bf16 %v2488, %v2487
      %v2515 = vpack.c.bf16 %v2490, %v2489
      %v2516 = vpack.c.bf16 %v2492, %v2491
      %v2517 = vpack.c.bf16 %v2494, %v2493
      %v2518 = vpack.c.bf16 %v2496, %v2495
      %v2519 = vpack.c.bf16 %v2498, %v2497
      %v2520 = vpack.c.bf16 %v2500, %v2499
      %v2521 = vpack.c.bf16 %v2502, %v2501
      %v2522 = vpack.c.bf16 %v2504, %v2503
      %v2523 = vpack.c.bf16 %v2506, %v2505
      %v2524 = vpack.c.bf16 %v2508, %v2507
      %v2526 = vshrl.u32 %v2509, 16
      %v2528 = vrot.slane %v2526, 7
      %v2529 = vshll.u32 %v2509, 16
      %v2531 = vor.u32 %v2528, %v2529
      %v2533 = vshrl.u32 %v2510, 16
      %v2535 = vrot.slane %v2533, 7
      %v2536 = vshll.u32 %v2510, 16
      %v2538 = vor.u32 %v2535, %v2536
      %v2540 = vshrl.u32 %v2511, 16
      %v2542 = vrot.slane %v2540, 7
      %v2543 = vshll.u32 %v2511, 16
      %v2545 = vor.u32 %v2542, %v2543
      %v2547 = vshrl.u32 %v2512, 16
      %v2549 = vrot.slane %v2547, 7
      %v2550 = vshll.u32 %v2512, 16
      %v2552 = vor.u32 %v2549, %v2550
      %v2554 = vshrl.u32 %v2513, 16
      %v2556 = vrot.slane %v2554, 7
      %v2557 = vshll.u32 %v2513, 16
      %v2559 = vor.u32 %v2556, %v2557
      %v2561 = vshrl.u32 %v2514, 16
      %v2563 = vrot.slane %v2561, 7
      %v2564 = vshll.u32 %v2514, 16
      %v2566 = vor.u32 %v2563, %v2564
      %v2568 = vshrl.u32 %v2515, 16
      %v2570 = vrot.slane %v2568, 7
      %v2571 = vshll.u32 %v2515, 16
      %v2573 = vor.u32 %v2570, %v2571
      %v2575 = vshrl.u32 %v2516, 16
      %v2577 = vrot.slane %v2575, 7
      %v2578 = vshll.u32 %v2516, 16
      %v2580 = vor.u32 %v2577, %v2578
      %v2582 = vshrl.u32 %v2517, 16
      %v2584 = vrot.slane %v2582, 7
      %v2585 = vshll.u32 %v2517, 16
      %v2587 = vor.u32 %v2584, %v2585
      %v2589 = vshrl.u32 %v2518, 16
      %v2591 = vrot.slane %v2589, 7
      %v2592 = vshll.u32 %v2518, 16
      %v2594 = vor.u32 %v2591, %v2592
      %v2596 = vshrl.u32 %v2519, 16
      %v2598 = vrot.slane %v2596, 7
      %v2599 = vshll.u32 %v2519, 16
      %v2601 = vor.u32 %v2598, %v2599
      %v2603 = vshrl.u32 %v2520, 16
      %v2605 = vrot.slane %v2603, 7
      %v2606 = vshll.u32 %v2520, 16
      %v2608 = vor.u32 %v2605, %v2606
      %v2610 = vshrl.u32 %v2521, 16
      %v2612 = vrot.slane %v2610, 7
      %v2613 = vshll.u32 %v2521, 16
      %v2615 = vor.u32 %v2612, %v2613
      %v2617 = vshrl.u32 %v2522, 16
      %v2619 = vrot.slane %v2617, 7
      %v2620 = vshll.u32 %v2522, 16
      %v2622 = vor.u32 %v2619, %v2620
      %v2624 = vshrl.u32 %v2523, 16
      %v2626 = vrot.slane %v2624, 7
      %v2627 = vshll.u32 %v2523, 16
      %v2629 = vor.u32 %v2626, %v2627
      %v2631 = vshrl.u32 %v2524, 16
      %v2633 = vrot.slane %v2631, 7
      %v2634 = vshll.u32 %v2524, 16
      %v2636 = vor.u32 %v2633, %v2634
      %v2653 = vsel %vm522, 0, %v2531
      %v2654 = vsel %vm522, 0, %v2538
      %v2655 = vsel %vm522, 0, %v2545
      %v2656 = vsel %vm522, 0, %v2552
      %v2657 = vsel %vm522, 0, %v2559
      %v2658 = vsel %vm522, 0, %v2566
      %v2659 = vsel %vm522, 0, %v2573
      %v2660 = vsel %vm522, 0, %v2580
      %v2661 = vsel %vm522, 0, %v2587
      %v2662 = vsel %vm522, 0, %v2594
      %v2663 = vsel %vm522, 0, %v2601
      %v2664 = vsel %vm522, 0, %v2608
      %v2665 = vsel %vm522, 0, %v2615
      %v2666 = vsel %vm522, 0, %v2622
      %v2667 = vsel %vm522, 0, %v2629
      %v2668 = vsel %vm522, 0, %v2636
      %v2669 = vrot.slane %v2529, 1
      %v2670 = vor.u32 %v2526, %v2669
      %v2671 = vrot.slane %v2536, 1
      %v2672 = vor.u32 %v2533, %v2671
      %v2673 = vrot.slane %v2543, 1
      %v2674 = vor.u32 %v2540, %v2673
      %v2675 = vrot.slane %v2550, 1
      %v2676 = vor.u32 %v2547, %v2675
      %v2677 = vrot.slane %v2557, 1
      %v2678 = vor.u32 %v2554, %v2677
      %v2679 = vrot.slane %v2564, 1
      %v2680 = vor.u32 %v2561, %v2679
      %v2681 = vrot.slane %v2571, 1
      %v2682 = vor.u32 %v2568, %v2681
      %v2683 = vrot.slane %v2578, 1
      %v2684 = vor.u32 %v2575, %v2683
      %v2685 = vrot.slane %v2585, 1
      %v2686 = vor.u32 %v2582, %v2685
      %v2687 = vrot.slane %v2592, 1
      %v2688 = vor.u32 %v2589, %v2687
      %v2689 = vrot.slane %v2599, 1
      %v2690 = vor.u32 %v2596, %v2689
      %v2691 = vrot.slane %v2606, 1
      %v2692 = vor.u32 %v2603, %v2691
      %v2693 = vrot.slane %v2613, 1
      %v2694 = vor.u32 %v2610, %v2693
      %v2695 = vrot.slane %v2620, 1
      %v2696 = vor.u32 %v2617, %v2695
      %v2697 = vrot.slane %v2627, 1
      %v2698 = vor.u32 %v2624, %v2697
      %v2699 = vrot.slane %v2634, 1
      %v2700 = vor.u32 %v2631, %v2699
      %v2717 = vsel %vm589, %v2670, 0
      %v2718 = vsel %vm589, %v2672, 0
      %v2719 = vsel %vm589, %v2674, 0
      %v2720 = vsel %vm589, %v2676, 0
      %v2721 = vsel %vm589, %v2678, 0
      %v2722 = vsel %vm589, %v2680, 0
      %v2723 = vsel %vm589, %v2682, 0
      %v2724 = vsel %vm589, %v2684, 0
      %v2725 = vsel %vm589, %v2686, 0
      %v2726 = vsel %vm589, %v2688, 0
      %v2727 = vsel %vm589, %v2690, 0
      %v2728 = vsel %vm589, %v2692, 0
      %v2729 = vsel %vm589, %v2694, 0
      %v2730 = vsel %vm589, %v2696, 0
      %v2731 = vsel %vm589, %v2698, 0
      %v2732 = vsel %vm589, %v2700, 0
      %s2733 = scalar_lea.vmem [#allocation3], 24
      %2734 = vst [vmem:[%s2733] sm:$0xff] %v2653
      %2735 = vst [vmem:[%s2733 + $0x18] sm:$0xff] %v2654
      %2736 = vst [vmem:[%s2733 + $0x30] sm:$0xff] %v2655
      %2737 = vst [vmem:[%s2733 + $0x48] sm:$0xff] %v2656
      %2738 = vst [vmem:[%s2733 + $0x60] sm:$0xff] %v2657
      %2739 = vst [vmem:[%s2733 + $0x78] sm:$0xff] %v2658
      %2740 = vst [vmem:[%s2733 + $0x90] sm:$0xff] %v2659
      %2741 = vst [vmem:[%s2733 + $0xa8] sm:$0xff] %v2660
      %2742 = vst [vmem:[%s2733 + $0xc0] sm:$0xff] %v2661
      %2743 = vst [vmem:[%s2733 + $0xd8] sm:$0xff] %v2662
      %2744 = vst [vmem:[%s2733 + $0xf0] sm:$0xff] %v2663
      %2745 = vst [vmem:[%s2733 + $0x108] sm:$0xff] %v2664
      %2746 = vst [vmem:[%s2733 + $0x120] sm:$0xff] %v2665
      %2747 = vst [vmem:[%s2733 + $0x138] sm:$0xff] %v2666
      %2748 = vst [vmem:[%s2733 + $0x150] sm:$0xff] %v2667
      %2749 = vst [vmem:[%s2733 + $0x168] sm:$0xff] %v2668
      %2750 = vst [vmem:[%s2733 + $0x8] sm:$0xff] %v2509
      %2751 = vst [vmem:[%s2733 + $0x20] sm:$0xff] %v2510
      %2752 = vst [vmem:[%s2733 + $0x38] sm:$0xff] %v2511
      %2753 = vst [vmem:[%s2733 + $0x50] sm:$0xff] %v2512
      %2754 = vst [vmem:[%s2733 + $0x68] sm:$0xff] %v2513
      %2755 = vst [vmem:[%s2733 + $0x80] sm:$0xff] %v2514
      %2756 = vst [vmem:[%s2733 + $0x98] sm:$0xff] %v2515
      %2757 = vst [vmem:[%s2733 + $0xb0] sm:$0xff] %v2516
      %2758 = vst [vmem:[%s2733 + $0xc8] sm:$0xff] %v2517
      %2759 = vst [vmem:[%s2733 + $0xe0] sm:$0xff] %v2518
      %2760 = vst [vmem:[%s2733 + $0xf8] sm:$0xff] %v2519
      %2761 = vst [vmem:[%s2733 + $0x110] sm:$0xff] %v2520
      %2762 = vst [vmem:[%s2733 + $0x128] sm:$0xff] %v2521
      %2763 = vst [vmem:[%s2733 + $0x140] sm:$0xff] %v2522
      %2764 = vst [vmem:[%s2733 + $0x158] sm:$0xff] %v2523
      %2765 = vst [vmem:[%s2733 + $0x170] sm:$0xff] %v2524
      %2766 = vst [vmem:[%s2733 + $0x10] sm:$0xff] %v2717
      %2767 = vst [vmem:[%s2733 + $0x28] sm:$0xff] %v2718
      %2768 = vst [vmem:[%s2733 + $0x40] sm:$0xff] %v2719
      %2769 = vst [vmem:[%s2733 + $0x58] sm:$0xff] %v2720
      %2770 = vst [vmem:[%s2733 + $0x70] sm:$0xff] %v2721
      %2771 = vst [vmem:[%s2733 + $0x88] sm:$0xff] %v2722
      %2772 = vst [vmem:[%s2733 + $0xa0] sm:$0xff] %v2723
      %2773 = vst [vmem:[%s2733 + $0xb8] sm:$0xff] %v2724
      %2774 = vst [vmem:[%s2733 + $0xd0] sm:$0xff] %v2725
      %2775 = vst [vmem:[%s2733 + $0xe8] sm:$0xff] %v2726
      %2776 = vst [vmem:[%s2733 + $0x100] sm:$0xff] %v2727
      %2777 = vst [vmem:[%s2733 + $0x118] sm:$0xff] %v2728
      %2778 = vst [vmem:[%s2733 + $0x130] sm:$0xff] %v2729
      %2779 = vst [vmem:[%s2733 + $0x148] sm:$0xff] %v2730
      %2780 = vst [vmem:[%s2733 + $0x160] sm:$0xff] %v2731
      %2781 = vst [vmem:[%s2733 + $0x178] sm:$0xff] %v2732
      %2782 = vst [vmem:[#allocation3] sm:$0xff] 0
      %2783 = vst [vmem:[#allocation3 + $0x8] sm:$0xff] 0
      %2784 = vst [vmem:[#allocation3 + $0x10] sm:$0xff] 0
      %s2785 = scalar_lea.vmem [#allocation3], 408
      %2786 = vst [vmem:[%s2785] sm:$0xff] 0
      %2787 = vst [vmem:[%s2785 + $0x8] sm:$0xff] 0
      %2788 = vst [vmem:[%s2785 + $0x10] sm:$0xff] 0
      %v2789 = vld [vmem:[#allocation3] sm:$0xff]
      %v2790 = vld [vmem:[#allocation3 + $0x8] sm:$0xff]
      %v2791 = vld [vmem:[#allocation3 + $0x10] sm:$0xff]
      %v2792 = vld [vmem:[#allocation3 + $0x18] sm:$0xff]
      %v2793 = vld [vmem:[#allocation3 + $0x20] sm:$0xff]
      %v2794 = vld [vmem:[#allocation3 + $0x28] sm:$0xff]
      %v2795 = vld [vmem:[#allocation3 + $0x30] sm:$0xff]
      %v2796 = vld [vmem:[#allocation3 + $0x38] sm:$0xff]
      %v2797 = vld [vmem:[#allocation3 + $0x40] sm:$0xff]
      %v2798 = vld [vmem:[#allocation3 + $0x48] sm:$0xff]
      %v2799 = vld [vmem:[#allocation3 + $0x50] sm:$0xff]
      %v2800 = vld [vmem:[#allocation3 + $0x58] sm:$0xff]
      %v2801 = vld [vmem:[#allocation3 + $0x60] sm:$0xff]
      %v2802 = vld [vmem:[#allocation3 + $0x68] sm:$0xff]
      %v2803 = vld [vmem:[#allocation3 + $0x70] sm:$0xff]
      %v2804 = vld [vmem:[#allocation3 + $0x78] sm:$0xff]
      %v2805 = vld [vmem:[#allocation3 + $0x80] sm:$0xff]
      %v2806 = vld [vmem:[#allocation3 + $0x88] sm:$0xff]
      %v2807 = vld [vmem:[#allocation3 + $0x90] sm:$0xff]
      %v2808 = vld [vmem:[#allocation3 + $0x98] sm:$0xff]
      %v2809 = vld [vmem:[#allocation3 + $0xa0] sm:$0xff]
      %v2810 = vld [vmem:[#allocation3 + $0xa8] sm:$0xff]
      %v2811 = vld [vmem:[#allocation3 + $0xb0] sm:$0xff]
      %v2812 = vld [vmem:[#allocation3 + $0xb8] sm:$0xff]
      %v2813 = vld [vmem:[#allocation3 + $0xc0] sm:$0xff]
      %v2814 = vld [vmem:[#allocation3 + $0xc8] sm:$0xff]
      %v2815 = vld [vmem:[#allocation3 + $0xd0] sm:$0xff]
      %v2816 = vld [vmem:[#allocation3 + $0xd8] sm:$0xff]
      %v2817 = vld [vmem:[#allocation3 + $0xe0] sm:$0xff]
      %v2818 = vld [vmem:[#allocation3 + $0xe8] sm:$0xff]
      %v2819 = vld [vmem:[#allocation3 + $0xf0] sm:$0xff]
      %v2820 = vld [vmem:[#allocation3 + $0xf8] sm:$0xff]
      %v2821 = vld [vmem:[#allocation3 + $0x100] sm:$0xff]
      %v2822 = vld [vmem:[#allocation3 + $0x108] sm:$0xff]
      %v2823 = vld [vmem:[#allocation3 + $0x110] sm:$0xff]
      %v2824 = vld [vmem:[#allocation3 + $0x118] sm:$0xff]
      %v2825 = vld [vmem:[#allocation3 + $0x120] sm:$0xff]
      %v2826 = vld [vmem:[#allocation3 + $0x128] sm:$0xff]
      %v2827 = vld [vmem:[#allocation3 + $0x130] sm:$0xff]
      %v2828 = vld [vmem:[#allocation3 + $0x138] sm:$0xff]
      %v2829 = vld [vmem:[#allocation3 + $0x140] sm:$0xff]
      %v2830 = vld [vmem:[#allocation3 + $0x148] sm:$0xff]
      %v2831 = vld [vmem:[#allocation3 + $0x150] sm:$0xff]
      %v2832 = vld [vmem:[#allocation3 + $0x158] sm:$0xff]
      %v2833 = vld [vmem:[#allocation3 + $0x160] sm:$0xff]
      %v2834 = vld [vmem:[#allocation3 + $0x168] sm:$0xff]
      %v2835 = vld [vmem:[#allocation3 + $0x170] sm:$0xff]
      %v2836 = vld [vmem:[#allocation3 + $0x178] sm:$0xff]
      %v2837 = vld [vmem:[%s4] sm:$0xf]
      %v2838 = vld [vmem:[%s4 + $0x4] sm:$0xf]
      %v2839 = vld [vmem:[%s4 + $0x8] sm:$0xf]
      %v2840 = vld [vmem:[%s4 + $0xc] sm:$0xf]
      %v2841 = vld [vmem:[%s4 + $0x10] sm:$0xf]
      %v2842 = vld [vmem:[%s4 + $0x14] sm:$0xf]
      %v2843 = vld [vmem:[%s4 + $0x18] sm:$0xf]
      %v2844 = vld [vmem:[%s4 + $0x1c] sm:$0xf]
      %v2845 = vld [vmem:[%s4 + $0x20] sm:$0xf]
      %v2846 = vld [vmem:[%s4 + $0x24] sm:$0xf]
      %v2847 = vld [vmem:[%s4 + $0x28] sm:$0xf]
      %v2848 = vld [vmem:[%s4 + $0x2c] sm:$0xf]
      %v2849 = vld [vmem:[%s4 + $0x30] sm:$0xf]
      %v2850 = vld [vmem:[%s4 + $0x34] sm:$0xf]
      %v2851 = vld [vmem:[%s4 + $0x38] sm:$0xf]
      %v2852 = vld [vmem:[%s4 + $0x3c] sm:$0xf]
      %v2853 = vld [vmem:[%s4 + $0x40] sm:$0xf]
      %v2854 = vld [vmem:[%s4 + $0x44] sm:$0xf]
      %v2855 = vld [vmem:[%s4 + $0x48] sm:$0xf]
      %v2856 = vld [vmem:[%s4 + $0x4c] sm:$0xf]
      %v2857 = vld [vmem:[%s4 + $0x50] sm:$0xf]
      %v2858 = vld [vmem:[%s4 + $0x54] sm:$0xf]
      %v2859 = vld [vmem:[%s4 + $0x58] sm:$0xf]
      %v2860 = vld [vmem:[%s4 + $0x5c] sm:$0xf]
      %v2861 = vld [vmem:[%s4 + $0x60] sm:$0xf]
      %v2862 = vld [vmem:[%s4 + $0x64] sm:$0xf]
      %v2863 = vld [vmem:[%s4 + $0x68] sm:$0xf]
      %v2864 = vld [vmem:[%s4 + $0x6c] sm:$0xf]
      %v2865 = vld [vmem:[%s4 + $0x70] sm:$0xf]
      %v2866 = vld [vmem:[%s4 + $0x74] sm:$0xf]
      %v2867 = vld [vmem:[%s4 + $0x78] sm:$0xf]
      %v2868 = vld [vmem:[%s4 + $0x7c] sm:$0xf]
      %v2869 = vld [vmem:[%s4 + $0x80] sm:$0xf]
      %v2870 = vld [vmem:[%s4 + $0x84] sm:$0xf]
      %v2871 = vld [vmem:[%s4 + $0x88] sm:$0xf]
      %v2872 = vld [vmem:[%s4 + $0x8c] sm:$0xf]
      %v2873 = vld [vmem:[%s4 + $0x90] sm:$0xf]
      %v2874 = vld [vmem:[%s4 + $0x94] sm:$0xf]
      %v2875 = vld [vmem:[%s4 + $0x98] sm:$0xf]
      %v2876 = vld [vmem:[%s4 + $0x9c] sm:$0xf]
      %v2877 = vld [vmem:[%s4 + $0xa0] sm:$0xf]
      %v2878 = vld [vmem:[%s4 + $0xa4] sm:$0xf]
      %v2879 = vld [vmem:[%s4 + $0xa8] sm:$0xf]
      %v2880 = vld [vmem:[%s4 + $0xac] sm:$0xf]
      %v2881 = vld [vmem:[%s4 + $0xb0] sm:$0xf]
      %v2882 = vld [vmem:[%s4 + $0xb4] sm:$0xf]
      %v2883 = vld [vmem:[%s4 + $0xb8] sm:$0xf]
      %v2884 = vld [vmem:[%s4 + $0xbc] sm:$0xf]
      %v2885 = vld [vmem:[%s2733] sm:$0xff]
      %v2886 = vld [vmem:[%s2733 + $0x8] sm:$0xff]
      %v2887 = vld [vmem:[%s2733 + $0x10] sm:$0xff]
      %v2888 = vld [vmem:[%s2733 + $0x18] sm:$0xff]
      %v2889 = vld [vmem:[%s2733 + $0x20] sm:$0xff]
      %v2890 = vld [vmem:[%s2733 + $0x28] sm:$0xff]
      %v2891 = vld [vmem:[%s2733 + $0x30] sm:$0xff]
      %v2892 = vld [vmem:[%s2733 + $0x38] sm:$0xff]
      %v2893 = vld [vmem:[%s2733 + $0x40] sm:$0xff]
      %v2894 = vld [vmem:[%s2733 + $0x48] sm:$0xff]
      %v2895 = vld [vmem:[%s2733 + $0x50] sm:$0xff]
      %v2896 = vld [vmem:[%s2733 + $0x58] sm:$0xff]
      %v2897 = vld [vmem:[%s2733 + $0x60] sm:$0xff]
      %v2898 = vld [vmem:[%s2733 + $0x68] sm:$0xff]
      %v2899 = vld [vmem:[%s2733 + $0x70] sm:$0xff]
      %v2900 = vld [vmem:[%s2733 + $0x78] sm:$0xff]
      %v2901 = vld [vmem:[%s2733 + $0x80] sm:$0xff]
      %v2902 = vld [vmem:[%s2733 + $0x88] sm:$0xff]
      %v2903 = vld [vmem:[%s2733 + $0x90] sm:$0xff]
      %v2904 = vld [vmem:[%s2733 + $0x98] sm:$0xff]
      %v2905 = vld [vmem:[%s2733 + $0xa0] sm:$0xff]
      %v2906 = vld [vmem:[%s2733 + $0xa8] sm:$0xff]
      %v2907 = vld [vmem:[%s2733 + $0xb0] sm:$0xff]
      %v2908 = vld [vmem:[%s2733 + $0xb8] sm:$0xff]
      %v2909 = vld [vmem:[%s2733 + $0xc0] sm:$0xff]
      %v2910 = vld [vmem:[%s2733 + $0xc8] sm:$0xff]
      %v2911 = vld [vmem:[%s2733 + $0xd0] sm:$0xff]
      %v2912 = vld [vmem:[%s2733 + $0xd8] sm:$0xff]
      %v2913 = vld [vmem:[%s2733 + $0xe0] sm:$0xff]
      %v2914 = vld [vmem:[%s2733 + $0xe8] sm:$0xff]
      %v2915 = vld [vmem:[%s2733 + $0xf0] sm:$0xff]
      %v2916 = vld [vmem:[%s2733 + $0xf8] sm:$0xff]
      %v2917 = vld [vmem:[%s2733 + $0x100] sm:$0xff]
      %v2918 = vld [vmem:[%s2733 + $0x108] sm:$0xff]
      %v2919 = vld [vmem:[%s2733 + $0x110] sm:$0xff]
      %v2920 = vld [vmem:[%s2733 + $0x118] sm:$0xff]
      %v2921 = vld [vmem:[%s2733 + $0x120] sm:$0xff]
      %v2922 = vld [vmem:[%s2733 + $0x128] sm:$0xff]
      %v2923 = vld [vmem:[%s2733 + $0x130] sm:$0xff]
      %v2924 = vld [vmem:[%s2733 + $0x138] sm:$0xff]
      %v2925 = vld [vmem:[%s2733 + $0x140] sm:$0xff]
      %v2926 = vld [vmem:[%s2733 + $0x148] sm:$0xff]
      %v2927 = vld [vmem:[%s2733 + $0x150] sm:$0xff]
      %v2928 = vld [vmem:[%s2733 + $0x158] sm:$0xff]
      %v2929 = vld [vmem:[%s2733 + $0x160] sm:$0xff]
      %v2930 = vld [vmem:[%s2733 + $0x168] sm:$0xff]
      %v2931 = vld [vmem:[%s2733 + $0x170] sm:$0xff]
      %v2932 = vld [vmem:[%s2733 + $0x178] sm:$0xff]
      %s2933 = scalar_lea.vmem %s4, 192
      %v2934 = vld [vmem:[%s2933] sm:$0xf]
      %v2935 = vld [vmem:[%s2933 + $0x4] sm:$0xf]
      %v2936 = vld [vmem:[%s2933 + $0x8] sm:$0xf]
      %v2937 = vld [vmem:[%s2933 + $0xc] sm:$0xf]
      %v2938 = vld [vmem:[%s2933 + $0x10] sm:$0xf]
      %v2939 = vld [vmem:[%s2933 + $0x14] sm:$0xf]
      %v2940 = vld [vmem:[%s2933 + $0x18] sm:$0xf]
      %v2941 = vld [vmem:[%s2933 + $0x1c] sm:$0xf]
      %v2942 = vld [vmem:[%s2933 + $0x20] sm:$0xf]
      %v2943 = vld [vmem:[%s2933 + $0x24] sm:$0xf]
      %v2944 = vld [vmem:[%s2933 + $0x28] sm:$0xf]
      %v2945 = vld [vmem:[%s2933 + $0x2c] sm:$0xf]
      %v2946 = vld [vmem:[%s2933 + $0x30] sm:$0xf]
      %v2947 = vld [vmem:[%s2933 + $0x34] sm:$0xf]
      %v2948 = vld [vmem:[%s2933 + $0x38] sm:$0xf]
      %v2949 = vld [vmem:[%s2933 + $0x3c] sm:$0xf]
      %v2950 = vld [vmem:[%s2933 + $0x40] sm:$0xf]
      %v2951 = vld [vmem:[%s2933 + $0x44] sm:$0xf]
      %v2952 = vld [vmem:[%s2933 + $0x48] sm:$0xf]
      %v2953 = vld [vmem:[%s2933 + $0x4c] sm:$0xf]
      %v2954 = vld [vmem:[%s2933 + $0x50] sm:$0xf]
      %v2955 = vld [vmem:[%s2933 + $0x54] sm:$0xf]
      %v2956 = vld [vmem:[%s2933 + $0x58] sm:$0xf]
      %v2957 = vld [vmem:[%s2933 + $0x5c] sm:$0xf]
      %v2958 = vld [vmem:[%s2933 + $0x60] sm:$0xf]
      %v2959 = vld [vmem:[%s2933 + $0x64] sm:$0xf]
      %v2960 = vld [vmem:[%s2933 + $0x68] sm:$0xf]
      %v2961 = vld [vmem:[%s2933 + $0x6c] sm:$0xf]
      %v2962 = vld [vmem:[%s2933 + $0x70] sm:$0xf]
      %v2963 = vld [vmem:[%s2933 + $0x74] sm:$0xf]
      %v2964 = vld [vmem:[%s2933 + $0x78] sm:$0xf]
      %v2965 = vld [vmem:[%s2933 + $0x7c] sm:$0xf]
      %v2966 = vld [vmem:[%s2933 + $0x80] sm:$0xf]
      %v2967 = vld [vmem:[%s2933 + $0x84] sm:$0xf]
      %v2968 = vld [vmem:[%s2933 + $0x88] sm:$0xf]
      %v2969 = vld [vmem:[%s2933 + $0x8c] sm:$0xf]
      %v2970 = vld [vmem:[%s2933 + $0x90] sm:$0xf]
      %v2971 = vld [vmem:[%s2933 + $0x94] sm:$0xf]
      %v2972 = vld [vmem:[%s2933 + $0x98] sm:$0xf]
      %v2973 = vld [vmem:[%s2933 + $0x9c] sm:$0xf]
      %v2974 = vld [vmem:[%s2933 + $0xa0] sm:$0xf]
      %v2975 = vld [vmem:[%s2933 + $0xa4] sm:$0xf]
      %v2976 = vld [vmem:[%s2933 + $0xa8] sm:$0xf]
      %v2977 = vld [vmem:[%s2933 + $0xac] sm:$0xf]
      %v2978 = vld [vmem:[%s2933 + $0xb0] sm:$0xf]
      %v2979 = vld [vmem:[%s2933 + $0xb4] sm:$0xf]
      %v2980 = vld [vmem:[%s2933 + $0xb8] sm:$0xf]
      %v2981 = vld [vmem:[%s2933 + $0xbc] sm:$0xf]
      %v3030 = vunpack.c.l.b16 %v2934
      %v3031 = vunpack.c.l.b16 %v2935
      %v3032 = vunpack.c.l.b16 %v2936
      %v3033 = vunpack.c.l.b16 %v2937
      %v3034 = vunpack.c.l.b16 %v2938
      %v3035 = vunpack.c.l.b16 %v2939
      %v3036 = vunpack.c.l.b16 %v2940
      %v3037 = vunpack.c.l.b16 %v2941
      %v3038 = vunpack.c.l.b16 %v2942
      %v3039 = vunpack.c.l.b16 %v2943
      %v3040 = vunpack.c.l.b16 %v2944
      %v3041 = vunpack.c.l.b16 %v2945
      %v3042 = vunpack.c.l.b16 %v2946
      %v3043 = vunpack.c.l.b16 %v2947
      %v3044 = vunpack.c.l.b16 %v2948
      %v3045 = vunpack.c.l.b16 %v2949
      %v3046 = vunpack.c.l.b16 %v2950
      %v3047 = vunpack.c.l.b16 %v2951
      %v3048 = vunpack.c.l.b16 %v2952
      %v3049 = vunpack.c.l.b16 %v2953
      %v3050 = vunpack.c.l.b16 %v2954
      %v3051 = vunpack.c.l.b16 %v2955
      %v3052 = vunpack.c.l.b16 %v2956
      %v3053 = vunpack.c.l.b16 %v2957
      %v3054 = vunpack.c.l.b16 %v2958
      %v3055 = vunpack.c.l.b16 %v2959
      %v3056 = vunpack.c.l.b16 %v2960
      %v3057 = vunpack.c.l.b16 %v2961
      %v3058 = vunpack.c.l.b16 %v2962
      %v3059 = vunpack.c.l.b16 %v2963
      %v3060 = vunpack.c.l.b16 %v2964
      %v3061 = vunpack.c.l.b16 %v2965
      %v3062 = vunpack.c.l.b16 %v2966
      %v3063 = vunpack.c.l.b16 %v2967
      %v3064 = vunpack.c.l.b16 %v2968
      %v3065 = vunpack.c.l.b16 %v2969
      %v3066 = vunpack.c.l.b16 %v2970
      %v3067 = vunpack.c.l.b16 %v2971
      %v3068 = vunpack.c.l.b16 %v2972
      %v3069 = vunpack.c.l.b16 %v2973
      %v3070 = vunpack.c.l.b16 %v2974
      %v3071 = vunpack.c.l.b16 %v2975
      %v3072 = vunpack.c.l.b16 %v2976
      %v3073 = vunpack.c.l.b16 %v2977
      %v3074 = vunpack.c.l.b16 %v2978
      %v3075 = vunpack.c.l.b16 %v2979
      %v3076 = vunpack.c.l.b16 %v2980
      %v3077 = vunpack.c.l.b16 %v2981
      %v3078 = vpack.c.b16 %v3031, %v3030
      %v3079 = vpack.c.b16 %v3033, %v3032
      %v3080 = vpack.c.b16 %v3035, %v3034
      %v3081 = vpack.c.b16 %v3037, %v3036
      %v3082 = vpack.c.b16 %v3039, %v3038
      %v3083 = vpack.c.b16 %v3041, %v3040
      %v3084 = vpack.c.b16 %v3043, %v3042
      %v3085 = vpack.c.b16 %v3045, %v3044
      %v3086 = vpack.c.b16 %v3047, %v3046
      %v3087 = vpack.c.b16 %v3049, %v3048
      %v3088 = vpack.c.b16 %v3051, %v3050
      %v3089 = vpack.c.b16 %v3053, %v3052
      %v3090 = vpack.c.b16 %v3055, %v3054
      %v3091 = vpack.c.b16 %v3057, %v3056
      %v3092 = vpack.c.b16 %v3059, %v3058
      %v3093 = vpack.c.b16 %v3061, %v3060
      %v3094 = vpack.c.b16 %v3063, %v3062
      %v3095 = vpack.c.b16 %v3065, %v3064
      %v3096 = vpack.c.b16 %v3067, %v3066
      %v3097 = vpack.c.b16 %v3069, %v3068
      %v3098 = vpack.c.b16 %v3071, %v3070
      %v3099 = vpack.c.b16 %v3073, %v3072
      %v3100 = vpack.c.b16 %v3075, %v3074
      %v3101 = vpack.c.b16 %v3077, %v3076
      %3126 = vmatprep.subr.bf16.mxu0 0
      %3127 = vmatpush1.bf16.msra.mxu0 %v3078
      %3128 = vmatprep.subr.bf16.mxu0 0
      %3129 = vmatpush1.bf16.msra.mxu0 %v3079
      %3130 = vmatprep.subr.bf16.mxu0 0
      %3131 = vmatpush1.bf16.msra.mxu0 %v3080
      %3132 = vmatprep.subr.bf16.mxu0 0
      %3133 = vmatpush1.bf16.msra.mxu0 %v3081
      %3134 = vmatprep.subr.bf16.mxu0 0
      %3135 = vmatpush1.bf16.msra.mxu0 %v3082
      %3136 = vmatprep.subr.bf16.mxu0 0
      %3137 = vmatpush1.bf16.msra.mxu0 %v3083
      %3138 = vmatprep.subr.bf16.mxu0 0
      %3139 = vmatpush1.bf16.msra.mxu0 %v3084
      %3140 = vmatprep.subr.bf16.mxu0 0
      %3141 = vmatpush1.bf16.msra.mxu0 %v3085
      %3142 = vmatprep.subr.bf16.mxu0 0
      %3143 = vmatpush1.bf16.msra.mxu0 %v3086
      %3144 = vmatprep.subr.bf16.mxu0 0
      %3145 = vmatpush1.bf16.msra.mxu0 %v3087
      %3146 = vmatprep.subr.bf16.mxu0 0
      %3147 = vmatpush1.bf16.msra.mxu0 %v3088
      %3148 = vmatprep.subr.bf16.mxu0 0
      %3149 = vmatpush1.bf16.msra.mxu0 %v3089
      %3150 = vmatprep.subr.bf16.mxu0 0
      %3151 = vmatpush1.bf16.msra.mxu0 %v3090
      %3152 = vmatprep.subr.bf16.mxu0 0
      %3153 = vmatpush1.bf16.msra.mxu0 %v3091
      %3154 = vmatprep.subr.bf16.mxu0 0
      %3155 = vmatpush1.bf16.msra.mxu0 %v3092
      %3156 = vmatprep.subr.bf16.mxu0 0
      %3157 = vmatpush1.bf16.msra.mxu0 %v3093
      %3158 = vmatprep.mubr.bf16.mxu0 %v2886
      %3159 = vmatmul.mubr.bf16.gmra.mrb[0].mxu0 %v2885
      %v3160 = vpop.f32.mrb[0].mxu0
      %v3161 = vadd.f32 0.0, %v3160
      %v3162 = vpop.f32.mrb[0].mxu0
      %v3163 = vpop.f32.mrb[0].mxu0
      %v3164 = vadd.f32 0.0, %v3163
      %v3165 = vpop.f32.mrb[0].mxu0
      %3166 = vmatprep.mubr.bf16.mxu0 %v2889
      %3167 = vmatmul.mubr.bf16.gmra.mrb[0].mxu0 %v2888
      %v3168 = vpop.f32.mrb[0].mxu0
      %v3169 = vadd.f32 0.0, %v3168
      %v3170 = vpop.f32.mrb[0].mxu0
      %v3171 = vpop.f32.mrb[0].mxu0
      %v3172 = vadd.f32 0.0, %v3171
      %v3173 = vpop.f32.mrb[0].mxu0
      %3174 = vmatprep.mubr.bf16.mxu0 %v2892
      %3175 = vmatmul.mubr.bf16.gmra.mrb[0].mxu0 %v2891
      %v3176 = vpop.f32.mrb[0].mxu0
      %v3177 = vadd.f32 0.0, %v3176
      %v3178 = vpop.f32.mrb[0].mxu0
      %v3179 = vpop.f32.mrb[0].mxu0
      %v3180 = vadd.f32 0.0, %v3179
      %v3181 = vpop.f32.mrb[0].mxu0
      %3182 = vmatprep.mubr.bf16.mxu0 %v2895
      %3183 = vmatmul.mubr.bf16.gmra.mrb[0].mxu0 %v2894
      %v3184 = vpop.f32.mrb[0].mxu0
      %v3185 = vadd.f32 0.0, %v3184
      %v3186 = vpop.f32.mrb[0].mxu0
      %v3187 = vpop.f32.mrb[0].mxu0
      %v3188 = vadd.f32 0.0, %v3187
      %v3189 = vpop.f32.mrb[0].mxu0
      %3190 = vmatprep.mubr.bf16.mxu0 %v2898
      %3191 = vmatmul.mubr.bf16.gmra.mrb[0].mxu0 %v2897
      %v3192 = vpop.f32.mrb[0].mxu0
      %v3193 = vadd.f32 0.0, %v3192
      %v3194 = vpop.f32.mrb[0].mxu0
      %v3195 = vpop.f32.mrb[0].mxu0
      %v3196 = vadd.f32 0.0, %v3195
      %v3197 = vpop.f32.mrb[0].mxu0
      %3198 = vmatprep.mubr.bf16.mxu0 %v2901
      %3199 = vmatmul.mubr.bf16.gmra.mrb[0].mxu0 %v2900
      %v3200 = vpop.f32.mrb[0].mxu0
      %v3201 = vadd.f32 0.0, %v3200
      %v3202 = vpop.f32.mrb[0].mxu0
      %v3203 = vpop.f32.mrb[0].mxu0
      %v3204 = vadd.f32 0.0, %v3203
      %v3205 = vpop.f32.mrb[0].mxu0
      %3206 = vmatprep.mubr.bf16.mxu0 %v2904
      %3207 = vmatmul.mubr.bf16.gmra.mrb[0].mxu0 %v2903
      %v3208 = vpop.f32.mrb[0].mxu0
      %v3209 = vadd.f32 0.0, %v3208
      %v3210 = vpop.f32.mrb[0].mxu0
      %v3211 = vpop.f32.mrb[0].mxu0
      %v3212 = vadd.f32 0.0, %v3211
      %v3213 = vpop.f32.mrb[0].mxu0
      %3214 = vmatprep.mubr.bf16.mxu0 %v2907
      %3215 = vmatmul.mubr.bf16.gmra.mrb[0].mxu0 %v2906
      %v3216 = vpop.f32.mrb[0].mxu0
      %v3217 = vadd.f32 0.0, %v3216
      %v3218 = vpop.f32.mrb[0].mxu0
      %v3219 = vpop.f32.mrb[0].mxu0
      %v3220 = vadd.f32 0.0, %v3219
      %v3221 = vpop.f32.mrb[0].mxu0
      %3222 = vmatprep.mubr.bf16.mxu0 %v2910
      %3223 = vmatmul.mubr.bf16.gmra.mrb[0].mxu0 %v2909
      %v3224 = vpop.f32.mrb[0].mxu0
      %v3225 = vadd.f32 0.0, %v3224
      %v3226 = vpop.f32.mrb[0].mxu0
      %v3227 = vpop.f32.mrb[0].mxu0
      %v3228 = vadd.f32 0.0, %v3227
      %v3229 = vpop.f32.mrb[0].mxu0
      %3230 = vmatprep.mubr.bf16.mxu0 %v2913
      %3231 = vmatmul.mubr.bf16.gmra.mrb[0].mxu0 %v2912
      %v3232 = vpop.f32.mrb[0].mxu0
      %v3233 = vadd.f32 0.0, %v3232
      %v3234 = vpop.f32.mrb[0].mxu0
      %v3235 = vpop.f32.mrb[0].mxu0
      %v3236 = vadd.f32 0.0, %v3235
      %v3237 = vpop.f32.mrb[0].mxu0
      %3238 = vmatprep.mubr.bf16.mxu0 %v2916
      %3239 = vmatmul.mubr.bf16.gmra.mrb[0].mxu0 %v2915
      %v3240 = vpop.f32.mrb[0].mxu0
      %v3241 = vadd.f32 0.0, %v3240
      %v3242 = vpop.f32.mrb[0].mxu0
      %v3243 = vpop.f32.mrb[0].mxu0
      %v3244 = vadd.f32 0.0, %v3243
      %v3245 = vpop.f32.mrb[0].mxu0
      %3246 = vmatprep.mubr.bf16.mxu0 %v2919
      %3247 = vmatmul.mubr.bf16.gmra.mrb[0].mxu0 %v2918
      %v3248 = vpop.f32.mrb[0].mxu0
      %v3249 = vadd.f32 0.0, %v3248
      %v3250 = vpop.f32.mrb[0].mxu0
      %v3251 = vpop.f32.mrb[0].mxu0
      %v3252 = vadd.f32 0.0, %v3251
      %v3253 = vpop.f32.mrb[0].mxu0
      %3254 = vmatprep.mubr.bf16.mxu0 %v2922
      %3255 = vmatmul.mubr.bf16.gmra.mrb[0].mxu0 %v2921
      %v3256 = vpop.f32.mrb[0].mxu0
      %v3257 = vadd.f32 0.0, %v3256
      %v3258 = vpop.f32.mrb[0].mxu0
      %v3259 = vpop.f32.mrb[0].mxu0
      %v3260 = vadd.f32 0.0, %v3259
      %v3261 = vpop.f32.mrb[0].mxu0
      %3262 = vmatprep.mubr.bf16.mxu0 %v2925
      %3263 = vmatmul.mubr.bf16.gmra.mrb[0].mxu0 %v2924
      %v3264 = vpop.f32.mrb[0].mxu0
      %v3265 = vadd.f32 0.0, %v3264
      %v3266 = vpop.f32.mrb[0].mxu0
      %v3267 = vpop.f32.mrb[0].mxu0
      %v3268 = vadd.f32 0.0, %v3267
      %v3269 = vpop.f32.mrb[0].mxu0
      %3270 = vmatprep.mubr.bf16.mxu0 %v2928
      %3271 = vmatmul.mubr.bf16.gmra.mrb[0].mxu0 %v2927
      %v3272 = vpop.f32.mrb[0].mxu0
      %v3273 = vadd.f32 0.0, %v3272
      %v3274 = vpop.f32.mrb[0].mxu0
      %v3275 = vpop.f32.mrb[0].mxu0
      %v3276 = vadd.f32 0.0, %v3275
      %v3277 = vpop.f32.mrb[0].mxu0
      %3278 = vmatprep.mubr.bf16.mxu0 %v2931
      %3279 = vmatmul.mubr.bf16.gmra.mrb[0].mxu0 %v2930
      %v3280 = vpop.f32.mrb[0].mxu0
      %v3281 = vadd.f32 0.0, %v3280
      %v3282 = vpop.f32.mrb[0].mxu0
      %v3283 = vpop.f32.mrb[0].mxu0
      %v3284 = vadd.f32 0.0, %v3283
      %v3285 = vpop.f32.mrb[0].mxu0
      %3286 = vdwg.mxu0
      %3287 = vmatprep.subr.bf16.mxu0 0
      %3288 = vmatpush1.bf16.msra.mxu0 %v3094
      %3289 = vmatprep.subr.bf16.mxu0 0
      %3290 = vmatpush1.bf16.msra.mxu0 %v3095
      %3291 = vmatprep.subr.bf16.mxu0 0
      %3292 = vmatpush1.bf16.msra.mxu0 %v3096
      %3293 = vmatprep.subr.bf16.mxu0 0
      %3294 = vmatpush1.bf16.msra.mxu0 %v3097
      %3295 = vmatprep.subr.bf16.mxu0 0
      %3296 = vmatpush1.bf16.msra.mxu0 %v3098
      %3297 = vmatprep.subr.bf16.mxu0 0
      %3298 = vmatpush1.bf16.msra.mxu0 %v3099
      %3299 = vmatprep.subr.bf16.mxu0 0
      %3300 = vmatpush1.bf16.msra.mxu0 %v3100
      %3301 = vmatprep.subr.bf16.mxu0 0
      %3302 = vmatpush1.bf16.msra.mxu0 %v3101
      %3303 = vmatprep.subr.bf16.mxu0 0
      %3304 = vmatpush1.bf16.msra.mxu0 0
      %3305 = vmatprep.subr.bf16.mxu0 0
      %3306 = vmatpush1.bf16.msra.mxu0 0
      %3307 = vmatprep.subr.bf16.mxu0 0
      %3308 = vmatpush1.bf16.msra.mxu0 0
      %3309 = vmatprep.subr.bf16.mxu0 0
      %3310 = vmatpush1.bf16.msra.mxu0 0
      %3311 = vmatprep.subr.bf16.mxu0 0
      %3312 = vmatpush1.bf16.msra.mxu0 0
      %3313 = vmatprep.subr.bf16.mxu0 0
      %3314 = vmatpush1.bf16.msra.mxu0 0
      %3315 = vmatprep.subr.bf16.mxu0 0
      %3316 = vmatpush1.bf16.msra.mxu0 0
      %3317 = vmatprep.subr.bf16.mxu0 0
      %3318 = vmatpush1.bf16.msra.mxu0 0
      %3319 = vmatprep.mubr.bf16.mxu0 0
      %3320 = vmatmul.mubr.bf16.gmra.mrb[0].mxu0 %v2887
      %v3321 = vpop.f32.mrb[0].mxu0
      %v3322 = vadd.f32 %v3161, %v3321
      %v3323 = vpop.f32.mrb[0].mxu0
      %v3324 = vpop.f32.mrb[0].mxu0
      %v3325 = vadd.f32 %v3164, %v3324
      %v3326 = vpop.f32.mrb[0].mxu0
      %3327 = vmatprep.mubr.bf16.mxu0 0
      %3328 = vmatmul.mubr.bf16.gmra.mrb[0].mxu0 %v2890
      %v3329 = vpop.f32.mrb[0].mxu0
      %v3330 = vadd.f32 %v3169, %v3329
      %v3331 = vpop.f32.mrb[0].mxu0
      %v3332 = vpop.f32.mrb[0].mxu0
      %v3333 = vadd.f32 %v3172, %v3332
      %v3334 = vpop.f32.mrb[0].mxu0
      %3335 = vmatprep.mubr.bf16.mxu0 0
      %3336 = vmatmul.mubr.bf16.gmra.mrb[0].mxu0 %v2893
      %v3337 = vpop.f32.mrb[0].mxu0
      %v3338 = vadd.f32 %v3177, %v3337
      %v3339 = vpop.f32.mrb[0].mxu0
      %v3340 = vpop.f32.mrb[0].mxu0
      %v3341 = vadd.f32 %v3180, %v3340
      %v3342 = vpop.f32.mrb[0].mxu0
      %3343 = vmatprep.mubr.bf16.mxu0 0
      %3344 = vmatmul.mubr.bf16.gmra.mrb[0].mxu0 %v2896
      %v3345 = vpop.f32.mrb[0].mxu0
      %v3346 = vadd.f32 %v3185, %v3345
      %v3347 = vpop.f32.mrb[0].mxu0
      %v3348 = vpop.f32.mrb[0].mxu0
      %v3349 = vadd.f32 %v3188, %v3348
      %v3350 = vpop.f32.mrb[0].mxu0
      %3351 = vmatprep.mubr.bf16.mxu0 0
      %3352 = vmatmul.mubr.bf16.gmra.mrb[0].mxu0 %v2899
      %v3353 = vpop.f32.mrb[0].mxu0
      %v3354 = vadd.f32 %v3193, %v3353
      %v3355 = vpop.f32.mrb[0].mxu0
      %v3356 = vpop.f32.mrb[0].mxu0
      %v3357 = vadd.f32 %v3196, %v3356
      %v3358 = vpop.f32.mrb[0].mxu0
      %3359 = vmatprep.mubr.bf16.mxu0 0
      %3360 = vmatmul.mubr.bf16.gmra.mrb[0].mxu0 %v2902
      %v3361 = vpop.f32.mrb[0].mxu0
      %v3362 = vadd.f32 %v3201, %v3361
      %v3363 = vpop.f32.mrb[0].mxu0
      %v3364 = vpop.f32.mrb[0].mxu0
      %v3365 = vadd.f32 %v3204, %v3364
      %v3366 = vpop.f32.mrb[0].mxu0
      %3367 = vmatprep.mubr.bf16.mxu0 0
      %3368 = vmatmul.mubr.bf16.gmra.mrb[0].mxu0 %v2905
      %v3369 = vpop.f32.mrb[0].mxu0
      %v3370 = vadd.f32 %v3209, %v3369
      %v3371 = vpop.f32.mrb[0].mxu0
      %v3372 = vpop.f32.mrb[0].mxu0
      %v3373 = vadd.f32 %v3212, %v3372
      %v3374 = vpop.f32.mrb[0].mxu0
      %3375 = vmatprep.mubr.bf16.mxu0 0
      %3376 = vmatmul.mubr.bf16.gmra.mrb[0].mxu0 %v2908
      %v3377 = vpop.f32.mrb[0].mxu0
      %v3378 = vadd.f32 %v3217, %v3377
      %v3379 = vpop.f32.mrb[0].mxu0
      %v3380 = vpop.f32.mrb[0].mxu0
      %v3381 = vadd.f32 %v3220, %v3380
      %v3382 = vpop.f32.mrb[0].mxu0
      %3383 = vmatprep.mubr.bf16.mxu0 0
      %3384 = vmatmul.mubr.bf16.gmra.mrb[0].mxu0 %v2911
      %v3385 = vpop.f32.mrb[0].mxu0
      %v3386 = vadd.f32 %v3225, %v3385
      %v3387 = vpop.f32.mrb[0].mxu0
      %v3388 = vpop.f32.mrb[0].mxu0
      %v3389 = vadd.f32 %v3228, %v3388
      %v3390 = vpop.f32.mrb[0].mxu0
      %3391 = vmatprep.mubr.bf16.mxu0 0
      %3392 = vmatmul.mubr.bf16.gmra.mrb[0].mxu0 %v2914
      %v3393 = vpop.f32.mrb[0].mxu0
      %v3394 = vadd.f32 %v3233, %v3393
      %v3395 = vpop.f32.mrb[0].mxu0
      %v3396 = vpop.f32.mrb[0].mxu0
      %v3397 = vadd.f32 %v3236, %v3396
      %v3398 = vpop.f32.mrb[0].mxu0
      %3399 = vmatprep.mubr.bf16.mxu0 0
      %3400 = vmatmul.mubr.bf16.gmra.mrb[0].mxu0 %v2917
      %v3401 = vpop.f32.mrb[0].mxu0
      %v3402 = vadd.f32 %v3241, %v3401
      %v3403 = vpop.f32.mrb[0].mxu0
      %v3404 = vpop.f32.mrb[0].mxu0
      %v3405 = vadd.f32 %v3244, %v3404
      %v3406 = vpop.f32.mrb[0].mxu0
      %3407 = vmatprep.mubr.bf16.mxu0 0
      %3408 = vmatmul.mubr.bf16.gmra.mrb[0].mxu0 %v2920
      %v3409 = vpop.f32.mrb[0].mxu0
      %v3410 = vadd.f32 %v3249, %v3409
      %v3411 = vpop.f32.mrb[0].mxu0
      %v3412 = vpop.f32.mrb[0].mxu0
      %v3413 = vadd.f32 %v3252, %v3412
      %v3414 = vpop.f32.mrb[0].mxu0
      %3415 = vmatprep.mubr.bf16.mxu0 0
      %3416 = vmatmul.mubr.bf16.gmra.mrb[0].mxu0 %v2923
      %v3417 = vpop.f32.mrb[0].mxu0
      %v3418 = vadd.f32 %v3257, %v3417
      %v3419 = vpop.f32.mrb[0].mxu0
      %v3420 = vpop.f32.mrb[0].mxu0
      %v3421 = vadd.f32 %v3260, %v3420
      %v3422 = vpop.f32.mrb[0].mxu0
      %3423 = vmatprep.mubr.bf16.mxu0 0
      %3424 = vmatmul.mubr.bf16.gmra.mrb[0].mxu0 %v2926
      %v3425 = vpop.f32.mrb[0].mxu0
      %v3426 = vadd.f32 %v3265, %v3425
      %v3427 = vpop.f32.mrb[0].mxu0
      %v3428 = vpop.f32.mrb[0].mxu0
      %v3429 = vadd.f32 %v3268, %v3428
      %v3430 = vpop.f32.mrb[0].mxu0
      %3431 = vmatprep.mubr.bf16.mxu0 0
      %3432 = vmatmul.mubr.bf16.gmra.mrb[0].mxu0 %v2929
      %v3433 = vpop.f32.mrb[0].mxu0
      %v3434 = vadd.f32 %v3273, %v3433
      %v3435 = vpop.f32.mrb[0].mxu0
      %v3436 = vpop.f32.mrb[0].mxu0
      %v3437 = vadd.f32 %v3276, %v3436
      %v3438 = vpop.f32.mrb[0].mxu0
      %3439 = vmatprep.mubr.bf16.mxu0 0
      %3440 = vmatmul.mubr.bf16.gmra.mrb[0].mxu0 %v2932
      %v3441 = vpop.f32.mrb[0].mxu0
      %v3442 = vadd.f32 %v3281, %v3441
      %v3443 = vpop.f32.mrb[0].mxu0
      %v3444 = vpop.f32.mrb[0].mxu0
      %v3445 = vadd.f32 %v3284, %v3444
      %v3446 = vpop.f32.mrb[0].mxu0
      %3447 = vdwg.mxu0
      %v3496 = vunpack.c.l.b16 %v2837
      %v3497 = vunpack.c.l.b16 %v2838
      %v3498 = vunpack.c.l.b16 %v2839
      %v3499 = vunpack.c.l.b16 %v2840
      %v3500 = vunpack.c.l.b16 %v2841
      %v3501 = vunpack.c.l.b16 %v2842
      %v3502 = vunpack.c.l.b16 %v2843
      %v3503 = vunpack.c.l.b16 %v2844
      %v3504 = vunpack.c.l.b16 %v2845
      %v3505 = vunpack.c.l.b16 %v2846
      %v3506 = vunpack.c.l.b16 %v2847
      %v3507 = vunpack.c.l.b16 %v2848
      %v3508 = vunpack.c.l.b16 %v2849
      %v3509 = vunpack.c.l.b16 %v2850
      %v3510 = vunpack.c.l.b16 %v2851
      %v3511 = vunpack.c.l.b16 %v2852
      %v3512 = vunpack.c.l.b16 %v2853
      %v3513 = vunpack.c.l.b16 %v2854
      %v3514 = vunpack.c.l.b16 %v2855
      %v3515 = vunpack.c.l.b16 %v2856
      %v3516 = vunpack.c.l.b16 %v2857
      %v3517 = vunpack.c.l.b16 %v2858
      %v3518 = vunpack.c.l.b16 %v2859
      %v3519 = vunpack.c.l.b16 %v2860
      %v3520 = vunpack.c.l.b16 %v2861
      %v3521 = vunpack.c.l.b16 %v2862
      %v3522 = vunpack.c.l.b16 %v2863
      %v3523 = vunpack.c.l.b16 %v2864
      %v3524 = vunpack.c.l.b16 %v2865
      %v3525 = vunpack.c.l.b16 %v2866
      %v3526 = vunpack.c.l.b16 %v2867
      %v3527 = vunpack.c.l.b16 %v2868
      %v3528 = vunpack.c.l.b16 %v2869
      %v3529 = vunpack.c.l.b16 %v2870
      %v3530 = vunpack.c.l.b16 %v2871
      %v3531 = vunpack.c.l.b16 %v2872
      %v3532 = vunpack.c.l.b16 %v2873
      %v3533 = vunpack.c.l.b16 %v2874
      %v3534 = vunpack.c.l.b16 %v2875
      %v3535 = vunpack.c.l.b16 %v2876
      %v3536 = vunpack.c.l.b16 %v2877
      %v3537 = vunpack.c.l.b16 %v2878
      %v3538 = vunpack.c.l.b16 %v2879
      %v3539 = vunpack.c.l.b16 %v2880
      %v3540 = vunpack.c.l.b16 %v2881
      %v3541 = vunpack.c.l.b16 %v2882
      %v3542 = vunpack.c.l.b16 %v2883
      %v3543 = vunpack.c.l.b16 %v2884
      %v3544 = vpack.c.b16 %v3497, %v3496
      %v3545 = vpack.c.b16 %v3499, %v3498
      %v3546 = vpack.c.b16 %v3501, %v3500
      %v3547 = vpack.c.b16 %v3503, %v3502
      %v3548 = vpack.c.b16 %v3505, %v3504
      %v3549 = vpack.c.b16 %v3507, %v3506
      %v3550 = vpack.c.b16 %v3509, %v3508
      %v3551 = vpack.c.b16 %v3511, %v3510
      %v3552 = vpack.c.b16 %v3513, %v3512
      %v3553 = vpack.c.b16 %v3515, %v3514
      %v3554 = vpack.c.b16 %v3517, %v3516
      %v3555 = vpack.c.b16 %v3519, %v3518
      %v3556 = vpack.c.b16 %v3521, %v3520
      %v3557 = vpack.c.b16 %v3523, %v3522
      %v3558 = vpack.c.b16 %v3525, %v3524
      %v3559 = vpack.c.b16 %v3527, %v3526
      %v3560 = vpack.c.b16 %v3529, %v3528
      %v3561 = vpack.c.b16 %v3531, %v3530
      %v3562 = vpack.c.b16 %v3533, %v3532
      %v3563 = vpack.c.b16 %v3535, %v3534
      %v3564 = vpack.c.b16 %v3537, %v3536
      %v3565 = vpack.c.b16 %v3539, %v3538
      %v3566 = vpack.c.b16 %v3541, %v3540
      %v3567 = vpack.c.b16 %v3543, %v3542
      %3592 = vmatprep.subr.bf16.mxu0 0
      %3593 = vmatpush1.bf16.msra.mxu0 %v3544
      %3594 = vmatprep.subr.bf16.mxu0 0
      %3595 = vmatpush1.bf16.msra.mxu0 %v3545
      %3596 = vmatprep.subr.bf16.mxu0 0
      %3597 = vmatpush1.bf16.msra.mxu0 %v3546
      %3598 = vmatprep.subr.bf16.mxu0 0
      %3599 = vmatpush1.bf16.msra.mxu0 %v3547
      %3600 = vmatprep.subr.bf16.mxu0 0
      %3601 = vmatpush1.bf16.msra.mxu0 %v3548
      %3602 = vmatprep.subr.bf16.mxu0 0
      %3603 = vmatpush1.bf16.msra.mxu0 %v3549
      %3604 = vmatprep.subr.bf16.mxu0 0
      %3605 = vmatpush1.bf16.msra.mxu0 %v3550
      %3606 = vmatprep.subr.bf16.mxu0 0
      %3607 = vmatpush1.bf16.msra.mxu0 %v3551
      %3608 = vmatprep.subr.bf16.mxu0 0
      %3609 = vmatpush1.bf16.msra.mxu0 %v3552
      %3610 = vmatprep.subr.bf16.mxu0 0
      %3611 = vmatpush1.bf16.msra.mxu0 %v3553
      %3612 = vmatprep.subr.bf16.mxu0 0
      %3613 = vmatpush1.bf16.msra.mxu0 %v3554
      %3614 = vmatprep.subr.bf16.mxu0 0
      %3615 = vmatpush1.bf16.msra.mxu0 %v3555
      %3616 = vmatprep.subr.bf16.mxu0 0
      %3617 = vmatpush1.bf16.msra.mxu0 %v3556
      %3618 = vmatprep.subr.bf16.mxu0 0
      %3619 = vmatpush1.bf16.msra.mxu0 %v3557
      %3620 = vmatprep.subr.bf16.mxu0 0
      %3621 = vmatpush1.bf16.msra.mxu0 %v3558
      %3622 = vmatprep.subr.bf16.mxu0 0
      %3623 = vmatpush1.bf16.msra.mxu0 %v3559
      %3624 = vmatprep.mubr.bf16.mxu0 %v2790
      %3625 = vmatmul.mubr.bf16.gmra.mrb[0].mxu0 %v2789
      %v3626 = vpop.f32.mrb[0].mxu0
      %v3627 = vadd.f32 %v3322, %v3626
      %v3628 = vpop.f32.mrb[0].mxu0
      %v3629 = vpop.f32.mrb[0].mxu0
      %v3630 = vadd.f32 %v3325, %v3629
      %v3631 = vpop.f32.mrb[0].mxu0
      %3632 = vmatprep.mubr.bf16.mxu0 %v2793
      %3633 = vmatmul.mubr.bf16.gmra.mrb[0].mxu0 %v2792
      %v3634 = vpop.f32.mrb[0].mxu0
      %v3635 = vadd.f32 %v3330, %v3634
      %v3636 = vpop.f32.mrb[0].mxu0
      %v3637 = vpop.f32.mrb[0].mxu0
      %v3638 = vadd.f32 %v3333, %v3637
      %v3639 = vpop.f32.mrb[0].mxu0
      %3640 = vmatprep.mubr.bf16.mxu0 %v2796
      %3641 = vmatmul.mubr.bf16.gmra.mrb[0].mxu0 %v2795
      %v3642 = vpop.f32.mrb[0].mxu0
      %v3643 = vadd.f32 %v3338, %v3642
      %v3644 = vpop.f32.mrb[0].mxu0
      %v3645 = vpop.f32.mrb[0].mxu0
      %v3646 = vadd.f32 %v3341, %v3645
      %v3647 = vpop.f32.mrb[0].mxu0
      %3648 = vmatprep.mubr.bf16.mxu0 %v2799
      %3649 = vmatmul.mubr.bf16.gmra.mrb[0].mxu0 %v2798
      %v3650 = vpop.f32.mrb[0].mxu0
      %v3651 = vadd.f32 %v3346, %v3650
      %v3652 = vpop.f32.mrb[0].mxu0
      %v3653 = vpop.f32.mrb[0].mxu0
      %v3654 = vadd.f32 %v3349, %v3653
      %v3655 = vpop.f32.mrb[0].mxu0
      %3656 = vmatprep.mubr.bf16.mxu0 %v2802
      %3657 = vmatmul.mubr.bf16.gmra.mrb[0].mxu0 %v2801
      %v3658 = vpop.f32.mrb[0].mxu0
      %v3659 = vadd.f32 %v3354, %v3658
      %v3660 = vpop.f32.mrb[0].mxu0
      %v3661 = vpop.f32.mrb[0].mxu0
      %v3662 = vadd.f32 %v3357, %v3661
      %v3663 = vpop.f32.mrb[0].mxu0
      %3664 = vmatprep.mubr.bf16.mxu0 %v2805
      %3665 = vmatmul.mubr.bf16.gmra.mrb[0].mxu0 %v2804
      %v3666 = vpop.f32.mrb[0].mxu0
      %v3667 = vadd.f32 %v3362, %v3666
      %v3668 = vpop.f32.mrb[0].mxu0
      %v3669 = vpop.f32.mrb[0].mxu0
      %v3670 = vadd.f32 %v3365, %v3669
      %v3671 = vpop.f32.mrb[0].mxu0
      %3672 = vmatprep.mubr.bf16.mxu0 %v2808
      %3673 = vmatmul.mubr.bf16.gmra.mrb[0].mxu0 %v2807
      %v3674 = vpop.f32.mrb[0].mxu0
      %v3675 = vadd.f32 %v3370, %v3674
      %v3676 = vpop.f32.mrb[0].mxu0
      %v3677 = vpop.f32.mrb[0].mxu0
      %v3678 = vadd.f32 %v3373, %v3677
      %v3679 = vpop.f32.mrb[0].mxu0
      %3680 = vmatprep.mubr.bf16.mxu0 %v2811
      %3681 = vmatmul.mubr.bf16.gmra.mrb[0].mxu0 %v2810
      %v3682 = vpop.f32.mrb[0].mxu0
      %v3683 = vadd.f32 %v3378, %v3682
      %v3684 = vpop.f32.mrb[0].mxu0
      %v3685 = vpop.f32.mrb[0].mxu0
      %v3686 = vadd.f32 %v3381, %v3685
      %v3687 = vpop.f32.mrb[0].mxu0
      %3688 = vmatprep.mubr.bf16.mxu0 %v2814
      %3689 = vmatmul.mubr.bf16.gmra.mrb[0].mxu0 %v2813
      %v3690 = vpop.f32.mrb[0].mxu0
      %v3691 = vadd.f32 %v3386, %v3690
      %v3692 = vpop.f32.mrb[0].mxu0
      %v3693 = vpop.f32.mrb[0].mxu0
      %v3694 = vadd.f32 %v3389, %v3693
      %v3695 = vpop.f32.mrb[0].mxu0
      %3696 = vmatprep.mubr.bf16.mxu0 %v2817
      %3697 = vmatmul.mubr.bf16.gmra.mrb[0].mxu0 %v2816
      %v3698 = vpop.f32.mrb[0].mxu0
      %v3699 = vadd.f32 %v3394, %v3698
      %v3700 = vpop.f32.mrb[0].mxu0
      %v3701 = vpop.f32.mrb[0].mxu0
      %v3702 = vadd.f32 %v3397, %v3701
      %v3703 = vpop.f32.mrb[0].mxu0
      %3704 = vmatprep.mubr.bf16.mxu0 %v2820
      %3705 = vmatmul.mubr.bf16.gmra.mrb[0].mxu0 %v2819
      %v3706 = vpop.f32.mrb[0].mxu0
      %v3707 = vadd.f32 %v3402, %v3706
      %v3708 = vpop.f32.mrb[0].mxu0
      %v3709 = vpop.f32.mrb[0].mxu0
      %v3710 = vadd.f32 %v3405, %v3709
      %v3711 = vpop.f32.mrb[0].mxu0
      %3712 = vmatprep.mubr.bf16.mxu0 %v2823
      %3713 = vmatmul.mubr.bf16.gmra.mrb[0].mxu0 %v2822
      %v3714 = vpop.f32.mrb[0].mxu0
      %v3715 = vadd.f32 %v3410, %v3714
      %v3716 = vpop.f32.mrb[0].mxu0
      %v3717 = vpop.f32.mrb[0].mxu0
      %v3718 = vadd.f32 %v3413, %v3717
      %v3719 = vpop.f32.mrb[0].mxu0
      %3720 = vmatprep.mubr.bf16.mxu0 %v2826
      %3721 = vmatmul.mubr.bf16.gmra.mrb[0].mxu0 %v2825
      %v3722 = vpop.f32.mrb[0].mxu0
      %v3723 = vadd.f32 %v3418, %v3722
      %v3724 = vpop.f32.mrb[0].mxu0
      %v3725 = vpop.f32.mrb[0].mxu0
      %v3726 = vadd.f32 %v3421, %v3725
      %v3727 = vpop.f32.mrb[0].mxu0
      %3728 = vmatprep.mubr.bf16.mxu0 %v2829
      %3729 = vmatmul.mubr.bf16.gmra.mrb[0].mxu0 %v2828
      %v3730 = vpop.f32.mrb[0].mxu0
      %v3731 = vadd.f32 %v3426, %v3730
      %v3732 = vpop.f32.mrb[0].mxu0
      %v3733 = vpop.f32.mrb[0].mxu0
      %v3734 = vadd.f32 %v3429, %v3733
      %v3735 = vpop.f32.mrb[0].mxu0
      %3736 = vmatprep.mubr.bf16.mxu0 %v2832
      %3737 = vmatmul.mubr.bf16.gmra.mrb[0].mxu0 %v2831
      %v3738 = vpop.f32.mrb[0].mxu0
      %v3739 = vadd.f32 %v3434, %v3738
      %v3740 = vpop.f32.mrb[0].mxu0
      %v3741 = vpop.f32.mrb[0].mxu0
      %v3742 = vadd.f32 %v3437, %v3741
      %v3743 = vpop.f32.mrb[0].mxu0
      %3744 = vmatprep.mubr.bf16.mxu0 %v2835
      %3745 = vmatmul.mubr.bf16.gmra.mrb[0].mxu0 %v2834
      %v3746 = vpop.f32.mrb[0].mxu0
      %v3747 = vadd.f32 %v3442, %v3746
      %v3748 = vpop.f32.mrb[0].mxu0
      %v3749 = vpop.f32.mrb[0].mxu0
      %v3750 = vadd.f32 %v3445, %v3749
      %v3751 = vpop.f32.mrb[0].mxu0
      %3752 = vdwg.mxu0
      %3753 = vmatprep.subr.bf16.mxu0 0
      %3754 = vmatpush1.bf16.msra.mxu0 %v3560
      %3755 = vmatprep.subr.bf16.mxu0 0
      %3756 = vmatpush1.bf16.msra.mxu0 %v3561
      %3757 = vmatprep.subr.bf16.mxu0 0
      %3758 = vmatpush1.bf16.msra.mxu0 %v3562
      %3759 = vmatprep.subr.bf16.mxu0 0
      %3760 = vmatpush1.bf16.msra.mxu0 %v3563
      %3761 = vmatprep.subr.bf16.mxu0 0
      %3762 = vmatpush1.bf16.msra.mxu0 %v3564
      %3763 = vmatprep.subr.bf16.mxu0 0
      %3764 = vmatpush1.bf16.msra.mxu0 %v3565
      %3765 = vmatprep.subr.bf16.mxu0 0
      %3766 = vmatpush1.bf16.msra.mxu0 %v3566
      %3767 = vmatprep.subr.bf16.mxu0 0
      %3768 = vmatpush1.bf16.msra.mxu0 %v3567
      %3769 = vmatprep.subr.bf16.mxu0 0
      %3770 = vmatpush1.bf16.msra.mxu0 0
      %3771 = vmatprep.subr.bf16.mxu0 0
      %3772 = vmatpush1.bf16.msra.mxu0 0
      %3773 = vmatprep.subr.bf16.mxu0 0
      %3774 = vmatpush1.bf16.msra.mxu0 0
      %3775 = vmatprep.subr.bf16.mxu0 0
      %3776 = vmatpush1.bf16.msra.mxu0 0
      %3777 = vmatprep.subr.bf16.mxu0 0
      %3778 = vmatpush1.bf16.msra.mxu0 0
      %3779 = vmatprep.subr.bf16.mxu0 0
      %3780 = vmatpush1.bf16.msra.mxu0 0
      %3781 = vmatprep.subr.bf16.mxu0 0
      %3782 = vmatpush1.bf16.msra.mxu0 0
      %3783 = vmatprep.subr.bf16.mxu0 0
      %3784 = vmatpush1.bf16.msra.mxu0 0
      %3785 = vmatprep.mubr.bf16.mxu0 0
      %3786 = vmatmul.mubr.bf16.gmra.mrb[0].mxu0 %v2791
      %v3787 = vpop.f32.mrb[0].mxu0
      %v3788 = vadd.f32 %v3627, %v3787
      %v3789 = vpop.f32.mrb[0].mxu0
      %v3790 = vpop.f32.mrb[0].mxu0
      %v3791 = vadd.f32 %v3630, %v3790
      %v3792 = vpop.f32.mrb[0].mxu0
      %3793 = vmatprep.mubr.bf16.mxu0 0
      %3794 = vmatmul.mubr.bf16.gmra.mrb[0].mxu0 %v2794
      %v3795 = vpop.f32.mrb[0].mxu0
      %v3796 = vadd.f32 %v3635, %v3795
      %v3797 = vpop.f32.mrb[0].mxu0
      %v3798 = vpop.f32.mrb[0].mxu0
      %v3799 = vadd.f32 %v3638, %v3798
      %v3800 = vpop.f32.mrb[0].mxu0
      %3801 = vmatprep.mubr.bf16.mxu0 0
      %3802 = vmatmul.mubr.bf16.gmra.mrb[0].mxu0 %v2797
      %v3803 = vpop.f32.mrb[0].mxu0
      %v3804 = vadd.f32 %v3643, %v3803
      %v3805 = vpop.f32.mrb[0].mxu0
      %v3806 = vpop.f32.mrb[0].mxu0
      %v3807 = vadd.f32 %v3646, %v3806
      %v3808 = vpop.f32.mrb[0].mxu0
      %3809 = vmatprep.mubr.bf16.mxu0 0
      %3810 = vmatmul.mubr.bf16.gmra.mrb[0].mxu0 %v2800
      %v3811 = vpop.f32.mrb[0].mxu0
      %v3812 = vadd.f32 %v3651, %v3811
      %v3813 = vpop.f32.mrb[0].mxu0
      %v3814 = vpop.f32.mrb[0].mxu0
      %v3815 = vadd.f32 %v3654, %v3814
      %v3816 = vpop.f32.mrb[0].mxu0
      %3817 = vmatprep.mubr.bf16.mxu0 0
      %3818 = vmatmul.mubr.bf16.gmra.mrb[0].mxu0 %v2803
      %v3819 = vpop.f32.mrb[0].mxu0
      %v3820 = vadd.f32 %v3659, %v3819
      %v3821 = vpop.f32.mrb[0].mxu0
      %v3822 = vpop.f32.mrb[0].mxu0
      %v3823 = vadd.f32 %v3662, %v3822
      %v3824 = vpop.f32.mrb[0].mxu0
      %3825 = vmatprep.mubr.bf16.mxu0 0
      %3826 = vmatmul.mubr.bf16.gmra.mrb[0].mxu0 %v2806
      %v3827 = vpop.f32.mrb[0].mxu0
      %v3828 = vadd.f32 %v3667, %v3827
      %v3829 = vpop.f32.mrb[0].mxu0
      %v3830 = vpop.f32.mrb[0].mxu0
      %v3831 = vadd.f32 %v3670, %v3830
      %v3832 = vpop.f32.mrb[0].mxu0
      %3833 = vmatprep.mubr.bf16.mxu0 0
      %3834 = vmatmul.mubr.bf16.gmra.mrb[0].mxu0 %v2809
      %v3835 = vpop.f32.mrb[0].mxu0
      %v3836 = vadd.f32 %v3675, %v3835
      %v3837 = vpop.f32.mrb[0].mxu0
      %v3838 = vpop.f32.mrb[0].mxu0
      %v3839 = vadd.f32 %v3678, %v3838
      %v3840 = vpop.f32.mrb[0].mxu0
      %3841 = vmatprep.mubr.bf16.mxu0 0
      %3842 = vmatmul.mubr.bf16.gmra.mrb[0].mxu0 %v2812
      %v3843 = vpop.f32.mrb[0].mxu0
      %v3844 = vadd.f32 %v3683, %v3843
      %v3845 = vpop.f32.mrb[0].mxu0
      %v3846 = vpop.f32.mrb[0].mxu0
      %v3847 = vadd.f32 %v3686, %v3846
      %v3848 = vpop.f32.mrb[0].mxu0
      %3849 = vmatprep.mubr.bf16.mxu0 0
      %3850 = vmatmul.mubr.bf16.gmra.mrb[0].mxu0 %v2815
      %v3851 = vpop.f32.mrb[0].mxu0
      %v3852 = vadd.f32 %v3691, %v3851
      %v3853 = vpop.f32.mrb[0].mxu0
      %v3854 = vpop.f32.mrb[0].mxu0
      %v3855 = vadd.f32 %v3694, %v3854
      %v3856 = vpop.f32.mrb[0].mxu0
      %3857 = vmatprep.mubr.bf16.mxu0 0
      %3858 = vmatmul.mubr.bf16.gmra.mrb[0].mxu0 %v2818
      %v3859 = vpop.f32.mrb[0].mxu0
      %v3860 = vadd.f32 %v3699, %v3859
      %v3861 = vpop.f32.mrb[0].mxu0
      %v3862 = vpop.f32.mrb[0].mxu0
      %v3863 = vadd.f32 %v3702, %v3862
      %v3864 = vpop.f32.mrb[0].mxu0
      %3865 = vmatprep.mubr.bf16.mxu0 0
      %3866 = vmatmul.mubr.bf16.gmra.mrb[0].mxu0 %v2821
      %v3867 = vpop.f32.mrb[0].mxu0
      %v3868 = vadd.f32 %v3707, %v3867
      %v3869 = vpop.f32.mrb[0].mxu0
      %v3870 = vpop.f32.mrb[0].mxu0
      %v3871 = vadd.f32 %v3710, %v3870
      %v3872 = vpop.f32.mrb[0].mxu0
      %3873 = vmatprep.mubr.bf16.mxu0 0
      %3874 = vmatmul.mubr.bf16.gmra.mrb[0].mxu0 %v2824
      %v3875 = vpop.f32.mrb[0].mxu0
      %v3876 = vadd.f32 %v3715, %v3875
      %v3877 = vpop.f32.mrb[0].mxu0
      %v3878 = vpop.f32.mrb[0].mxu0
      %v3879 = vadd.f32 %v3718, %v3878
      %v3880 = vpop.f32.mrb[0].mxu0
      %3881 = vmatprep.mubr.bf16.mxu0 0
      %3882 = vmatmul.mubr.bf16.gmra.mrb[0].mxu0 %v2827
      %v3883 = vpop.f32.mrb[0].mxu0
      %v3884 = vadd.f32 %v3723, %v3883
      %v3885 = vpop.f32.mrb[0].mxu0
      %v3886 = vpop.f32.mrb[0].mxu0
      %v3887 = vadd.f32 %v3726, %v3886
      %v3888 = vpop.f32.mrb[0].mxu0
      %3889 = vmatprep.mubr.bf16.mxu0 0
      %3890 = vmatmul.mubr.bf16.gmra.mrb[0].mxu0 %v2830
      %v3891 = vpop.f32.mrb[0].mxu0
      %v3892 = vadd.f32 %v3731, %v3891
      %v3893 = vpop.f32.mrb[0].mxu0
      %v3894 = vpop.f32.mrb[0].mxu0
      %v3895 = vadd.f32 %v3734, %v3894
      %v3896 = vpop.f32.mrb[0].mxu0
      %3897 = vmatprep.mubr.bf16.mxu0 0
      %3898 = vmatmul.mubr.bf16.gmra.mrb[0].mxu0 %v2833
      %v3899 = vpop.f32.mrb[0].mxu0
      %v3900 = vadd.f32 %v3739, %v3899
      %v3901 = vpop.f32.mrb[0].mxu0
      %v3902 = vpop.f32.mrb[0].mxu0
      %v3903 = vadd.f32 %v3742, %v3902
      %v3904 = vpop.f32.mrb[0].mxu0
      %3905 = vmatprep.mubr.bf16.mxu0 0
      %3906 = vmatmul.mubr.bf16.gmra.mrb[0].mxu0 %v2836
      %v3907 = vpop.f32.mrb[0].mxu0
      %v3908 = vadd.f32 %v3747, %v3907
      %v3909 = vpop.f32.mrb[0].mxu0
      %v3910 = vpop.f32.mrb[0].mxu0
      %v3911 = vadd.f32 %v3750, %v3910
      %v3912 = vpop.f32.mrb[0].mxu0
      %3913 = vdwg.mxu0
      %s3914 = scalar_lea.vmem [#allocation3], 48
      %v3915 = vld [vmem:[%s3914] sm:$0xff]
      %v3916 = vld [vmem:[%s3914 + $0x8] sm:$0xff]
      %v3917 = vld [vmem:[%s3914 + $0x10] sm:$0xff]
      %v3918 = vld [vmem:[%s3914 + $0x18] sm:$0xff]
      %v3919 = vld [vmem:[%s3914 + $0x20] sm:$0xff]
      %v3920 = vld [vmem:[%s3914 + $0x28] sm:$0xff]
      %v3921 = vld [vmem:[%s3914 + $0x30] sm:$0xff]
      %v3922 = vld [vmem:[%s3914 + $0x38] sm:$0xff]
      %v3923 = vld [vmem:[%s3914 + $0x40] sm:$0xff]
      %v3924 = vld [vmem:[%s3914 + $0x48] sm:$0xff]
      %v3925 = vld [vmem:[%s3914 + $0x50] sm:$0xff]
      %v3926 = vld [vmem:[%s3914 + $0x58] sm:$0xff]
      %v3927 = vld [vmem:[%s3914 + $0x60] sm:$0xff]
      %v3928 = vld [vmem:[%s3914 + $0x68] sm:$0xff]
      %v3929 = vld [vmem:[%s3914 + $0x70] sm:$0xff]
      %v3930 = vld [vmem:[%s3914 + $0x78] sm:$0xff]
      %v3931 = vld [vmem:[%s3914 + $0x80] sm:$0xff]
      %v3932 = vld [vmem:[%s3914 + $0x88] sm:$0xff]
      %v3933 = vld [vmem:[%s3914 + $0x90] sm:$0xff]
      %v3934 = vld [vmem:[%s3914 + $0x98] sm:$0xff]
      %v3935 = vld [vmem:[%s3914 + $0xa0] sm:$0xff]
      %v3936 = vld [vmem:[%s3914 + $0xa8] sm:$0xff]
      %v3937 = vld [vmem:[%s3914 + $0xb0] sm:$0xff]
      %v3938 = vld [vmem:[%s3914 + $0xb8] sm:$0xff]
      %v3939 = vld [vmem:[%s3914 + $0xc0] sm:$0xff]
      %v3940 = vld [vmem:[%s3914 + $0xc8] sm:$0xff]
      %v3941 = vld [vmem:[%s3914 + $0xd0] sm:$0xff]
      %v3942 = vld [vmem:[%s3914 + $0xd8] sm:$0xff]
      %v3943 = vld [vmem:[%s3914 + $0xe0] sm:$0xff]
      %v3944 = vld [vmem:[%s3914 + $0xe8] sm:$0xff]
      %v3945 = vld [vmem:[%s3914 + $0xf0] sm:$0xff]
      %v3946 = vld [vmem:[%s3914 + $0xf8] sm:$0xff]
      %v3947 = vld [vmem:[%s3914 + $0x100] sm:$0xff]
      %v3948 = vld [vmem:[%s3914 + $0x108] sm:$0xff]
      %v3949 = vld [vmem:[%s3914 + $0x110] sm:$0xff]
      %v3950 = vld [vmem:[%s3914 + $0x118] sm:$0xff]
      %v3951 = vld [vmem:[%s3914 + $0x120] sm:$0xff]
      %v3952 = vld [vmem:[%s3914 + $0x128] sm:$0xff]
      %v3953 = vld [vmem:[%s3914 + $0x130] sm:$0xff]
      %v3954 = vld [vmem:[%s3914 + $0x138] sm:$0xff]
      %v3955 = vld [vmem:[%s3914 + $0x140] sm:$0xff]
      %v3956 = vld [vmem:[%s3914 + $0x148] sm:$0xff]
      %v3957 = vld [vmem:[%s3914 + $0x150] sm:$0xff]
      %v3958 = vld [vmem:[%s3914 + $0x158] sm:$0xff]
      %v3959 = vld [vmem:[%s3914 + $0x160] sm:$0xff]
      %v3960 = vld [vmem:[%s3914 + $0x168] sm:$0xff]
      %v3961 = vld [vmem:[%s3914 + $0x170] sm:$0xff]
      %v3962 = vld [vmem:[%s3914 + $0x178] sm:$0xff]
      %s3963 = scalar_lea.vmem %s4, 384
      %v3964 = vld [vmem:[%s3963] sm:$0xf]
      %v3965 = vld [vmem:[%s3963 + $0x4] sm:$0xf]
      %v3966 = vld [vmem:[%s3963 + $0x8] sm:$0xf]
      %v3967 = vld [vmem:[%s3963 + $0xc] sm:$0xf]
      %v3968 = vld [vmem:[%s3963 + $0x10] sm:$0xf]
      %v3969 = vld [vmem:[%s3963 + $0x14] sm:$0xf]
      %v3970 = vld [vmem:[%s3963 + $0x18] sm:$0xf]
      %v3971 = vld [vmem:[%s3963 + $0x1c] sm:$0xf]
      %v3972 = vld [vmem:[%s3963 + $0x20] sm:$0xf]
      %v3973 = vld [vmem:[%s3963 + $0x24] sm:$0xf]
      %v3974 = vld [vmem:[%s3963 + $0x28] sm:$0xf]
      %v3975 = vld [vmem:[%s3963 + $0x2c] sm:$0xf]
      %v3976 = vld [vmem:[%s3963 + $0x30] sm:$0xf]
      %v3977 = vld [vmem:[%s3963 + $0x34] sm:$0xf]
      %v3978 = vld [vmem:[%s3963 + $0x38] sm:$0xf]
      %v3979 = vld [vmem:[%s3963 + $0x3c] sm:$0xf]
      %v3980 = vld [vmem:[%s3963 + $0x40] sm:$0xf]
      %v3981 = vld [vmem:[%s3963 + $0x44] sm:$0xf]
      %v3982 = vld [vmem:[%s3963 + $0x48] sm:$0xf]
      %v3983 = vld [vmem:[%s3963 + $0x4c] sm:$0xf]
      %v3984 = vld [vmem:[%s3963 + $0x50] sm:$0xf]
      %v3985 = vld [vmem:[%s3963 + $0x54] sm:$0xf]
      %v3986 = vld [vmem:[%s3963 + $0x58] sm:$0xf]
      %v3987 = vld [vmem:[%s3963 + $0x5c] sm:$0xf]
      %v3988 = vld [vmem:[%s3963 + $0x60] sm:$0xf]
      %v3989 = vld [vmem:[%s3963 + $0x64] sm:$0xf]
      %v3990 = vld [vmem:[%s3963 + $0x68] sm:$0xf]
      %v3991 = vld [vmem:[%s3963 + $0x6c] sm:$0xf]
      %v3992 = vld [vmem:[%s3963 + $0x70] sm:$0xf]
      %v3993 = vld [vmem:[%s3963 + $0x74] sm:$0xf]
      %v3994 = vld [vmem:[%s3963 + $0x78] sm:$0xf]
      %v3995 = vld [vmem:[%s3963 + $0x7c] sm:$0xf]
      %v3996 = vld [vmem:[%s3963 + $0x80] sm:$0xf]
      %v3997 = vld [vmem:[%s3963 + $0x84] sm:$0xf]
      %v3998 = vld [vmem:[%s3963 + $0x88] sm:$0xf]
      %v3999 = vld [vmem:[%s3963 + $0x8c] sm:$0xf]
      %v4000 = vld [vmem:[%s3963 + $0x90] sm:$0xf]
      %v4001 = vld [vmem:[%s3963 + $0x94] sm:$0xf]
      %v4002 = vld [vmem:[%s3963 + $0x98] sm:$0xf]
      %v4003 = vld [vmem:[%s3963 + $0x9c] sm:$0xf]
      %v4004 = vld [vmem:[%s3963 + $0xa0] sm:$0xf]
      %v4005 = vld [vmem:[%s3963 + $0xa4] sm:$0xf]
      %v4006 = vld [vmem:[%s3963 + $0xa8] sm:$0xf]
      %v4007 = vld [vmem:[%s3963 + $0xac] sm:$0xf]
      %v4008 = vld [vmem:[%s3963 + $0xb0] sm:$0xf]
      %v4009 = vld [vmem:[%s3963 + $0xb4] sm:$0xf]
      %v4010 = vld [vmem:[%s3963 + $0xb8] sm:$0xf]
      %v4011 = vld [vmem:[%s3963 + $0xbc] sm:$0xf]
      %v4060 = vunpack.c.l.b16 %v3964
      %v4061 = vunpack.c.l.b16 %v3965
      %v4062 = vunpack.c.l.b16 %v3966
      %v4063 = vunpack.c.l.b16 %v3967
      %v4064 = vunpack.c.l.b16 %v3968
      %v4065 = vunpack.c.l.b16 %v3969
      %v4066 = vunpack.c.l.b16 %v3970
      %v4067 = vunpack.c.l.b16 %v3971
      %v4068 = vunpack.c.l.b16 %v3972
      %v4069 = vunpack.c.l.b16 %v3973
      %v4070 = vunpack.c.l.b16 %v3974
      %v4071 = vunpack.c.l.b16 %v3975
      %v4072 = vunpack.c.l.b16 %v3976
      %v4073 = vunpack.c.l.b16 %v3977
      %v4074 = vunpack.c.l.b16 %v3978
      %v4075 = vunpack.c.l.b16 %v3979
      %v4076 = vunpack.c.l.b16 %v3980
      %v4077 = vunpack.c.l.b16 %v3981
      %v4078 = vunpack.c.l.b16 %v3982
      %v4079 = vunpack.c.l.b16 %v3983
      %v4080 = vunpack.c.l.b16 %v3984
      %v4081 = vunpack.c.l.b16 %v3985
      %v4082 = vunpack.c.l.b16 %v3986
      %v4083 = vunpack.c.l.b16 %v3987
      %v4084 = vunpack.c.l.b16 %v3988
      %v4085 = vunpack.c.l.b16 %v3989
      %v4086 = vunpack.c.l.b16 %v3990
      %v4087 = vunpack.c.l.b16 %v3991
      %v4088 = vunpack.c.l.b16 %v3992
      %v4089 = vunpack.c.l.b16 %v3993
      %v4090 = vunpack.c.l.b16 %v3994
      %v4091 = vunpack.c.l.b16 %v3995
      %v4092 = vunpack.c.l.b16 %v3996
      %v4093 = vunpack.c.l.b16 %v3997
      %v4094 = vunpack.c.l.b16 %v3998
      %v4095 = vunpack.c.l.b16 %v3999
      %v4096 = vunpack.c.l.b16 %v4000
      %v4097 = vunpack.c.l.b16 %v4001
      %v4098 = vunpack.c.l.b16 %v4002
      %v4099 = vunpack.c.l.b16 %v4003
      %v4100 = vunpack.c.l.b16 %v4004
      %v4101 = vunpack.c.l.b16 %v4005
      %v4102 = vunpack.c.l.b16 %v4006
      %v4103 = vunpack.c.l.b16 %v4007
      %v4104 = vunpack.c.l.b16 %v4008
      %v4105 = vunpack.c.l.b16 %v4009
      %v4106 = vunpack.c.l.b16 %v4010
      %v4107 = vunpack.c.l.b16 %v4011
      %v4108 = vpack.c.b16 %v4061, %v4060
      %v4109 = vpack.c.b16 %v4063, %v4062
      %v4110 = vpack.c.b16 %v4065, %v4064
      %v4111 = vpack.c.b16 %v4067, %v4066
      %v4112 = vpack.c.b16 %v4069, %v4068
      %v4113 = vpack.c.b16 %v4071, %v4070
      %v4114 = vpack.c.b16 %v4073, %v4072
      %v4115 = vpack.c.b16 %v4075, %v4074
      %v4116 = vpack.c.b16 %v4077, %v4076
      %v4117 = vpack.c.b16 %v4079, %v4078
      %v4118 = vpack.c.b16 %v4081, %v4080
      %v4119 = vpack.c.b16 %v4083, %v4082
      %v4120 = vpack.c.b16 %v4085, %v4084
      %v4121 = vpack.c.b16 %v4087, %v4086
      %v4122 = vpack.c.b16 %v4089, %v4088
      %v4123 = vpack.c.b16 %v4091, %v4090
      %v4124 = vpack.c.b16 %v4093, %v4092
      %v4125 = vpack.c.b16 %v4095, %v4094
      %v4126 = vpack.c.b16 %v4097, %v4096
      %v4127 = vpack.c.b16 %v4099, %v4098
      %v4128 = vpack.c.b16 %v4101, %v4100
      %v4129 = vpack.c.b16 %v4103, %v4102
      %v4130 = vpack.c.b16 %v4105, %v4104
      %v4131 = vpack.c.b16 %v4107, %v4106
      %4156 = vmatprep.subr.bf16.mxu0 0
      %4157 = vmatpush1.bf16.msra.mxu0 %v4108
      %4158 = vmatprep.subr.bf16.mxu0 0
      %4159 = vmatpush1.bf16.msra.mxu0 %v4109
      %4160 = vmatprep.subr.bf16.mxu0 0
      %4161 = vmatpush1.bf16.msra.mxu0 %v4110
      %4162 = vmatprep.subr.bf16.mxu0 0
      %4163 = vmatpush1.bf16.msra.mxu0 %v4111
      %4164 = vmatprep.subr.bf16.mxu0 0
      %4165 = vmatpush1.bf16.msra.mxu0 %v4112
      %4166 = vmatprep.subr.bf16.mxu0 0
      %4167 = vmatpush1.bf16.msra.mxu0 %v4113
      %4168 = vmatprep.subr.bf16.mxu0 0
      %4169 = vmatpush1.bf16.msra.mxu0 %v4114
      %4170 = vmatprep.subr.bf16.mxu0 0
      %4171 = vmatpush1.bf16.msra.mxu0 %v4115
      %4172 = vmatprep.subr.bf16.mxu0 0
      %4173 = vmatpush1.bf16.msra.mxu0 %v4116
      %4174 = vmatprep.subr.bf16.mxu0 0
      %4175 = vmatpush1.bf16.msra.mxu0 %v4117
      %4176 = vmatprep.subr.bf16.mxu0 0
      %4177 = vmatpush1.bf16.msra.mxu0 %v4118
      %4178 = vmatprep.subr.bf16.mxu0 0
      %4179 = vmatpush1.bf16.msra.mxu0 %v4119
      %4180 = vmatprep.subr.bf16.mxu0 0
      %4181 = vmatpush1.bf16.msra.mxu0 %v4120
      %4182 = vmatprep.subr.bf16.mxu0 0
      %4183 = vmatpush1.bf16.msra.mxu0 %v4121
      %4184 = vmatprep.subr.bf16.mxu0 0
      %4185 = vmatpush1.bf16.msra.mxu0 %v4122
      %4186 = vmatprep.subr.bf16.mxu0 0
      %4187 = vmatpush1.bf16.msra.mxu0 %v4123
      %4188 = vmatprep.mubr.bf16.mxu0 %v3916
      %4189 = vmatmul.mubr.bf16.gmra.mrb[0].mxu0 %v3915
      %v4190 = vpop.f32.mrb[0].mxu0
      %v4191 = vadd.f32 0.0, %v4190
      %v4192 = vpop.f32.mrb[0].mxu0
      %v4193 = vpop.f32.mrb[0].mxu0
      %v4194 = vadd.f32 0.0, %v4193
      %v4195 = vpop.f32.mrb[0].mxu0
      %4196 = vmatprep.mubr.bf16.mxu0 %v3919
      %4197 = vmatmul.mubr.bf16.gmra.mrb[0].mxu0 %v3918
      %v4198 = vpop.f32.mrb[0].mxu0
      %v4199 = vadd.f32 0.0, %v4198
      %v4200 = vpop.f32.mrb[0].mxu0
      %v4201 = vpop.f32.mrb[0].mxu0
      %v4202 = vadd.f32 0.0, %v4201
      %v4203 = vpop.f32.mrb[0].mxu0
      %4204 = vmatprep.mubr.bf16.mxu0 %v3922
      %4205 = vmatmul.mubr.bf16.gmra.mrb[0].mxu0 %v3921
      %v4206 = vpop.f32.mrb[0].mxu0
      %v4207 = vadd.f32 0.0, %v4206
      %v4208 = vpop.f32.mrb[0].mxu0
      %v4209 = vpop.f32.mrb[0].mxu0
      %v4210 = vadd.f32 0.0, %v4209
      %v4211 = vpop.f32.mrb[0].mxu0
      %4212 = vmatprep.mubr.bf16.mxu0 %v3925
      %4213 = vmatmul.mubr.bf16.gmra.mrb[0].mxu0 %v3924
      %v4214 = vpop.f32.mrb[0].mxu0
      %v4215 = vadd.f32 0.0, %v4214
      %v4216 = vpop.f32.mrb[0].mxu0
      %v4217 = vpop.f32.mrb[0].mxu0
      %v4218 = vadd.f32 0.0, %v4217
      %v4219 = vpop.f32.mrb[0].mxu0
      %4220 = vmatprep.mubr.bf16.mxu0 %v3928
      %4221 = vmatmul.mubr.bf16.gmra.mrb[0].mxu0 %v3927
      %v4222 = vpop.f32.mrb[0].mxu0
      %v4223 = vadd.f32 0.0, %v4222
      %v4224 = vpop.f32.mrb[0].mxu0
      %v4225 = vpop.f32.mrb[0].mxu0
      %v4226 = vadd.f32 0.0, %v4225
      %v4227 = vpop.f32.mrb[0].mxu0
      %4228 = vmatprep.mubr.bf16.mxu0 %v3931
      %4229 = vmatmul.mubr.bf16.gmra.mrb[0].mxu0 %v3930
      %v4230 = vpop.f32.mrb[0].mxu0
      %v4231 = vadd.f32 0.0, %v4230
      %v4232 = vpop.f32.mrb[0].mxu0
      %v4233 = vpop.f32.mrb[0].mxu0
      %v4234 = vadd.f32 0.0, %v4233
      %v4235 = vpop.f32.mrb[0].mxu0
      %4236 = vmatprep.mubr.bf16.mxu0 %v3934
      %4237 = vmatmul.mubr.bf16.gmra.mrb[0].mxu0 %v3933
      %v4238 = vpop.f32.mrb[0].mxu0
      %v4239 = vadd.f32 0.0, %v4238
      %v4240 = vpop.f32.mrb[0].mxu0
      %v4241 = vpop.f32.mrb[0].mxu0
      %v4242 = vadd.f32 0.0, %v4241
      %v4243 = vpop.f32.mrb[0].mxu0
      %4244 = vmatprep.mubr.bf16.mxu0 %v3937
      %4245 = vmatmul.mubr.bf16.gmra.mrb[0].mxu0 %v3936
      %v4246 = vpop.f32.mrb[0].mxu0
      %v4247 = vadd.f32 0.0, %v4246
      %v4248 = vpop.f32.mrb[0].mxu0
      %v4249 = vpop.f32.mrb[0].mxu0
      %v4250 = vadd.f32 0.0, %v4249
      %v4251 = vpop.f32.mrb[0].mxu0
      %4252 = vmatprep.mubr.bf16.mxu0 %v3940
      %4253 = vmatmul.mubr.bf16.gmra.mrb[0].mxu0 %v3939
      %v4254 = vpop.f32.mrb[0].mxu0
      %v4255 = vadd.f32 0.0, %v4254
      %v4256 = vpop.f32.mrb[0].mxu0
      %v4257 = vpop.f32.mrb[0].mxu0
      %v4258 = vadd.f32 0.0, %v4257
      %v4259 = vpop.f32.mrb[0].mxu0
      %4260 = vmatprep.mubr.bf16.mxu0 %v3943
      %4261 = vmatmul.mubr.bf16.gmra.mrb[0].mxu0 %v3942
      %v4262 = vpop.f32.mrb[0].mxu0
      %v4263 = vadd.f32 0.0, %v4262
      %v4264 = vpop.f32.mrb[0].mxu0
      %v4265 = vpop.f32.mrb[0].mxu0
      %v4266 = vadd.f32 0.0, %v4265
      %v4267 = vpop.f32.mrb[0].mxu0
      %4268 = vmatprep.mubr.bf16.mxu0 %v3946
      %4269 = vmatmul.mubr.bf16.gmra.mrb[0].mxu0 %v3945
      %v4270 = vpop.f32.mrb[0].mxu0
      %v4271 = vadd.f32 0.0, %v4270
      %v4272 = vpop.f32.mrb[0].mxu0
      %v4273 = vpop.f32.mrb[0].mxu0
      %v4274 = vadd.f32 0.0, %v4273
      %v4275 = vpop.f32.mrb[0].mxu0
      %4276 = vmatprep.mubr.bf16.mxu0 %v3949
      %4277 = vmatmul.mubr.bf16.gmra.mrb[0].mxu0 %v3948
      %v4278 = vpop.f32.mrb[0].mxu0
      %v4279 = vadd.f32 0.0, %v4278
      %v4280 = vpop.f32.mrb[0].mxu0
      %v4281 = vpop.f32.mrb[0].mxu0
      %v4282 = vadd.f32 0.0, %v4281
      %v4283 = vpop.f32.mrb[0].mxu0
      %4284 = vmatprep.mubr.bf16.mxu0 %v3952
      %4285 = vmatmul.mubr.bf16.gmra.mrb[0].mxu0 %v3951
      %v4286 = vpop.f32.mrb[0].mxu0
      %v4287 = vadd.f32 0.0, %v4286
      %v4288 = vpop.f32.mrb[0].mxu0
      %v4289 = vpop.f32.mrb[0].mxu0
      %v4290 = vadd.f32 0.0, %v4289
      %v4291 = vpop.f32.mrb[0].mxu0
      %4292 = vmatprep.mubr.bf16.mxu0 %v3955
      %4293 = vmatmul.mubr.bf16.gmra.mrb[0].mxu0 %v3954
      %v4294 = vpop.f32.mrb[0].mxu0
      %v4295 = vadd.f32 0.0, %v4294
      %v4296 = vpop.f32.mrb[0].mxu0
      %v4297 = vpop.f32.mrb[0].mxu0
      %v4298 = vadd.f32 0.0, %v4297
      %v4299 = vpop.f32.mrb[0].mxu0
      %4300 = vmatprep.mubr.bf16.mxu0 %v3958
      %4301 = vmatmul.mubr.bf16.gmra.mrb[0].mxu0 %v3957
      %v4302 = vpop.f32.mrb[0].mxu0
      %v4303 = vadd.f32 0.0, %v4302
      %v4304 = vpop.f32.mrb[0].mxu0
      %v4305 = vpop.f32.mrb[0].mxu0
      %v4306 = vadd.f32 0.0, %v4305
      %v4307 = vpop.f32.mrb[0].mxu0
      %4308 = vmatprep.mubr.bf16.mxu0 %v3961
      %4309 = vmatmul.mubr.bf16.gmra.mrb[0].mxu0 %v3960
      %v4310 = vpop.f32.mrb[0].mxu0
      %v4311 = vadd.f32 0.0, %v4310
      %v4312 = vpop.f32.mrb[0].mxu0
      %v4313 = vpop.f32.mrb[0].mxu0
      %v4314 = vadd.f32 0.0, %v4313
      %v4315 = vpop.f32.mrb[0].mxu0
      %4316 = vdwg.mxu0
      %4317 = vmatprep.subr.bf16.mxu0 0
      %4318 = vmatpush1.bf16.msra.mxu0 %v4124
      %4319 = vmatprep.subr.bf16.mxu0 0
      %4320 = vmatpush1.bf16.msra.mxu0 %v4125
      %4321 = vmatprep.subr.bf16.mxu0 0
      %4322 = vmatpush1.bf16.msra.mxu0 %v4126
      %4323 = vmatprep.subr.bf16.mxu0 0
      %4324 = vmatpush1.bf16.msra.mxu0 %v4127
      %4325 = vmatprep.subr.bf16.mxu0 0
      %4326 = vmatpush1.bf16.msra.mxu0 %v4128
      %4327 = vmatprep.subr.bf16.mxu0 0
      %4328 = vmatpush1.bf16.msra.mxu0 %v4129
      %4329 = vmatprep.subr.bf16.mxu0 0
      %4330 = vmatpush1.bf16.msra.mxu0 %v4130
      %4331 = vmatprep.subr.bf16.mxu0 0
      %4332 = vmatpush1.bf16.msra.mxu0 %v4131
      %4333 = vmatprep.subr.bf16.mxu0 0
      %4334 = vmatpush1.bf16.msra.mxu0 0
      %4335 = vmatprep.subr.bf16.mxu0 0
      %4336 = vmatpush1.bf16.msra.mxu0 0
      %4337 = vmatprep.subr.bf16.mxu0 0
      %4338 = vmatpush1.bf16.msra.mxu0 0
      %4339 = vmatprep.subr.bf16.mxu0 0
      %4340 = vmatpush1.bf16.msra.mxu0 0
      %4341 = vmatprep.subr.bf16.mxu0 0
      %4342 = vmatpush1.bf16.msra.mxu0 0
      %4343 = vmatprep.subr.bf16.mxu0 0
      %4344 = vmatpush1.bf16.msra.mxu0 0
      %4345 = vmatprep.subr.bf16.mxu0 0
      %4346 = vmatpush1.bf16.msra.mxu0 0
      %4347 = vmatprep.subr.bf16.mxu0 0
      %4348 = vmatpush1.bf16.msra.mxu0 0
      %4349 = vmatprep.mubr.bf16.mxu0 0
      %4350 = vmatmul.mubr.bf16.gmra.mrb[0].mxu0 %v3917
      %v4351 = vpop.f32.mrb[0].mxu0
      %v4352 = vadd.f32 %v4191, %v4351
      %v4353 = vpop.f32.mrb[0].mxu0
      %v4354 = vpop.f32.mrb[0].mxu0
      %v4355 = vadd.f32 %v4194, %v4354
      %v4356 = vpop.f32.mrb[0].mxu0
      %4357 = vmatprep.mubr.bf16.mxu0 0
      %4358 = vmatmul.mubr.bf16.gmra.mrb[0].mxu0 %v3920
      %v4359 = vpop.f32.mrb[0].mxu0
      %v4360 = vadd.f32 %v4199, %v4359
      %v4361 = vpop.f32.mrb[0].mxu0
      %v4362 = vpop.f32.mrb[0].mxu0
      %v4363 = vadd.f32 %v4202, %v4362
      %v4364 = vpop.f32.mrb[0].mxu0
      %4365 = vmatprep.mubr.bf16.mxu0 0
      %4366 = vmatmul.mubr.bf16.gmra.mrb[0].mxu0 %v3923
      %v4367 = vpop.f32.mrb[0].mxu0
      %v4368 = vadd.f32 %v4207, %v4367
      %v4369 = vpop.f32.mrb[0].mxu0
      %v4370 = vpop.f32.mrb[0].mxu0
      %v4371 = vadd.f32 %v4210, %v4370
      %v4372 = vpop.f32.mrb[0].mxu0
      %4373 = vmatprep.mubr.bf16.mxu0 0
      %4374 = vmatmul.mubr.bf16.gmra.mrb[0].mxu0 %v3926
      %v4375 = vpop.f32.mrb[0].mxu0
      %v4376 = vadd.f32 %v4215, %v4375
      %v4377 = vpop.f32.mrb[0].mxu0
      %v4378 = vpop.f32.mrb[0].mxu0
      %v4379 = vadd.f32 %v4218, %v4378
      %v4380 = vpop.f32.mrb[0].mxu0
      %4381 = vmatprep.mubr.bf16.mxu0 0
      %4382 = vmatmul.mubr.bf16.gmra.mrb[0].mxu0 %v3929
      %v4383 = vpop.f32.mrb[0].mxu0
      %v4384 = vadd.f32 %v4223, %v4383
      %v4385 = vpop.f32.mrb[0].mxu0
      %v4386 = vpop.f32.mrb[0].mxu0
      %v4387 = vadd.f32 %v4226, %v4386
      %v4388 = vpop.f32.mrb[0].mxu0
      %4389 = vmatprep.mubr.bf16.mxu0 0
      %4390 = vmatmul.mubr.bf16.gmra.mrb[0].mxu0 %v3932
      %v4391 = vpop.f32.mrb[0].mxu0
      %v4392 = vadd.f32 %v4231, %v4391
      %v4393 = vpop.f32.mrb[0].mxu0
      %v4394 = vpop.f32.mrb[0].mxu0
      %v4395 = vadd.f32 %v4234, %v4394
      %v4396 = vpop.f32.mrb[0].mxu0
      %4397 = vmatprep.mubr.bf16.mxu0 0
      %4398 = vmatmul.mubr.bf16.gmra.mrb[0].mxu0 %v3935
      %v4399 = vpop.f32.mrb[0].mxu0
      %v4400 = vadd.f32 %v4239, %v4399
      %v4401 = vpop.f32.mrb[0].mxu0
      %v4402 = vpop.f32.mrb[0].mxu0
      %v4403 = vadd.f32 %v4242, %v4402
      %v4404 = vpop.f32.mrb[0].mxu0
      %4405 = vmatprep.mubr.bf16.mxu0 0
      %4406 = vmatmul.mubr.bf16.gmra.mrb[0].mxu0 %v3938
      %v4407 = vpop.f32.mrb[0].mxu0
      %v4408 = vadd.f32 %v4247, %v4407
      %v4409 = vpop.f32.mrb[0].mxu0
      %v4410 = vpop.f32.mrb[0].mxu0
      %v4411 = vadd.f32 %v4250, %v4410
      %v4412 = vpop.f32.mrb[0].mxu0
      %4413 = vmatprep.mubr.bf16.mxu0 0
      %4414 = vmatmul.mubr.bf16.gmra.mrb[0].mxu0 %v3941
      %v4415 = vpop.f32.mrb[0].mxu0
      %v4416 = vadd.f32 %v4255, %v4415
      %v4417 = vpop.f32.mrb[0].mxu0
      %v4418 = vpop.f32.mrb[0].mxu0
      %v4419 = vadd.f32 %v4258, %v4418
      %v4420 = vpop.f32.mrb[0].mxu0
      %4421 = vmatprep.mubr.bf16.mxu0 0
      %4422 = vmatmul.mubr.bf16.gmra.mrb[0].mxu0 %v3944
      %v4423 = vpop.f32.mrb[0].mxu0
      %v4424 = vadd.f32 %v4263, %v4423
      %v4425 = vpop.f32.mrb[0].mxu0
      %v4426 = vpop.f32.mrb[0].mxu0
      %v4427 = vadd.f32 %v4266, %v4426
      %v4428 = vpop.f32.mrb[0].mxu0
      %4429 = vmatprep.mubr.bf16.mxu0 0
      %4430 = vmatmul.mubr.bf16.gmra.mrb[0].mxu0 %v3947
      %v4431 = vpop.f32.mrb[0].mxu0
      %v4432 = vadd.f32 %v4271, %v4431
      %v4433 = vpop.f32.mrb[0].mxu0
      %v4434 = vpop.f32.mrb[0].mxu0
      %v4435 = vadd.f32 %v4274, %v4434
      %v4436 = vpop.f32.mrb[0].mxu0
      %4437 = vmatprep.mubr.bf16.mxu0 0
      %4438 = vmatmul.mubr.bf16.gmra.mrb[0].mxu0 %v3950
      %v4439 = vpop.f32.mrb[0].mxu0
      %v4440 = vadd.f32 %v4279, %v4439
      %v4441 = vpop.f32.mrb[0].mxu0
      %v4442 = vpop.f32.mrb[0].mxu0
      %v4443 = vadd.f32 %v4282, %v4442
      %v4444 = vpop.f32.mrb[0].mxu0
      %4445 = vmatprep.mubr.bf16.mxu0 0
      %4446 = vmatmul.mubr.bf16.gmra.mrb[0].mxu0 %v3953
      %v4447 = vpop.f32.mrb[0].mxu0
      %v4448 = vadd.f32 %v4287, %v4447
      %v4449 = vpop.f32.mrb[0].mxu0
      %v4450 = vpop.f32.mrb[0].mxu0
      %v4451 = vadd.f32 %v4290, %v4450
      %v4452 = vpop.f32.mrb[0].mxu0
      %4453 = vmatprep.mubr.bf16.mxu0 0
      %4454 = vmatmul.mubr.bf16.gmra.mrb[0].mxu0 %v3956
      %v4455 = vpop.f32.mrb[0].mxu0
      %v4456 = vadd.f32 %v4295, %v4455
      %v4457 = vpop.f32.mrb[0].mxu0
      %v4458 = vpop.f32.mrb[0].mxu0
      %v4459 = vadd.f32 %v4298, %v4458
      %v4460 = vpop.f32.mrb[0].mxu0
      %4461 = vmatprep.mubr.bf16.mxu0 0
      %4462 = vmatmul.mubr.bf16.gmra.mrb[0].mxu0 %v3959
      %v4463 = vpop.f32.mrb[0].mxu0
      %v4464 = vadd.f32 %v4303, %v4463
      %v4465 = vpop.f32.mrb[0].mxu0
      %v4466 = vpop.f32.mrb[0].mxu0
      %v4467 = vadd.f32 %v4306, %v4466
      %v4468 = vpop.f32.mrb[0].mxu0
      %4469 = vmatprep.mubr.bf16.mxu0 0
      %4470 = vmatmul.mubr.bf16.gmra.mrb[0].mxu0 %v3962
      %v4471 = vpop.f32.mrb[0].mxu0
      %v4472 = vadd.f32 %v4311, %v4471
      %v4473 = vpop.f32.mrb[0].mxu0
      %v4474 = vpop.f32.mrb[0].mxu0
      %v4475 = vadd.f32 %v4314, %v4474
      %v4476 = vpop.f32.mrb[0].mxu0
      %4477 = vdwg.mxu0
      %v4478 = vadd.f32 %v3788, %v4352
      %v4479 = vadd.f32 %v3791, %v4355
      %v4480 = vadd.f32 %v3796, %v4360
      %v4481 = vadd.f32 %v3799, %v4363
      %v4482 = vadd.f32 %v3804, %v4368
      %v4483 = vadd.f32 %v3807, %v4371
      %v4484 = vadd.f32 %v3812, %v4376
      %v4485 = vadd.f32 %v3815, %v4379
      %v4486 = vadd.f32 %v3820, %v4384
      %v4487 = vadd.f32 %v3823, %v4387
      %v4488 = vadd.f32 %v3828, %v4392
      %v4489 = vadd.f32 %v3831, %v4395
      %v4490 = vadd.f32 %v3836, %v4400
      %v4491 = vadd.f32 %v3839, %v4403
      %v4492 = vadd.f32 %v3844, %v4408
      %v4493 = vadd.f32 %v3847, %v4411
      %v4494 = vadd.f32 %v3852, %v4416
      %v4495 = vadd.f32 %v3855, %v4419
      %v4496 = vadd.f32 %v3860, %v4424
      %v4497 = vadd.f32 %v3863, %v4427
      %v4498 = vadd.f32 %v3868, %v4432
      %v4499 = vadd.f32 %v3871, %v4435
      %v4500 = vadd.f32 %v3876, %v4440
      %v4501 = vadd.f32 %v3879, %v4443
      %v4502 = vadd.f32 %v3884, %v4448
      %v4503 = vadd.f32 %v3887, %v4451
      %v4504 = vadd.f32 %v3892, %v4456
      %v4505 = vadd.f32 %v3895, %v4459
      %v4506 = vadd.f32 %v3900, %v4464
      %v4507 = vadd.f32 %v3903, %v4467
      %v4508 = vadd.f32 %v3908, %v4472
      %v4509 = vadd.f32 %v3911, %v4475
      %v4510 = vunpack.c.l.bf16 %v280
      %v4511 = vunpack.c.l.bf16 %v281
      %v4512 = vunpack.c.l.bf16 %v282
      %v4513 = vunpack.c.l.bf16 %v283
      %v4514 = vunpack.c.l.bf16 %v284
      %v4515 = vunpack.c.l.bf16 %v285
      %v4516 = vunpack.c.l.bf16 %v286
      %v4517 = vunpack.c.l.bf16 %v287
      %v4518 = vunpack.c.l.bf16 %v288
      %v4519 = vunpack.c.l.bf16 %v289
      %v4520 = vunpack.c.l.bf16 %v290
      %v4521 = vunpack.c.l.bf16 %v291
      %v4522 = vunpack.c.l.bf16 %v292
      %v4523 = vunpack.c.l.bf16 %v293
      %v4524 = vunpack.c.l.bf16 %v294
      %v4525 = vunpack.c.l.bf16 %v295
      %v4526 = vunpack.c.l.bf16 %v296
      %v4527 = vunpack.c.l.bf16 %v297
      %v4528 = vunpack.c.l.bf16 %v298
      %v4529 = vunpack.c.l.bf16 %v299
      %v4530 = vunpack.c.l.bf16 %v300
      %v4531 = vunpack.c.l.bf16 %v301
      %v4532 = vunpack.c.l.bf16 %v302
      %v4533 = vunpack.c.l.bf16 %v303
      %v4534 = vunpack.c.l.bf16 %v304
      %v4535 = vunpack.c.l.bf16 %v305
      %v4536 = vunpack.c.l.bf16 %v306
      %v4537 = vunpack.c.l.bf16 %v307
      %v4538 = vunpack.c.l.bf16 %v308
      %v4539 = vunpack.c.l.bf16 %v309
      %v4540 = vunpack.c.l.bf16 %v310
      %v4541 = vunpack.c.l.bf16 %v311
      %v4542 = vld [vmem:[%s5] sm:$0x1]
      %v4544 = vlaneseq
      %v4545 = vshrl.u32 %v4544, 7
      %v4546 = vsub.s32 0, %v4545
      %v4547 = vrot.slane %v4542, %v4546
      %v4549 = vmul.f32 %v4478, %v4547
      %v4550 = vmul.f32 %v4479, %v4547
      %v4551 = vmul.f32 %v4480, %v4547
      %v4552 = vmul.f32 %v4481, %v4547
      %v4553 = vmul.f32 %v4482, %v4547
      %v4554 = vmul.f32 %v4483, %v4547
      %v4555 = vmul.f32 %v4484, %v4547
      %v4556 = vmul.f32 %v4485, %v4547
      %v4557 = vmul.f32 %v4486, %v4547
      %v4558 = vmul.f32 %v4487, %v4547
      %v4559 = vmul.f32 %v4488, %v4547
      %v4560 = vmul.f32 %v4489, %v4547
      %v4561 = vmul.f32 %v4490, %v4547
      %v4562 = vmul.f32 %v4491, %v4547
      %v4563 = vmul.f32 %v4492, %v4547
      %v4564 = vmul.f32 %v4493, %v4547
      %v4565 = vmul.f32 %v4494, %v4547
      %v4566 = vmul.f32 %v4495, %v4547
      %v4567 = vmul.f32 %v4496, %v4547
      %v4568 = vmul.f32 %v4497, %v4547
      %v4569 = vmul.f32 %v4498, %v4547
      %v4570 = vmul.f32 %v4499, %v4547
      %v4571 = vmul.f32 %v4500, %v4547
      %v4572 = vmul.f32 %v4501, %v4547
      %v4573 = vmul.f32 %v4502, %v4547
      %v4574 = vmul.f32 %v4503, %v4547
      %v4575 = vmul.f32 %v4504, %v4547
      %v4576 = vmul.f32 %v4505, %v4547
      %v4577 = vmul.f32 %v4506, %v4547
      %v4578 = vmul.f32 %v4507, %v4547
      %v4579 = vmul.f32 %v4508, %v4547
      %v4580 = vmul.f32 %v4509, %v4547
      %v4581 = vld [vmem:[%s6] sm:$0x1]
      %v4583 = vlaneseq
      %v4584 = vshrl.u32 %v4583, 7
      %v4585 = vsub.s32 0, %v4584
      %v4586 = vrot.slane %v4581, %v4585
      %v4588 = vadd.f32 %v4549, %v4586
      %v4589 = vadd.f32 %v4550, %v4586
      %v4590 = vadd.f32 %v4551, %v4586
      %v4591 = vadd.f32 %v4552, %v4586
      %v4592 = vadd.f32 %v4553, %v4586
      %v4593 = vadd.f32 %v4554, %v4586
      %v4594 = vadd.f32 %v4555, %v4586
      %v4595 = vadd.f32 %v4556, %v4586
      %v4596 = vadd.f32 %v4557, %v4586
      %v4597 = vadd.f32 %v4558, %v4586
      %v4598 = vadd.f32 %v4559, %v4586
      %v4599 = vadd.f32 %v4560, %v4586
      %v4600 = vadd.f32 %v4561, %v4586
      %v4601 = vadd.f32 %v4562, %v4586
      %v4602 = vadd.f32 %v4563, %v4586
      %v4603 = vadd.f32 %v4564, %v4586
      %v4604 = vadd.f32 %v4565, %v4586
      %v4605 = vadd.f32 %v4566, %v4586
      %v4606 = vadd.f32 %v4567, %v4586
      %v4607 = vadd.f32 %v4568, %v4586
      %v4608 = vadd.f32 %v4569, %v4586
      %v4609 = vadd.f32 %v4570, %v4586
      %v4610 = vadd.f32 %v4571, %v4586
      %v4611 = vadd.f32 %v4572, %v4586
      %v4612 = vadd.f32 %v4573, %v4586
      %v4613 = vadd.f32 %v4574, %v4586
      %v4614 = vadd.f32 %v4575, %v4586
      %v4615 = vadd.f32 %v4576, %v4586
      %v4616 = vadd.f32 %v4577, %v4586
      %v4617 = vadd.f32 %v4578, %v4586
      %v4618 = vadd.f32 %v4579, %v4586
      %v4619 = vadd.f32 %v4580, %v4586
      %v4620 = vadd.f32 %v4588, %v4510
      %v4621 = vadd.f32 %v4589, %v4511
      %v4622 = vadd.f32 %v4590, %v4512
      %v4623 = vadd.f32 %v4591, %v4513
      %v4624 = vadd.f32 %v4592, %v4514
      %v4625 = vadd.f32 %v4593, %v4515
      %v4626 = vadd.f32 %v4594, %v4516
      %v4627 = vadd.f32 %v4595, %v4517
      %v4628 = vadd.f32 %v4596, %v4518
      %v4629 = vadd.f32 %v4597, %v4519
      %v4630 = vadd.f32 %v4598, %v4520
      %v4631 = vadd.f32 %v4599, %v4521
      %v4632 = vadd.f32 %v4600, %v4522
      %v4633 = vadd.f32 %v4601, %v4523
      %v4634 = vadd.f32 %v4602, %v4524
      %v4635 = vadd.f32 %v4603, %v4525
      %v4636 = vadd.f32 %v4604, %v4526
      %v4637 = vadd.f32 %v4605, %v4527
      %v4638 = vadd.f32 %v4606, %v4528
      %v4639 = vadd.f32 %v4607, %v4529
      %v4640 = vadd.f32 %v4608, %v4530
      %v4641 = vadd.f32 %v4609, %v4531
      %v4642 = vadd.f32 %v4610, %v4532
      %v4643 = vadd.f32 %v4611, %v4533
      %v4644 = vadd.f32 %v4612, %v4534
      %v4645 = vadd.f32 %v4613, %v4535
      %v4646 = vadd.f32 %v4614, %v4536
      %v4647 = vadd.f32 %v4615, %v4537
      %v4648 = vadd.f32 %v4616, %v4538
      %v4649 = vadd.f32 %v4617, %v4539
      %v4650 = vadd.f32 %v4618, %v4540
      %v4651 = vadd.f32 %v4619, %v4541
      %v4652 = vmax.f32 %v4620, 0.0
      %v4653 = vmax.f32 %v4621, 0.0
      %v4654 = vmax.f32 %v4622, 0.0
      %v4655 = vmax.f32 %v4623, 0.0
      %v4656 = vmax.f32 %v4624, 0.0
      %v4657 = vmax.f32 %v4625, 0.0
      %v4658 = vmax.f32 %v4626, 0.0
      %v4659 = vmax.f32 %v4627, 0.0
      %v4660 = vmax.f32 %v4628, 0.0
      %v4661 = vmax.f32 %v4629, 0.0
      %v4662 = vmax.f32 %v4630, 0.0
      %v4663 = vmax.f32 %v4631, 0.0
      %v4664 = vmax.f32 %v4632, 0.0
      %v4665 = vmax.f32 %v4633, 0.0
      %v4666 = vmax.f32 %v4634, 0.0
      %v4667 = vmax.f32 %v4635, 0.0
      %v4668 = vmax.f32 %v4636, 0.0
      %v4669 = vmax.f32 %v4637, 0.0
      %v4670 = vmax.f32 %v4638, 0.0
      %v4671 = vmax.f32 %v4639, 0.0
      %v4672 = vmax.f32 %v4640, 0.0
      %v4673 = vmax.f32 %v4641, 0.0
      %v4674 = vmax.f32 %v4642, 0.0
      %v4675 = vmax.f32 %v4643, 0.0
      %v4676 = vmax.f32 %v4644, 0.0
      %v4677 = vmax.f32 %v4645, 0.0
      %v4678 = vmax.f32 %v4646, 0.0
      %v4679 = vmax.f32 %v4647, 0.0
      %v4680 = vmax.f32 %v4648, 0.0
      %v4681 = vmax.f32 %v4649, 0.0
      %v4682 = vmax.f32 %v4650, 0.0
      %v4683 = vmax.f32 %v4651, 0.0
      %v4684 = vpack.c.bf16 %v4653, %v4652
      %v4685 = vpack.c.bf16 %v4655, %v4654
      %v4686 = vpack.c.bf16 %v4657, %v4656
      %v4687 = vpack.c.bf16 %v4659, %v4658
      %v4688 = vpack.c.bf16 %v4661, %v4660
      %v4689 = vpack.c.bf16 %v4663, %v4662
      %v4690 = vpack.c.bf16 %v4665, %v4664
      %v4691 = vpack.c.bf16 %v4667, %v4666
      %v4692 = vpack.c.bf16 %v4669, %v4668
      %v4693 = vpack.c.bf16 %v4671, %v4670
      %v4694 = vpack.c.bf16 %v4673, %v4672
      %v4695 = vpack.c.bf16 %v4675, %v4674
      %v4696 = vpack.c.bf16 %v4677, %v4676
      %v4697 = vpack.c.bf16 %v4679, %v4678
      %v4698 = vpack.c.bf16 %v4681, %v4680
      %v4699 = vpack.c.bf16 %v4683, %v4682
      %v4716 = vunpack.c.l.b16 %v4684
      %v4717 = vunpack.c.h.b16 %v4684
      %v4718 = vunpack.c.l.b16 %v4685
      %v4719 = vunpack.c.h.b16 %v4685
      %v4720 = vunpack.c.l.b16 %v4686
      %v4721 = vunpack.c.h.b16 %v4686
      %v4722 = vunpack.c.l.b16 %v4687
      %v4723 = vunpack.c.h.b16 %v4687
      %v4724 = vunpack.c.l.b16 %v4688
      %v4725 = vunpack.c.h.b16 %v4688
      %v4726 = vunpack.c.l.b16 %v4689
      %v4727 = vunpack.c.h.b16 %v4689
      %v4728 = vunpack.c.l.b16 %v4690
      %v4729 = vunpack.c.h.b16 %v4690
      %v4730 = vunpack.c.l.b16 %v4691
      %v4731 = vunpack.c.h.b16 %v4691
      %v4732 = vunpack.c.l.b16 %v4692
      %v4733 = vunpack.c.h.b16 %v4692
      %v4734 = vunpack.c.l.b16 %v4693
      %v4735 = vunpack.c.h.b16 %v4693
      %v4736 = vunpack.c.l.b16 %v4694
      %v4737 = vunpack.c.h.b16 %v4694
      %v4738 = vunpack.c.l.b16 %v4695
      %v4739 = vunpack.c.h.b16 %v4695
      %v4740 = vunpack.c.l.b16 %v4696
      %v4741 = vunpack.c.h.b16 %v4696
      %v4742 = vunpack.c.l.b16 %v4697
      %v4743 = vunpack.c.h.b16 %v4697
      %v4744 = vunpack.c.l.b16 %v4698
      %v4745 = vunpack.c.h.b16 %v4698
      %v4746 = vunpack.c.l.b16 %v4699
      %v4747 = vunpack.c.h.b16 %v4699
      %v4748 = vpack.c.b16 %v4716, %v4716
      %v4749 = vpack.c.b16 %v4717, %v4717
      %v4750 = vpack.c.b16 %v4718, %v4718
      %v4751 = vpack.c.b16 %v4719, %v4719
      %v4752 = vpack.c.b16 %v4720, %v4720
      %v4753 = vpack.c.b16 %v4721, %v4721
      %v4754 = vpack.c.b16 %v4722, %v4722
      %v4755 = vpack.c.b16 %v4723, %v4723
      %v4756 = vpack.c.b16 %v4724, %v4724
      %v4757 = vpack.c.b16 %v4725, %v4725
      %v4758 = vpack.c.b16 %v4726, %v4726
      %v4759 = vpack.c.b16 %v4727, %v4727
      %v4760 = vpack.c.b16 %v4728, %v4728
      %v4761 = vpack.c.b16 %v4729, %v4729
      %v4762 = vpack.c.b16 %v4730, %v4730
      %v4763 = vpack.c.b16 %v4731, %v4731
      %v4764 = vpack.c.b16 %v4732, %v4732
      %v4765 = vpack.c.b16 %v4733, %v4733
      %v4766 = vpack.c.b16 %v4734, %v4734
      %v4767 = vpack.c.b16 %v4735, %v4735
      %v4768 = vpack.c.b16 %v4736, %v4736
      %v4769 = vpack.c.b16 %v4737, %v4737
      %v4770 = vpack.c.b16 %v4738, %v4738
      %v4771 = vpack.c.b16 %v4739, %v4739
      %v4772 = vpack.c.b16 %v4740, %v4740
      %v4773 = vpack.c.b16 %v4741, %v4741
      %v4774 = vpack.c.b16 %v4742, %v4742
      %v4775 = vpack.c.b16 %v4743, %v4743
      %v4776 = vpack.c.b16 %v4744, %v4744
      %v4777 = vpack.c.b16 %v4745, %v4745
      %v4778 = vpack.c.b16 %v4746, %v4746
      %v4779 = vpack.c.b16 %v4747, %v4747
      %4812 = vst [vmem:[%s278] sm:$0xf] %v4748
      %4813 = vst [vmem:[%s278 + $0x4] sm:$0xf] %v4749
      %4814 = vst [vmem:[%s278 + $0x8] sm:$0xf] %v4750
      %4815 = vst [vmem:[%s278 + $0xc] sm:$0xf] %v4751
      %4816 = vst [vmem:[%s278 + $0x10] sm:$0xf] %v4752
      %4817 = vst [vmem:[%s278 + $0x14] sm:$0xf] %v4753
      %4818 = vst [vmem:[%s278 + $0x18] sm:$0xf] %v4754
      %4819 = vst [vmem:[%s278 + $0x1c] sm:$0xf] %v4755
      %4820 = vst [vmem:[%s278 + $0x20] sm:$0xf] %v4756
      %4821 = vst [vmem:[%s278 + $0x24] sm:$0xf] %v4757
      %4822 = vst [vmem:[%s278 + $0x28] sm:$0xf] %v4758
      %4823 = vst [vmem:[%s278 + $0x2c] sm:$0xf] %v4759
      %4824 = vst [vmem:[%s278 + $0x30] sm:$0xf] %v4760
      %4825 = vst [vmem:[%s278 + $0x34] sm:$0xf] %v4761
      %4826 = vst [vmem:[%s278 + $0x38] sm:$0xf] %v4762
      %4827 = vst [vmem:[%s278 + $0x3c] sm:$0xf] %v4763
      %4828 = vst [vmem:[%s278 + $0x40] sm:$0xf] %v4764
      %4829 = vst [vmem:[%s278 + $0x44] sm:$0xf] %v4765
      %4830 = vst [vmem:[%s278 + $0x48] sm:$0xf] %v4766
      %4831 = vst [vmem:[%s278 + $0x4c] sm:$0xf] %v4767
      %4832 = vst [vmem:[%s278 + $0x50] sm:$0xf] %v4768
      %4833 = vst [vmem:[%s278 + $0x54] sm:$0xf] %v4769
      %4834 = vst [vmem:[%s278 + $0x58] sm:$0xf] %v4770
      %4835 = vst [vmem:[%s278 + $0x5c] sm:$0xf] %v4771
      %4836 = vst [vmem:[%s278 + $0x60] sm:$0xf] %v4772
      %4837 = vst [vmem:[%s278 + $0x64] sm:$0xf] %v4773
      %4838 = vst [vmem:[%s278 + $0x68] sm:$0xf] %v4774
      %4839 = vst [vmem:[%s278 + $0x6c] sm:$0xf] %v4775
      %4840 = vst [vmem:[%s278 + $0x70] sm:$0xf] %v4776
      %4841 = vst [vmem:[%s278 + $0x74] sm:$0xf] %v4777
      %4842 = vst [vmem:[%s278 + $0x78] sm:$0xf] %v4778
      %4843 = vst [vmem:[%s278 + $0x7c] sm:$0xf] %v4779
      %p4844 = scmp.lt.s32.totalorder %s18, 1
      %s4845 = scalar_select %p4844, %s18, 1
      %s4846 = smul.addr %s4845, 32
      %s4847 = smul.addr %s4846, 4
      %s4848 = scalar_lea.vmem %s7, %s4847
      // Predicated region
      $region49: #{basic_block_forward.1} parent=47 // pred_check
        %p4849 = pneg %p188
      $region50: #{basic_block_forward.1} parent=47 // pred_check_branch
        %4851 = sbr.rel (%p4849) target = $region52
      $region51: #{basic_block_forward.1} parent=47 // pred_region
        _
      $region52: #{basic_block_forward.1} parent=47 // pred_fallthru
        _
    $region48: #{basic_block_forward.1} parent=5 // pred_fallthru
      _
    %p4852 = scmp.le.s32.totalorder 2, %s13
    // Predicated region
    $region53: #{basic_block_forward.1} parent=5 // pred_check
      %p4853 = pneg %p4852
    $region54: #{basic_block_forward.1} parent=5 // pred_check_branch
      %4855 = sbr.rel (%p4853) target = $region56
    $region55: #{basic_block_forward.1} parent=5 // pred_region
      %s4856 = ssub.s32 %s13, 2
      // Predicated region
      $region57: #{basic_block_forward.1} parent=55 // pred_check
        %p4857 = pneg %p194
      $region58: #{basic_block_forward.1} parent=55 // pred_check_branch
        %4859 = sbr.rel (%p4857) target = $region60
      $region59: #{basic_block_forward.1} parent=55 // pred_region
        %p4860 = scmp.lt.s32.totalorder %s19, 1
        %s4861 = scalar_select %p4860, %s19, 1
        %s4862 = smul.addr %s4861, 32
        %s4863 = smul.addr %s4862, 4
        %s4864 = scalar_lea.vmem %s7, %s4863
      $region60: #{basic_block_forward.1} parent=55 // pred_fallthru
        _
    $region56: #{basic_block_forward.1} parent=5 // pred_fallthru
      _
  $region6: #{basic_block_forward.1} parent=0 // loop_footer
    %s17 = sadd.s32 1, %s13
  $region7: #{basic_block_forward.1} parent=0 // loop_footer_branch
    %12 = sbr.rel target = $region3
  $region8: #{basic_block_forward.1} parent=0 // loop_exit
    _

</llo_original>
